<compile_context>
chip_gen: v7x
topology: tpu7x:2x2x1
jax: 0.10.0
libtpu: 0.0.40
codegen_flags: <defaults>
</compile_context>

<pallas_src>
import functools

import jax
import jax.numpy as jnp
from jax.experimental import pallas as pl
from jax.experimental.pallas import tpu as pltpu


_NEG_LARGE = -3.0e38   # acts as -inf for the maxpool padding but stays finite,
                       # so it can never poison a matmul with inf/NaN.
_ZPAD = 8              # 8-aligned sublane offset for the in-kernel zero padding


# ---------------------------------------------------------------------------
# generic tiled matmul + bias (used for the hoisted GRU input projections)
# ---------------------------------------------------------------------------

def _matmul_bias_kernel(a_ref, b_ref, bias_ref, o_ref):
    o_ref[...] = (jnp.dot(a_ref[...].astype(b_ref.dtype), b_ref[...],
                          preferred_element_type=jnp.float32)
                  + bias_ref[...])


def _pick_tile(dim, target, align):
    """Largest multiple of `align` <= target that divides dim, else full dim."""
    if dim <= target:
        return dim
    t = (target // align) * align
    while t >= align:
        if dim % t == 0:
            return t
        t -= align
    return dim


def matmul_bias(a, b, bias, *, tm=512, tn=512):
    """(M, K) @ (K, N) + bias(1, N) -> (M, N) f32; M/N tiled, both axes parallel.
    K is kept whole (small in this model).
    TODO(synk): add a K grid axis + f32 VMEM accumulator for very large K."""
    M, K = a.shape
    K2, N = b.shape
    assert K == K2
    tm = _pick_tile(M, tm, 8)
    tn = _pick_tile(N, tn, 128)
    return pl.pallas_call(
        _matmul_bias_kernel,
        out_shape=jax.ShapeDtypeStruct((M, N), jnp.float32),
        grid_spec=pltpu.PrefetchScalarGridSpec(
            num_scalar_prefetch=0,
            grid=(M // tm, N // tn),
            in_specs=[pl.BlockSpec((tm, K), lambda i, j: (i, 0)),
                      pl.BlockSpec((K, tn), lambda i, j: (0, j)),
                      pl.BlockSpec((1, tn), lambda i, j: (0, j))],
            out_specs=pl.BlockSpec((tm, tn), lambda i, j: (i, j)),
        ),
        compiler_params=pltpu.CompilerParams(
            dimension_semantics=("parallel", "parallel")),
    )(a, b, bias)


# ---------------------------------------------------------------------------
# fused InceptionTime block (bottleneck + all branches + maxpool branch + tanh)
# ---------------------------------------------------------------------------

def _inception_kernel(xpad_ref, wbn_ref, bbn_ref, wcat_ref, wmp_ref, bout_ref,
                      o_ref, zscr_ref, *, t_len, kmax, pad_k):
    # xpad_ref: (1, T+2, Cin) — input padded by 1 in time with a large negative
    # value (only ever consumed by the max below, never by a matmul).
    x = xpad_ref[0, pl.ds(1, t_len), :]                              # (T, Cin)

    # 1x1 bottleneck conv (no activation).
    zbn = (jnp.dot(x.astype(jnp.bfloat16), wbn_ref[...],
                   preferred_element_type=jnp.float32) + bbn_ref[...])  # (T, Cbn)

    # Zero-padded (in time) copy of the bottleneck output for the "same" convs.
    # The store lands at an 8-aligned sublane offset (unmasked); the shifted
    # tap reads below may be unaligned, which is cheap.
    zscr_ref[...] = jnp.zeros_like(zscr_ref)
    zscr_ref[0, pl.ds(_ZPAD, t_len), :] = zbn

    # All branches fused into ONE lane-dense accumulator of width (nb+1)*nf:
    # each conv branch occupies its own output-column block of w_cat (weights
    # zero-padded to kmax taps); the maxpool 1x1 branch occupies the last
    # column block of w_mp (zeros elsewhere).
    acc = jnp.zeros(o_ref.shape[1:], jnp.float32)                    # (T, Cout)
    for j in range(kmax):
        zj = zscr_ref[0, pl.ds(_ZPAD - pad_k + j, t_len), :].astype(jnp.bfloat16)
        acc = acc + jnp.dot(zj, wcat_ref[j], preferred_element_type=jnp.float32)

    # MaxPool1d(3, stride=1, padding=1) from shifted reads of the padded buffer.
    xm = jnp.maximum(jnp.maximum(xpad_ref[0, pl.ds(0, t_len), :],
                                 xpad_ref[0, pl.ds(1, t_len), :]),
                     xpad_ref[0, pl.ds(2, t_len), :])                # (T, Cin)
    acc = acc + jnp.dot(xm.astype(jnp.bfloat16), wmp_ref[...],
                        preferred_element_type=jnp.float32)

    o_ref[0] = jnp.tanh(acc + bout_ref[...])                         # one full store


def inception_block(x_cl, p):
    """InceptionTime block. x_cl: (B, T, Cin) f32 -> (B, T, (nb+1)*nf) f32."""
    B, T, Cin = x_cl.shape
    cbn = p["w_bn"].shape[1]
    kmax, _, cout = p["w_cat"].shape
    pad_k = kmax // 2
    assert pad_k <= _ZPAD
    xpad = jnp.pad(x_cl, ((0, 0), (1, 1), (0, 0)), constant_values=_NEG_LARGE)
    kernel = functools.partial(_inception_kernel, t_len=T, kmax=kmax, pad_k=pad_k)
    return pl.pallas_call(
        kernel,
        out_shape=jax.ShapeDtypeStruct((B, T, cout), jnp.float32),
        grid_spec=pltpu.PrefetchScalarGridSpec(
            num_scalar_prefetch=0,
            grid=(B,),                       # batch-parallel (uses both TCs on v7x)
            in_specs=[pl.BlockSpec((1, T + 2, Cin), lambda b: (b, 0, 0)),
                      pl.BlockSpec((Cin, cbn), lambda b: (0, 0)),
                      pl.BlockSpec((1, cbn), lambda b: (0, 0)),
                      pl.BlockSpec((kmax, cbn, cout), lambda b: (0, 0, 0)),
                      pl.BlockSpec((Cin, cout), lambda b: (0, 0)),
                      pl.BlockSpec((1, cout), lambda b: (0, 0))],
            out_specs=pl.BlockSpec((1, T, cout), lambda b: (b, 0, 0)),
            scratch_shapes=[pltpu.VMEM((1, T + 2 * _ZPAD, cbn), jnp.float32)],
        ),
        compiler_params=pltpu.CompilerParams(dimension_semantics=("parallel",)),
    )(xpad, p["w_bn"], p["b_bn"], p["w_cat"], p["w_mp"], p["b_out"])


# ---------------------------------------------------------------------------
# GRU: hoisted input projections + fused-gate sequential recurrence
# ---------------------------------------------------------------------------

def _gru_rec_kernel(gx_ref, wh_ref, bh_ref, y_ref, h_scr, gh_scr, *, tt, hidden):
    @pl.when(pl.program_id(0) == 0)
    def _():
        h_scr[...] = jnp.zeros_like(h_scr)      # h0 = zeros (matches reference)

    h = h_scr[...]                              # (B, H) f32 carried state
    wh = wh_ref[...]                            # (H, 3H) bf16 = [Whr|Whz|Whn]
    bh = bh_ref[...]                            # (1, 3H) f32 = [bhr|bhz|bhn]
    for i in range(tt):                         # statically unrolled time steps
        gh_scr[...] = (jnp.dot(h.astype(jnp.bfloat16), wh,
                               preferred_element_type=jnp.float32) + bh)
        r = jax.nn.sigmoid(gx_ref[:, i, pl.ds(0, hidden)]
                           + gh_scr[:, pl.ds(0, hidden)])
        z = jax.nn.sigmoid(gx_ref[:, i, pl.ds(hidden, hidden)]
                           + gh_scr[:, pl.ds(hidden, hidden)])
        n = jnp.tanh(gx_ref[:, i, pl.ds(2 * hidden, hidden)]
                     + r * gh_scr[:, pl.ds(2 * hidden, hidden)])
        h = (1.0 - z) * n + z * h
        y_ref[:, i, :] = h
    h_scr[...] = h


def _pick_time_block(total_t, target=8):
    if total_t <= target:
        return total_t
    t = (target // 8) * 8
    while t >= 8:
        if total_t % t == 0:
            return t
        t -= 8
    return total_t


def gru_layer(seq, wi, bi, wh, bh, *, time_block=8):
    """One nn.GRU layer (batch_first). seq: (B, T, I) f32 -> (B, T, H) f32."""
    B, T, I = seq.shape
    hidden = wh.shape[0]
    # Hoisted input projections: one big parallel matmul over all timesteps.
    gx = matmul_bias(seq.reshape(B * T, I), wi, bi).reshape(B, T, 3 * hidden)
    tt = _pick_time_block(T, time_block)
    kernel = functools.partial(_gru_rec_kernel, tt=tt, hidden=hidden)
    return pl.pallas_call(
        kernel,
        out_shape=jax.ShapeDtypeStruct((B, T, hidden), jnp.float32),
        grid_spec=pltpu.PrefetchScalarGridSpec(
            num_scalar_prefetch=0,
            grid=(T // tt,),
            in_specs=[pl.BlockSpec((B, tt, 3 * hidden), lambda t: (0, t, 0)),
                      pl.BlockSpec((hidden, 3 * hidden), lambda t: (0, 0)),
                      pl.BlockSpec((1, 3 * hidden), lambda t: (0, 0))],
            out_specs=pl.BlockSpec((B, tt, hidden), lambda t: (0, t, 0)),
            scratch_shapes=[pltpu.VMEM((B, hidden), jnp.float32),
                            pltpu.VMEM((B, 3 * hidden), jnp.float32)],
        ),
        compiler_params=pltpu.CompilerParams(dimension_semantics=("arbitrary",)),
    )(gx, wh, bh)


# ---------------------------------------------------------------------------
# fused adaptive avg/max pools (pool_size=1) + final Linear
# ---------------------------------------------------------------------------

def _pool_ffn_kernel(rnn_ref, inc_ref, w_ref, b_ref, o_ref):
    rnn = rnn_ref[0]                                     # (T, H)
    inc = inc_ref[0]
    avg_r = jnp.mean(rnn, axis=0, keepdims=True)         # (1, H)
    max_r = jnp.max(rnn, axis=0, keepdims=True)
    avg_i = jnp.mean(inc, axis=0, keepdims=True)
    max_i = jnp.max(inc, axis=0, keepdims=True)
    acc = (jnp.dot(avg_r.astype(jnp.bfloat16), w_ref[0], preferred_element_type=jnp.float32)
           + jnp.dot(max_r.astype(jnp.bfloat16), w_ref[1], preferred_element_type=jnp.float32)
           + jnp.dot(avg_i.astype(jnp.bfloat16), w_ref[2], preferred_element_type=jnp.float32)
           + jnp.dot(max_i.astype(jnp.bfloat16), w_ref[3], preferred_element_type=jnp.float32))
    o_ref[0] = acc + b_ref[...]


def pool_ffn(out_rnn, out_inc, w4, b):
    """avg/max pools of both streams + concat + Linear, fused, batch-parallel.
    w4: (4, H, outputs) = FFN weight split as [avg_rnn, max_rnn, avg_inc, max_inc]."""
    B, T, H = out_rnn.shape
    O = w4.shape[-1]
    out = pl.pallas_call(
        _pool_ffn_kernel,
        out_shape=jax.ShapeDtypeStruct((B, 1, O), jnp.float32),
        grid_spec=pltpu.PrefetchScalarGridSpec(
            num_scalar_prefetch=0,
            grid=(B,),
            in_specs=[pl.BlockSpec((1, T, H), lambda b: (b, 0, 0)),
                      pl.BlockSpec((1, T, H), lambda b: (b, 0, 0)),
                      pl.BlockSpec((4, H, O), lambda b: (0, 0, 0)),
                      pl.BlockSpec((1, O), lambda b: (0, 0))],
            out_specs=pl.BlockSpec((1, 1, O), lambda b: (b, 0, 0)),
        ),
        compiler_params=pltpu.CompilerParams(dimension_semantics=("parallel",)),
    )(out_rnn, out_inc, w4, b)
    return out.reshape(B, O)


# ---------------------------------------------------------------------------
# forward pass
# ---------------------------------------------------------------------------

def inception_gru_forward(x_bct, params, *, pool_size=1):
    """x_bct: (B, Cin, T) f32 (PyTorch NCW). Returns (B, outputs) f32."""
    assert pool_size == 1  # TODO(synk): AdaptiveAvg/MaxPool1d(output_size > 1) not implemented
    x_cl = jnp.transpose(x_bct, (0, 2, 1))                  # (B, T, Cin) channels-last
    x0 = inception_block(x_cl, params["inc1"])              # (B, T, 4*n_filters)
    xc = jnp.concatenate([x_cl, x0], axis=-1)               # torch.concat([x, x0], dim=1)
    out_inc = inception_block(xc, params["inc2"])           # (B, T, hidden)
    seq = xc
    for lp in params["gru"]:
        seq = gru_layer(seq, lp["wi"], lp["bi"], lp["wh"], lp["bh"])
    return pool_ffn(seq, out_inc, params["ffn_w"], params["ffn_b"])


# ---------------------------------------------------------------------------
# deterministic parameter construction
# ---------------------------------------------------------------------------

def init_params(key, in_channels, hidden, layers, outputs, kernel_sizes,
                n_filters=32, bottleneck=32):
    assert hidden % 4 == 0
    # TODO(synk): even kernel sizes pad differently in PyTorch Conv1d(padding=K//2)
    assert all(k % 2 == 1 for k in kernel_sizes)
    keys = iter(jax.random.split(key, 64))

    def u(shape, scale=0.1, dtype=jnp.float32):
        return jax.random.uniform(next(keys), shape, jnp.float32,
                                  -scale, scale).astype(dtype)

    def inc_params(cin, nf):
        nb = len(kernel_sizes)
        kmax = max(kernel_sizes)
        cout = (nb + 1) * nf
        # conv branch weights, zero-padded to kmax taps, concatenated on N
        wcat = jnp.zeros((kmax, bottleneck, cout), jnp.float32)
        for i, k in enumerate(kernel_sizes):
            off = (kmax - k) // 2
            wcat = wcat.at[off:off + k, :, i * nf:(i + 1) * nf].set(
                u((k, bottleneck, nf)))
        # maxpool-branch 1x1 conv occupies the last nf output columns
        wmp = jnp.zeros((cin, cout), jnp.float32)
        wmp = wmp.at[:, nb * nf:].set(u((cin, nf)))
        b_out = jnp.concatenate([u((nb * nf,)), u((nf,))])[None, :]
        return {"w_bn": u((cin, bottleneck), dtype=jnp.bfloat16),
                "b_bn": u((1, bottleneck)),
                "w_cat": wcat.astype(jnp.bfloat16),
                "w_mp": wmp.astype(jnp.bfloat16),
                "b_out": b_out}

    params = {"inc1": inc_params(in_channels, n_filters)}
    rnn_in = (len(kernel_sizes) + 1) * n_filters + in_channels
    params["inc2"] = inc_params(rnn_in, hidden // 4)

    gru = []
    for l in range(layers):
        isz = rnn_in if l == 0 else hidden
        gru.append({
            "wi": u((isz, 3 * hidden), dtype=jnp.bfloat16),    # [W_ir | W_iz | W_in]
            "bi": u((1, 3 * hidden)),                          # [b_ir | b_iz | b_in]
            "wh": u((hidden, 3 * hidden), dtype=jnp.bfloat16), # [W_hr | W_hz | W_hn]
            "bh": u((1, 3 * hidden)),                          # [b_hr | b_hz | b_hn]
        })
    params["gru"] = gru
    params["ffn_w"] = u((4, hidden, outputs), dtype=jnp.bfloat16)
    params["ffn_b"] = u((1, outputs))
    return params


# ---------------------------------------------------------------------------
# main
# ---------------------------------------------------------------------------

if __name__ == "__main__":
    key = jax.random.PRNGKey(0)
    kx, kp = jax.random.split(key)

    B, Cin, T = 2, 4, 16
    hidden, layers, outputs = 32, 2, 3
    kernel_sizes = (3, 5, 7)

    x = jax.random.normal(kx, (B, Cin, T), jnp.float32)
    params = init_params(kp, Cin, hidden, layers, outputs, kernel_sizes)

    fwd = jax.jit(inception_gru_forward)
    out = jax.block_until_ready(fwd(x, params))

    assert out.shape == (B, outputs), out.shape
    assert bool(jnp.all(jnp.isfinite(out)))
    print("KERNEL_OK")
</pallas_src>

<mosaic_0001>
module attributes {stable_mosaic.version = 11 : i64} {
  func.func @_inception_kernel(%arg0: i32, %arg1: memref<1x18x4xf32, #tpu.memory_space<vmem>>, %arg2: memref<4x32xbf16, #tpu.memory_space<vmem>>, %arg3: memref<1x32xf32, #tpu.memory_space<vmem>>, %arg4: memref<7x32x128xbf16, #tpu.memory_space<vmem>>, %arg5: memref<4x128xbf16, #tpu.memory_space<vmem>>, %arg6: memref<1x128xf32, #tpu.memory_space<vmem>>, %arg7: memref<1x16x128xf32, #tpu.memory_space<vmem>>, %arg8: memref<1x32x32xf32, #tpu.memory_space<vmem>>) attributes {dimension_semantics = [#tpu.dimension_semantics<parallel>], iteration_bounds = array<i64: 2>, scalar_prefetch = 0 : i64, scratch_operands = 1 : i64, tpu.core_type = #tpu.core_type<tc>, window_params = [{transform_indices = @transform_0, window_bounds = array<i64: 1, 18, 4>}, {pipeline_mode = #tpu.pipeline_mode<synchronous>, transform_indices = @transform_1, window_bounds = array<i64: 4, 32>}, {pipeline_mode = #tpu.pipeline_mode<synchronous>, transform_indices = @transform_2, window_bounds = array<i64: 1, 32>}, {pipeline_mode = #tpu.pipeline_mode<synchronous>, transform_indices = @transform_3, window_bounds = array<i64: 7, 32, 128>}, {pipeline_mode = #tpu.pipeline_mode<synchronous>, transform_indices = @transform_4, window_bounds = array<i64: 4, 128>}, {pipeline_mode = #tpu.pipeline_mode<synchronous>, transform_indices = @transform_5, window_bounds = array<i64: 1, 128>}, {transform_indices = @transform_6, window_bounds = array<i64: 1, 16, 128>}]} {
    %c0 = arith.constant 0 : index
    %c1 = arith.constant 1 : index
    %c0_0 = arith.constant 0 : index
    %0 = vector.load %arg1[%c0, %c1, %c0_0] : memref<1x18x4xf32, #tpu.memory_space<vmem>>, vector<1x16x4xf32>
    %1 = vector.shape_cast %0 : vector<1x16x4xf32> to vector<16x4xf32>
    %2 = arith.truncf %1 : vector<16x4xf32> to vector<16x4xbf16>
    %c0_1 = arith.constant 0 : index
    %c0_2 = arith.constant 0 : index
    %3 = vector.load %arg2[%c0_1, %c0_2] : memref<4x32xbf16, #tpu.memory_space<vmem>>, vector<4x32xbf16>
    %cst = arith.constant dense<0.000000e+00> : vector<16x32xf32>
    %4 = tpu.matmul %2, %3, %cst {dimension_numbers = #tpu.dot_dimension_numbers<[1], [0], [0], [1], [0, 0, 1, 1], [], []>} : vector<16x4xbf16>, vector<4x32xbf16>, vector<16x32xf32> -> vector<16x32xf32>
    %c0_3 = arith.constant 0 : index
    %c0_4 = arith.constant 0 : index
    %5 = vector.load %arg3[%c0_3, %c0_4] : memref<1x32xf32, #tpu.memory_space<vmem>>, vector<1x32xf32>
    %6 = vector.broadcast %5 : vector<1x32xf32> to vector<16x32xf32>
    %7 = arith.addf %4, %6 : vector<16x32xf32>
    %cst_5 = arith.constant 0.000000e+00 : f32
    %8 = vector.broadcast %cst_5 : f32 to vector<1x32x32xf32>
    %c0_6 = arith.constant 0 : index
    %c0_7 = arith.constant 0 : index
    %c0_8 = arith.constant 0 : index
    %9 = vector.load %arg8[%c0_6, %c0_7, %c0_8] : memref<1x32x32xf32, #tpu.memory_space<vmem>>, vector<1x32x32xf32>
    tpu.vector_store %arg8[%c0_6, %c0_7, %c0_8], %8 {strides = array<i32>} : memref<1x32x32xf32, #tpu.memory_space<vmem>>, vector<1x32x32xf32>,
    %c0_9 = arith.constant 0 : index
    %c8 = arith.constant 8 : index
    %c0_10 = arith.constant 0 : index
    %10 = vector.load %arg8[%c0_9, %c8, %c0_10] : memref<1x32x32xf32, #tpu.memory_space<vmem>>, vector<1x16x32xf32>
    %11 = vector.shape_cast %10 : vector<1x16x32xf32> to vector<16x32xf32>
    %12 = vector.shape_cast %7 : vector<16x32xf32> to vector<1x16x32xf32>
    tpu.vector_store %arg8[%c0_9, %c8, %c0_10], %12 {strides = array<i32>} : memref<1x32x32xf32, #tpu.memory_space<vmem>>, vector<1x16x32xf32>,
    %cst_11 = arith.constant 0.000000e+00 : f32
    %13 = vector.broadcast %cst_11 : f32 to vector<16x128xf32>
    %c0_12 = arith.constant 0 : index
    %c5 = arith.constant 5 : index
    %c0_13 = arith.constant 0 : index
    %14 = vector.load %arg8[%c0_12, %c5, %c0_13] : memref<1x32x32xf32, #tpu.memory_space<vmem>>, vector<1x16x32xf32>
    %15 = vector.shape_cast %14 : vector<1x16x32xf32> to vector<16x32xf32>
    %16 = arith.truncf %15 : vector<16x32xf32> to vector<16x32xbf16>
    %c0_14 = arith.constant 0 : index
    %c0_15 = arith.constant 0 : index
    %c0_16 = arith.constant 0 : index
    %17 = vector.load %arg4[%c0_14, %c0_15, %c0_16] : memref<7x32x128xbf16, #tpu.memory_space<vmem>>, vector<1x32x128xbf16>
    %18 = vector.shape_cast %17 : vector<1x32x128xbf16> to vector<32x128xbf16>
    %cst_17 = arith.constant dense<0.000000e+00> : vector<16x128xf32>
    %19 = tpu.matmul %16, %18, %cst_17 {dimension_numbers = #tpu.dot_dimension_numbers<[1], [0], [0], [1], [0, 0, 1, 1], [], []>} : vector<16x32xbf16>, vector<32x128xbf16>, vector<16x128xf32> -> vector<16x128xf32>
    %20 = arith.addf %13, %19 : vector<16x128xf32>
    %c0_18 = arith.constant 0 : index
    %c6 = arith.constant 6 : index
    %c0_19 = arith.constant 0 : index
    %21 = vector.load %arg8[%c0_18, %c6, %c0_19] : memref<1x32x32xf32, #tpu.memory_space<vmem>>, vector<1x16x32xf32>
    %22 = vector.shape_cast %21 : vector<1x16x32xf32> to vector<16x32xf32>
    %23 = arith.truncf %22 : vector<16x32xf32> to vector<16x32xbf16>
    %c1_20 = arith.constant 1 : index
    %c0_21 = arith.constant 0 : index
    %c0_22 = arith.constant 0 : index
    %24 = vector.load %arg4[%c1_20, %c0_21, %c0_22] : memref<7x32x128xbf16, #tpu.memory_space<vmem>>, vector<1x32x128xbf16>
    %25 = vector.shape_cast %24 : vector<1x32x128xbf16> to vector<32x128xbf16>
    %cst_23 = arith.constant dense<0.000000e+00> : vector<16x128xf32>
    %26 = tpu.matmul %23, %25, %cst_23 {dimension_numbers = #tpu.dot_dimension_numbers<[1], [0], [0], [1], [0, 0, 1, 1], [], []>} : vector<16x32xbf16>, vector<32x128xbf16>, vector<16x128xf32> -> vector<16x128xf32>
    %27 = arith.addf %20, %26 : vector<16x128xf32>
    %c0_24 = arith.constant 0 : index
    %c7 = arith.constant 7 : index
    %c0_25 = arith.constant 0 : index
    %28 = vector.load %arg8[%c0_24, %c7, %c0_25] : memref<1x32x32xf32, #tpu.memory_space<vmem>>, vector<1x16x32xf32>
    %29 = vector.shape_cast %28 : vector<1x16x32xf32> to vector<16x32xf32>
    %30 = arith.truncf %29 : vector<16x32xf32> to vector<16x32xbf16>
    %c2 = arith.constant 2 : index
    %c0_26 = arith.constant 0 : index
    %c0_27 = arith.constant 0 : index
    %31 = vector.load %arg4[%c2, %c0_26, %c0_27] : memref<7x32x128xbf16, #tpu.memory_space<vmem>>, vector<1x32x128xbf16>
    %32 = vector.shape_cast %31 : vector<1x32x128xbf16> to vector<32x128xbf16>
    %cst_28 = arith.constant dense<0.000000e+00> : vector<16x128xf32>
    %33 = tpu.matmul %30, %32, %cst_28 {dimension_numbers = #tpu.dot_dimension_numbers<[1], [0], [0], [1], [0, 0, 1, 1], [], []>} : vector<16x32xbf16>, vector<32x128xbf16>, vector<16x128xf32> -> vector<16x128xf32>
    %34 = arith.addf %27, %33 : vector<16x128xf32>
    %c0_29 = arith.constant 0 : index
    %c8_30 = arith.constant 8 : index
    %c0_31 = arith.constant 0 : index
    %35 = vector.load %arg8[%c0_29, %c8_30, %c0_31] : memref<1x32x32xf32, #tpu.memory_space<vmem>>, vector<1x16x32xf32>
    %36 = vector.shape_cast %35 : vector<1x16x32xf32> to vector<16x32xf32>
    %37 = arith.truncf %36 : vector<16x32xf32> to vector<16x32xbf16>
    %c3 = arith.constant 3 : index
    %c0_32 = arith.constant 0 : index
    %c0_33 = arith.constant 0 : index
    %38 = vector.load %arg4[%c3, %c0_32, %c0_33] : memref<7x32x128xbf16, #tpu.memory_space<vmem>>, vector<1x32x128xbf16>
    %39 = vector.shape_cast %38 : vector<1x32x128xbf16> to vector<32x128xbf16>
    %cst_34 = arith.constant dense<0.000000e+00> : vector<16x128xf32>
    %40 = tpu.matmul %37, %39, %cst_34 {dimension_numbers = #tpu.dot_dimension_numbers<[1], [0], [0], [1], [0, 0, 1, 1], [], []>} : vector<16x32xbf16>, vector<32x128xbf16>, vector<16x128xf32> -> vector<16x128xf32>
    %41 = arith.addf %34, %40 : vector<16x128xf32>
    %c0_35 = arith.constant 0 : index
    %c9 = arith.constant 9 : index
    %c0_36 = arith.constant 0 : index
    %42 = vector.load %arg8[%c0_35, %c9, %c0_36] : memref<1x32x32xf32, #tpu.memory_space<vmem>>, vector<1x16x32xf32>
    %43 = vector.shape_cast %42 : vector<1x16x32xf32> to vector<16x32xf32>
    %44 = arith.truncf %43 : vector<16x32xf32> to vector<16x32xbf16>
    %c4 = arith.constant 4 : index
    %c0_37 = arith.constant 0 : index
    %c0_38 = arith.constant 0 : index
    %45 = vector.load %arg4[%c4, %c0_37, %c0_38] : memref<7x32x128xbf16, #tpu.memory_space<vmem>>, vector<1x32x128xbf16>
    %46 = vector.shape_cast %45 : vector<1x32x128xbf16> to vector<32x128xbf16>
    %cst_39 = arith.constant dense<0.000000e+00> : vector<16x128xf32>
    %47 = tpu.matmul %44, %46, %cst_39 {dimension_numbers = #tpu.dot_dimension_numbers<[1], [0], [0], [1], [0, 0, 1, 1], [], []>} : vector<16x32xbf16>, vector<32x128xbf16>, vector<16x128xf32> -> vector<16x128xf32>
    %48 = arith.addf %41, %47 : vector<16x128xf32>
    %c0_40 = arith.constant 0 : index
    %c10 = arith.constant 10 : index
    %c0_41 = arith.constant 0 : index
    %49 = vector.load %arg8[%c0_40, %c10, %c0_41] : memref<1x32x32xf32, #tpu.memory_space<vmem>>, vector<1x16x32xf32>
    %50 = vector.shape_cast %49 : vector<1x16x32xf32> to vector<16x32xf32>
    %51 = arith.truncf %50 : vector<16x32xf32> to vector<16x32xbf16>
    %c5_42 = arith.constant 5 : index
    %c0_43 = arith.constant 0 : index
    %c0_44 = arith.constant 0 : index
    %52 = vector.load %arg4[%c5_42, %c0_43, %c0_44] : memref<7x32x128xbf16, #tpu.memory_space<vmem>>, vector<1x32x128xbf16>
    %53 = vector.shape_cast %52 : vector<1x32x128xbf16> to vector<32x128xbf16>
    %cst_45 = arith.constant dense<0.000000e+00> : vector<16x128xf32>
    %54 = tpu.matmul %51, %53, %cst_45 {dimension_numbers = #tpu.dot_dimension_numbers<[1], [0], [0], [1], [0, 0, 1, 1], [], []>} : vector<16x32xbf16>, vector<32x128xbf16>, vector<16x128xf32> -> vector<16x128xf32>
    %55 = arith.addf %48, %54 : vector<16x128xf32>
    %c0_46 = arith.constant 0 : index
    %c11 = arith.constant 11 : index
    %c0_47 = arith.constant 0 : index
    %56 = vector.load %arg8[%c0_46, %c11, %c0_47] : memref<1x32x32xf32, #tpu.memory_space<vmem>>, vector<1x16x32xf32>
    %57 = vector.shape_cast %56 : vector<1x16x32xf32> to vector<16x32xf32>
    %58 = arith.truncf %57 : vector<16x32xf32> to vector<16x32xbf16>
    %c6_48 = arith.constant 6 : index
    %c0_49 = arith.constant 0 : index
    %c0_50 = arith.constant 0 : index
    %59 = vector.load %arg4[%c6_48, %c0_49, %c0_50] : memref<7x32x128xbf16, #tpu.memory_space<vmem>>, vector<1x32x128xbf16>
    %60 = vector.shape_cast %59 : vector<1x32x128xbf16> to vector<32x128xbf16>
    %cst_51 = arith.constant dense<0.000000e+00> : vector<16x128xf32>
    %61 = tpu.matmul %58, %60, %cst_51 {dimension_numbers = #tpu.dot_dimension_numbers<[1], [0], [0], [1], [0, 0, 1, 1], [], []>} : vector<16x32xbf16>, vector<32x128xbf16>, vector<16x128xf32> -> vector<16x128xf32>
    %62 = arith.addf %55, %61 : vector<16x128xf32>
    %c0_52 = arith.constant 0 : index
    %c0_53 = arith.constant 0 : index
    %c0_54 = arith.constant 0 : index
    %63 = vector.load %arg1[%c0_52, %c0_53, %c0_54] : memref<1x18x4xf32, #tpu.memory_space<vmem>>, vector<1x16x4xf32>
    %64 = vector.shape_cast %63 : vector<1x16x4xf32> to vector<16x4xf32>
    %c0_55 = arith.constant 0 : index
    %c1_56 = arith.constant 1 : index
    %c0_57 = arith.constant 0 : index
    %65 = vector.load %arg1[%c0_55, %c1_56, %c0_57] : memref<1x18x4xf32, #tpu.memory_space<vmem>>, vector<1x16x4xf32>
    %66 = vector.shape_cast %65 : vector<1x16x4xf32> to vector<16x4xf32>
    %67 = arith.maximumf %64, %66 : vector<16x4xf32>
    %c0_58 = arith.constant 0 : index
    %c2_59 = arith.constant 2 : index
    %c0_60 = arith.constant 0 : index
    %68 = vector.load %arg1[%c0_58, %c2_59, %c0_60] : memref<1x18x4xf32, #tpu.memory_space<vmem>>, vector<1x16x4xf32>
    %69 = vector.shape_cast %68 : vector<1x16x4xf32> to vector<16x4xf32>
    %70 = arith.maximumf %67, %69 : vector<16x4xf32>
    %71 = arith.truncf %70 : vector<16x4xf32> to vector<16x4xbf16>
    %c0_61 = arith.constant 0 : index
    %c0_62 = arith.constant 0 : index
    %72 = vector.load %arg5[%c0_61, %c0_62] : memref<4x128xbf16, #tpu.memory_space<vmem>>, vector<4x128xbf16>
    %cst_63 = arith.constant dense<0.000000e+00> : vector<16x128xf32>
    %73 = tpu.matmul %71, %72, %cst_63 {dimension_numbers = #tpu.dot_dimension_numbers<[1], [0], [0], [1], [0, 0, 1, 1], [], []>} : vector<16x4xbf16>, vector<4x128xbf16>, vector<16x128xf32> -> vector<16x128xf32>
    %74 = arith.addf %62, %73 : vector<16x128xf32>
    %c0_64 = arith.constant 0 : index
    %c0_65 = arith.constant 0 : index
    %75 = vector.load %arg6[%c0_64, %c0_65] : memref<1x128xf32, #tpu.memory_space<vmem>>, vector<1x128xf32>
    %76 = vector.broadcast %75 : vector<1x128xf32> to vector<16x128xf32>
    %77 = arith.addf %74, %76 : vector<16x128xf32>
    %78 = math.tanh %77 : vector<16x128xf32>
    %c0_66 = arith.constant 0 : index
    %c0_67 = arith.constant 0 : index
    %c0_68 = arith.constant 0 : index
    %79 = vector.load %arg7[%c0_66, %c0_67, %c0_68] : memref<1x16x128xf32, #tpu.memory_space<vmem>>, vector<1x16x128xf32>
    %80 = vector.shape_cast %79 : vector<1x16x128xf32> to vector<16x128xf32>
    %81 = vector.shape_cast %78 : vector<16x128xf32> to vector<1x16x128xf32>
    tpu.vector_store %arg7[%c0_66, %c0_67, %c0_68], %81 {strides = array<i32>} : memref<1x16x128xf32, #tpu.memory_space<vmem>>, vector<1x16x128xf32>,
    return
  }
  func.func @transform_0(%arg0: i32) -> (i32, i32, i32) {
    %c0_i32 = arith.constant 0 : i32
    %c0_i32_0 = arith.constant 0 : i32
    %c0_i32_1 = arith.constant 0 : i32
    return %arg0, %c0_i32, %c0_i32_0 : i32, i32, i32
  }
  func.func @transform_1(%arg0: i32) -> (i32, i32) {
    %c0_i32 = arith.constant 0 : i32
    %c0_i32_0 = arith.constant 0 : i32
    %c0_i32_1 = arith.constant 0 : i32
    return %c0_i32, %c0_i32_0 : i32, i32
  }
  func.func @transform_2(%arg0: i32) -> (i32, i32) {
    %c0_i32 = arith.constant 0 : i32
    %c0_i32_0 = arith.constant 0 : i32
    %c0_i32_1 = arith.constant 0 : i32
    return %c0_i32, %c0_i32_0 : i32, i32
  }
  func.func @transform_3(%arg0: i32) -> (i32, i32, i32) {
    %c0_i32 = arith.constant 0 : i32
    %c0_i32_0 = arith.constant 0 : i32
    %c0_i32_1 = arith.constant 0 : i32
    %c0_i32_2 = arith.constant 0 : i32
    return %c0_i32, %c0_i32_0, %c0_i32_1 : i32, i32, i32
  }
  func.func @transform_4(%arg0: i32) -> (i32, i32) {
    %c0_i32 = arith.constant 0 : i32
    %c0_i32_0 = arith.constant 0 : i32
    %c0_i32_1 = arith.constant 0 : i32
    return %c0_i32, %c0_i32_0 : i32, i32
  }
  func.func @transform_5(%arg0: i32) -> (i32, i32) {
    %c0_i32 = arith.constant 0 : i32
    %c0_i32_0 = arith.constant 0 : i32
    %c0_i32_1 = arith.constant 0 : i32
    return %c0_i32, %c0_i32_0 : i32, i32
  }
  func.func @transform_6(%arg0: i32) -> (i32, i32, i32) {
    %c0_i32 = arith.constant 0 : i32
    %c0_i32_0 = arith.constant 0 : i32
    %c0_i32_1 = arith.constant 0 : i32
    return %arg0, %c0_i32, %c0_i32_0 : i32, i32, i32
  }
}

module attributes {stable_mosaic.version = 11 : i64} {
  func.func @_gru_rec_kernel(%arg0: i32, %arg1: memref<2x8x96xf32, #tpu.memory_space<vmem>>, %arg2: memref<32x96xbf16, #tpu.memory_space<vmem>>, %arg3: memref<1x96xf32, #tpu.memory_space<vmem>>, %arg4: memref<2x8x32xf32, #tpu.memory_space<vmem>>, %arg5: memref<2x32xf32, #tpu.memory_space<vmem>>, %arg6: memref<2x96xf32, #tpu.memory_space<vmem>>) attributes {dimension_semantics = [#tpu.dimension_semantics<arbitrary>], iteration_bounds = array<i64: 2>, scalar_prefetch = 0 : i64, scratch_operands = 2 : i64, tpu.core_type = #tpu.core_type<tc>, window_params = [{transform_indices = @transform_0, window_bounds = array<i64: 2, 8, 96>}, {pipeline_mode = #tpu.pipeline_mode<synchronous>, transform_indices = @transform_1, window_bounds = array<i64: 32, 96>}, {pipeline_mode = #tpu.pipeline_mode<synchronous>, transform_indices = @transform_2, window_bounds = array<i64: 1, 96>}, {transform_indices = @transform_3, window_bounds = array<i64: 2, 8, 32>}]} {
    %c0_i32 = arith.constant 0 : i32
    %0 = arith.cmpi eq, %arg0, %c0_i32 : i32
    %1 = arith.extui %0 : i1 to i32
    %c0_i32_0 = arith.constant 0 : i32
    %2 = arith.cmpi ne, %1, %c0_i32_0 : i32
    scf.if %2 {
      %cst_190 = arith.constant 0.000000e+00 : f32
      %303 = vector.broadcast %cst_190 : f32 to vector<2x32xf32>
      %c0_191 = arith.constant 0 : index
      %c0_192 = arith.constant 0 : index
      %304 = vector.load %arg5[%c0_191, %c0_192] : memref<2x32xf32, #tpu.memory_space<vmem>>, vector<2x32xf32>
      tpu.vector_store %arg5[%c0_191, %c0_192], %303 {strides = array<i32>} : memref<2x32xf32, #tpu.memory_space<vmem>>, vector<2x32xf32>,
    } else {
    }
    %c0 = arith.constant 0 : index
    %c0_1 = arith.constant 0 : index
    %3 = vector.load %arg5[%c0, %c0_1] : memref<2x32xf32, #tpu.memory_space<vmem>>, vector<2x32xf32>
    %c0_2 = arith.constant 0 : index
    %c0_3 = arith.constant 0 : index
    %4 = vector.load %arg2[%c0_2, %c0_3] : memref<32x96xbf16, #tpu.memory_space<vmem>>, vector<32x96xbf16>
    %c0_4 = arith.constant 0 : index
    %c0_5 = arith.constant 0 : index
    %5 = vector.load %arg3[%c0_4, %c0_5] : memref<1x96xf32, #tpu.memory_space<vmem>>, vector<1x96xf32>
    %6 = arith.truncf %3 : vector<2x32xf32> to vector<2x32xbf16>
    %cst = arith.constant dense<0.000000e+00> : vector<2x96xf32>
    %7 = tpu.matmul %6, %4, %cst {dimension_numbers = #tpu.dot_dimension_numbers<[1], [0], [0], [1], [0, 0, 1, 1], [], []>} : vector<2x32xbf16>, vector<32x96xbf16>, vector<2x96xf32> -> vector<2x96xf32>
    %8 = vector.broadcast %5 : vector<1x96xf32> to vector<2x96xf32>
    %9 = arith.addf %7, %8 : vector<2x96xf32>
    %c0_6 = arith.constant 0 : index
    %c0_7 = arith.constant 0 : index
    %10 = vector.load %arg6[%c0_6, %c0_7] : memref<2x96xf32, #tpu.memory_space<vmem>>, vector<2x96xf32>
    tpu.vector_store %arg6[%c0_6, %c0_7], %9 {strides = array<i32>} : memref<2x96xf32, #tpu.memory_space<vmem>>, vector<2x96xf32>,
    %c0_8 = arith.constant 0 : index
    %c0_9 = arith.constant 0 : index
    %c0_10 = arith.constant 0 : index
    %11 = vector.load %arg1[%c0_8, %c0_9, %c0_10] : memref<2x8x96xf32, #tpu.memory_space<vmem>>, vector<2x1x32xf32>
    %12 = vector.shape_cast %11 : vector<2x1x32xf32> to vector<2x32xf32>
    %c0_11 = arith.constant 0 : index
    %c0_12 = arith.constant 0 : index
    %13 = vector.load %arg6[%c0_11, %c0_12] : memref<2x96xf32, #tpu.memory_space<vmem>>, vector<2x32xf32>
    %14 = arith.addf %12, %13 : vector<2x32xf32>
    %15 = arith.negf %14 : vector<2x32xf32>
    %16 = math.exp %15 : vector<2x32xf32>
    %cst_13 = arith.constant 1.000000e+00 : f32
    %17 = vector.broadcast %cst_13 : f32 to vector<2x32xf32>
    %18 = arith.addf %17, %16 : vector<2x32xf32>
    %19 = arith.divf %17, %18 : vector<2x32xf32>
    %c0_14 = arith.constant 0 : index
    %c0_15 = arith.constant 0 : index
    %c32 = arith.constant 32 : index
    %20 = vector.load %arg1[%c0_14, %c0_15, %c32] : memref<2x8x96xf32, #tpu.memory_space<vmem>>, vector<2x1x32xf32>
    %21 = vector.shape_cast %20 : vector<2x1x32xf32> to vector<2x32xf32>
    %c0_16 = arith.constant 0 : index
    %c32_17 = arith.constant 32 : index
    %22 = vector.load %arg6[%c0_16, %c32_17] : memref<2x96xf32, #tpu.memory_space<vmem>>, vector<2x32xf32>
    %23 = arith.addf %21, %22 : vector<2x32xf32>
    %24 = arith.negf %23 : vector<2x32xf32>
    %25 = math.exp %24 : vector<2x32xf32>
    %cst_18 = arith.constant 1.000000e+00 : f32
    %26 = vector.broadcast %cst_18 : f32 to vector<2x32xf32>
    %27 = arith.addf %26, %25 : vector<2x32xf32>
    %28 = arith.divf %26, %27 : vector<2x32xf32>
    %c0_19 = arith.constant 0 : index
    %c0_20 = arith.constant 0 : index
    %c64 = arith.constant 64 : index
    %29 = vector.load %arg1[%c0_19, %c0_20, %c64] : memref<2x8x96xf32, #tpu.memory_space<vmem>>, vector<2x1x32xf32>
    %30 = vector.shape_cast %29 : vector<2x1x32xf32> to vector<2x32xf32>
    %c0_21 = arith.constant 0 : index
    %c64_22 = arith.constant 64 : index
    %31 = vector.load %arg6[%c0_21, %c64_22] : memref<2x96xf32, #tpu.memory_space<vmem>>, vector<2x32xf32>
    %32 = arith.mulf %19, %31 : vector<2x32xf32>
    %33 = arith.addf %30, %32 : vector<2x32xf32>
    %34 = math.tanh %33 : vector<2x32xf32>
    %cst_23 = arith.constant 1.000000e+00 : f32
    %35 = vector.broadcast %cst_23 : f32 to vector<2x32xf32>
    %36 = arith.subf %35, %28 : vector<2x32xf32>
    %37 = arith.mulf %36, %34 : vector<2x32xf32>
    %38 = arith.mulf %28, %3 : vector<2x32xf32>
    %39 = arith.addf %37, %38 : vector<2x32xf32>
    %c0_24 = arith.constant 0 : index
    %c0_25 = arith.constant 0 : index
    %c0_26 = arith.constant 0 : index
    %40 = vector.load %arg4[%c0_24, %c0_25, %c0_26] : memref<2x8x32xf32, #tpu.memory_space<vmem>>, vector<2x1x32xf32>
    %41 = vector.shape_cast %40 : vector<2x1x32xf32> to vector<2x32xf32>
    %42 = vector.shape_cast %39 : vector<2x32xf32> to vector<2x1x32xf32>
    tpu.vector_store %arg4[%c0_24, %c0_25, %c0_26], %42 {strides = array<i32>} : memref<2x8x32xf32, #tpu.memory_space<vmem>>, vector<2x1x32xf32>,
    %43 = arith.truncf %39 : vector<2x32xf32> to vector<2x32xbf16>
    %cst_27 = arith.constant dense<0.000000e+00> : vector<2x96xf32>
    %44 = tpu.matmul %43, %4, %cst_27 {dimension_numbers = #tpu.dot_dimension_numbers<[1], [0], [0], [1], [0, 0, 1, 1], [], []>} : vector<2x32xbf16>, vector<32x96xbf16>, vector<2x96xf32> -> vector<2x96xf32>
    %45 = vector.broadcast %5 : vector<1x96xf32> to vector<2x96xf32>
    %46 = arith.addf %44, %45 : vector<2x96xf32>
    %c0_28 = arith.constant 0 : index
    %c0_29 = arith.constant 0 : index
    %47 = vector.load %arg6[%c0_28, %c0_29] : memref<2x96xf32, #tpu.memory_space<vmem>>, vector<2x96xf32>
    tpu.vector_store %arg6[%c0_28, %c0_29], %46 {strides = array<i32>} : memref<2x96xf32, #tpu.memory_space<vmem>>, vector<2x96xf32>,
    %c0_30 = arith.constant 0 : index
    %c1 = arith.constant 1 : index
    %c0_31 = arith.constant 0 : index
    %48 = vector.load %arg1[%c0_30, %c1, %c0_31] : memref<2x8x96xf32, #tpu.memory_space<vmem>>, vector<2x1x32xf32>
    %49 = vector.shape_cast %48 : vector<2x1x32xf32> to vector<2x32xf32>
    %c0_32 = arith.constant 0 : index
    %c0_33 = arith.constant 0 : index
    %50 = vector.load %arg6[%c0_32, %c0_33] : memref<2x96xf32, #tpu.memory_space<vmem>>, vector<2x32xf32>
    %51 = arith.addf %49, %50 : vector<2x32xf32>
    %52 = arith.negf %51 : vector<2x32xf32>
    %53 = math.exp %52 : vector<2x32xf32>
    %cst_34 = arith.constant 1.000000e+00 : f32
    %54 = vector.broadcast %cst_34 : f32 to vector<2x32xf32>
    %55 = arith.addf %54, %53 : vector<2x32xf32>
    %56 = arith.divf %54, %55 : vector<2x32xf32>
    %c0_35 = arith.constant 0 : index
    %c1_36 = arith.constant 1 : index
    %c32_37 = arith.constant 32 : index
    %57 = vector.load %arg1[%c0_35, %c1_36, %c32_37] : memref<2x8x96xf32, #tpu.memory_space<vmem>>, vector<2x1x32xf32>
    %58 = vector.shape_cast %57 : vector<2x1x32xf32> to vector<2x32xf32>
    %c0_38 = arith.constant 0 : index
    %c32_39 = arith.constant 32 : index
    %59 = vector.load %arg6[%c0_38, %c32_39] : memref<2x96xf32, #tpu.memory_space<vmem>>, vector<2x32xf32>
    %60 = arith.addf %58, %59 : vector<2x32xf32>
    %61 = arith.negf %60 : vector<2x32xf32>
    %62 = math.exp %61 : vector<2x32xf32>
    %cst_40 = arith.constant 1.000000e+00 : f32
    %63 = vector.broadcast %cst_40 : f32 to vector<2x32xf32>
    %64 = arith.addf %63, %62 : vector<2x32xf32>
    %65 = arith.divf %63, %64 : vector<2x32xf32>
    %c0_41 = arith.constant 0 : index
    %c1_42 = arith.constant 1 : index
    %c64_43 = arith.constant 64 : index
    %66 = vector.load %arg1[%c0_41, %c1_42, %c64_43] : memref<2x8x96xf32, #tpu.memory_space<vmem>>, vector<2x1x32xf32>
    %67 = vector.shape_cast %66 : vector<2x1x32xf32> to vector<2x32xf32>
    %c0_44 = arith.constant 0 : index
    %c64_45 = arith.constant 64 : index
    %68 = vector.load %arg6[%c0_44, %c64_45] : memref<2x96xf32, #tpu.memory_space<vmem>>, vector<2x32xf32>
    %69 = arith.mulf %56, %68 : vector<2x32xf32>
    %70 = arith.addf %67, %69 : vector<2x32xf32>
    %71 = math.tanh %70 : vector<2x32xf32>
    %cst_46 = arith.constant 1.000000e+00 : f32
    %72 = vector.broadcast %cst_46 : f32 to vector<2x32xf32>
    %73 = arith.subf %72, %65 : vector<2x32xf32>
    %74 = arith.mulf %73, %71 : vector<2x32xf32>
    %75 = arith.mulf %65, %39 : vector<2x32xf32>
    %76 = arith.addf %74, %75 : vector<2x32xf32>
    %c0_47 = arith.constant 0 : index
    %c1_48 = arith.constant 1 : index
    %c0_49 = arith.constant 0 : index
    %77 = vector.load %arg4[%c0_47, %c1_48, %c0_49] : memref<2x8x32xf32, #tpu.memory_space<vmem>>, vector<2x1x32xf32>
    %78 = vector.shape_cast %77 : vector<2x1x32xf32> to vector<2x32xf32>
    %79 = vector.shape_cast %76 : vector<2x32xf32> to vector<2x1x32xf32>
    tpu.vector_store %arg4[%c0_47, %c1_48, %c0_49], %79 {strides = array<i32>} : memref<2x8x32xf32, #tpu.memory_space<vmem>>, vector<2x1x32xf32>,
    %80 = arith.truncf %76 : vector<2x32xf32> to vector<2x32xbf16>
    %cst_50 = arith.constant dense<0.000000e+00> : vector<2x96xf32>
    %81 = tpu.matmul %80, %4, %cst_50 {dimension_numbers = #tpu.dot_dimension_numbers<[1], [0], [0], [1], [0, 0, 1, 1], [], []>} : vector<2x32xbf16>, vector<32x96xbf16>, vector<2x96xf32> -> vector<2x96xf32>
    %82 = vector.broadcast %5 : vector<1x96xf32> to vector<2x96xf32>
    %83 = arith.addf %81, %82 : vector<2x96xf32>
    %c0_51 = arith.constant 0 : index
    %c0_52 = arith.constant 0 : index
    %84 = vector.load %arg6[%c0_51, %c0_52] : memref<2x96xf32, #tpu.memory_space<vmem>>, vector<2x96xf32>
    tpu.vector_store %arg6[%c0_51, %c0_52], %83 {strides = array<i32>} : memref<2x96xf32, #tpu.memory_space<vmem>>, vector<2x96xf32>,
    %c0_53 = arith.constant 0 : index
    %c2 = arith.constant 2 : index
    %c0_54 = arith.constant 0 : index
    %85 = vector.load %arg1[%c0_53, %c2, %c0_54] : memref<2x8x96xf32, #tpu.memory_space<vmem>>, vector<2x1x32xf32>
    %86 = vector.shape_cast %85 : vector<2x1x32xf32> to vector<2x32xf32>
    %c0_55 = arith.constant 0 : index
    %c0_56 = arith.constant 0 : index
    %87 = vector.load %arg6[%c0_55, %c0_56] : memref<2x96xf32, #tpu.memory_space<vmem>>, vector<2x32xf32>
    %88 = arith.addf %86, %87 : vector<2x32xf32>
    %89 = arith.negf %88 : vector<2x32xf32>
    %90 = math.exp %89 : vector<2x32xf32>
    %cst_57 = arith.constant 1.000000e+00 : f32
    %91 = vector.broadcast %cst_57 : f32 to vector<2x32xf32>
    %92 = arith.addf %91, %90 : vector<2x32xf32>
    %93 = arith.divf %91, %92 : vector<2x32xf32>
    %c0_58 = arith.constant 0 : index
    %c2_59 = arith.constant 2 : index
    %c32_60 = arith.constant 32 : index
    %94 = vector.load %arg1[%c0_58, %c2_59, %c32_60] : memref<2x8x96xf32, #tpu.memory_space<vmem>>, vector<2x1x32xf32>
    %95 = vector.shape_cast %94 : vector<2x1x32xf32> to vector<2x32xf32>
    %c0_61 = arith.constant 0 : index
    %c32_62 = arith.constant 32 : index
    %96 = vector.load %arg6[%c0_61, %c32_62] : memref<2x96xf32, #tpu.memory_space<vmem>>, vector<2x32xf32>
    %97 = arith.addf %95, %96 : vector<2x32xf32>
    %98 = arith.negf %97 : vector<2x32xf32>
    %99 = math.exp %98 : vector<2x32xf32>
    %cst_63 = arith.constant 1.000000e+00 : f32
    %100 = vector.broadcast %cst_63 : f32 to vector<2x32xf32>
    %101 = arith.addf %100, %99 : vector<2x32xf32>
    %102 = arith.divf %100, %101 : vector<2x32xf32>
    %c0_64 = arith.constant 0 : index
    %c2_65 = arith.constant 2 : index
    %c64_66 = arith.constant 64 : index
    %103 = vector.load %arg1[%c0_64, %c2_65, %c64_66] : memref<2x8x96xf32, #tpu.memory_space<vmem>>, vector<2x1x32xf32>
    %104 = vector.shape_cast %103 : vector<2x1x32xf32> to vector<2x32xf32>
    %c0_67 = arith.constant 0 : index
    %c64_68 = arith.constant 64 : index
    %105 = vector.load %arg6[%c0_67, %c64_68] : memref<2x96xf32, #tpu.memory_space<vmem>>, vector<2x32xf32>
    %106 = arith.mulf %93, %105 : vector<2x32xf32>
    %107 = arith.addf %104, %106 : vector<2x32xf32>
    %108 = math.tanh %107 : vector<2x32xf32>
    %cst_69 = arith.constant 1.000000e+00 : f32
    %109 = vector.broadcast %cst_69 : f32 to vector<2x32xf32>
    %110 = arith.subf %109, %102 : vector<2x32xf32>
    %111 = arith.mulf %110, %108 : vector<2x32xf32>
    %112 = arith.mulf %102, %76 : vector<2x32xf32>
    %113 = arith.addf %111, %112 : vector<2x32xf32>
    %c0_70 = arith.constant 0 : index
    %c2_71 = arith.constant 2 : index
    %c0_72 = arith.constant 0 : index
    %114 = vector.load %arg4[%c0_70, %c2_71, %c0_72] : memref<2x8x32xf32, #tpu.memory_space<vmem>>, vector<2x1x32xf32>
    %115 = vector.shape_cast %114 : vector<2x1x32xf32> to vector<2x32xf32>
    %116 = vector.shape_cast %113 : vector<2x32xf32> to vector<2x1x32xf32>
    tpu.vector_store %arg4[%c0_70, %c2_71, %c0_72], %116 {strides = array<i32>} : memref<2x8x32xf32, #tpu.memory_space<vmem>>, vector<2x1x32xf32>,
    %117 = arith.truncf %113 : vector<2x32xf32> to vector<2x32xbf16>
    %cst_73 = arith.constant dense<0.000000e+00> : vector<2x96xf32>
    %118 = tpu.matmul %117, %4, %cst_73 {dimension_numbers = #tpu.dot_dimension_numbers<[1], [0], [0], [1], [0, 0, 1, 1], [], []>} : vector<2x32xbf16>, vector<32x96xbf16>, vector<2x96xf32> -> vector<2x96xf32>
    %119 = vector.broadcast %5 : vector<1x96xf32> to vector<2x96xf32>
    %120 = arith.addf %118, %119 : vector<2x96xf32>
    %c0_74 = arith.constant 0 : index
    %c0_75 = arith.constant 0 : index
    %121 = vector.load %arg6[%c0_74, %c0_75] : memref<2x96xf32, #tpu.memory_space<vmem>>, vector<2x96xf32>
    tpu.vector_store %arg6[%c0_74, %c0_75], %120 {strides = array<i32>} : memref<2x96xf32, #tpu.memory_space<vmem>>, vector<2x96xf32>,
    %c0_76 = arith.constant 0 : index
    %c3 = arith.constant 3 : index
    %c0_77 = arith.constant 0 : index
    %122 = vector.load %arg1[%c0_76, %c3, %c0_77] : memref<2x8x96xf32, #tpu.memory_space<vmem>>, vector<2x1x32xf32>
    %123 = vector.shape_cast %122 : vector<2x1x32xf32> to vector<2x32xf32>
    %c0_78 = arith.constant 0 : index
    %c0_79 = arith.constant 0 : index
    %124 = vector.load %arg6[%c0_78, %c0_79] : memref<2x96xf32, #tpu.memory_space<vmem>>, vector<2x32xf32>
    %125 = arith.addf %123, %124 : vector<2x32xf32>
    %126 = arith.negf %125 : vector<2x32xf32>
    %127 = math.exp %126 : vector<2x32xf32>
    %cst_80 = arith.constant 1.000000e+00 : f32
    %128 = vector.broadcast %cst_80 : f32 to vector<2x32xf32>
    %129 = arith.addf %128, %127 : vector<2x32xf32>
    %130 = arith.divf %128, %129 : vector<2x32xf32>
    %c0_81 = arith.constant 0 : index
    %c3_82 = arith.constant 3 : index
    %c32_83 = arith.constant 32 : index
    %131 = vector.load %arg1[%c0_81, %c3_82, %c32_83] : memref<2x8x96xf32, #tpu.memory_space<vmem>>, vector<2x1x32xf32>
    %132 = vector.shape_cast %131 : vector<2x1x32xf32> to vector<2x32xf32>
    %c0_84 = arith.constant 0 : index
    %c32_85 = arith.constant 32 : index
    %133 = vector.load %arg6[%c0_84, %c32_85] : memref<2x96xf32, #tpu.memory_space<vmem>>, vector<2x32xf32>
    %134 = arith.addf %132, %133 : vector<2x32xf32>
    %135 = arith.negf %134 : vector<2x32xf32>
    %136 = math.exp %135 : vector<2x32xf32>
    %cst_86 = arith.constant 1.000000e+00 : f32
    %137 = vector.broadcast %cst_86 : f32 to vector<2x32xf32>
    %138 = arith.addf %137, %136 : vector<2x32xf32>
    %139 = arith.divf %137, %138 : vector<2x32xf32>
    %c0_87 = arith.constant 0 : index
    %c3_88 = arith.constant 3 : index
    %c64_89 = arith.constant 64 : index
    %140 = vector.load %arg1[%c0_87, %c3_88, %c64_89] : memref<2x8x96xf32, #tpu.memory_space<vmem>>, vector<2x1x32xf32>
    %141 = vector.shape_cast %140 : vector<2x1x32xf32> to vector<2x32xf32>
    %c0_90 = arith.constant 0 : index
    %c64_91 = arith.constant 64 : index
    %142 = vector.load %arg6[%c0_90, %c64_91] : memref<2x96xf32, #tpu.memory_space<vmem>>, vector<2x32xf32>
    %143 = arith.mulf %130, %142 : vector<2x32xf32>
    %144 = arith.addf %141, %143 : vector<2x32xf32>
    %145 = math.tanh %144 : vector<2x32xf32>
    %cst_92 = arith.constant 1.000000e+00 : f32
    %146 = vector.broadcast %cst_92 : f32 to vector<2x32xf32>
    %147 = arith.subf %146, %139 : vector<2x32xf32>
    %148 = arith.mulf %147, %145 : vector<2x32xf32>
    %149 = arith.mulf %139, %113 : vector<2x32xf32>
    %150 = arith.addf %148, %149 : vector<2x32xf32>
    %c0_93 = arith.constant 0 : index
    %c3_94 = arith.constant 3 : index
    %c0_95 = arith.constant 0 : index
    %151 = vector.load %arg4[%c0_93, %c3_94, %c0_95] : memref<2x8x32xf32, #tpu.memory_space<vmem>>, vector<2x1x32xf32>
    %152 = vector.shape_cast %151 : vector<2x1x32xf32> to vector<2x32xf32>
    %153 = vector.shape_cast %150 : vector<2x32xf32> to vector<2x1x32xf32>
    tpu.vector_store %arg4[%c0_93, %c3_94, %c0_95], %153 {strides = array<i32>} : memref<2x8x32xf32, #tpu.memory_space<vmem>>, vector<2x1x32xf32>,
    %154 = arith.truncf %150 : vector<2x32xf32> to vector<2x32xbf16>
    %cst_96 = arith.constant dense<0.000000e+00> : vector<2x96xf32>
    %155 = tpu.matmul %154, %4, %cst_96 {dimension_numbers = #tpu.dot_dimension_numbers<[1], [0], [0], [1], [0, 0, 1, 1], [], []>} : vector<2x32xbf16>, vector<32x96xbf16>, vector<2x96xf32> -> vector<2x96xf32>
    %156 = vector.broadcast %5 : vector<1x96xf32> to vector<2x96xf32>
    %157 = arith.addf %155, %156 : vector<2x96xf32>
    %c0_97 = arith.constant 0 : index
    %c0_98 = arith.constant 0 : index
    %158 = vector.load %arg6[%c0_97, %c0_98] : memref<2x96xf32, #tpu.memory_space<vmem>>, vector<2x96xf32>
    tpu.vector_store %arg6[%c0_97, %c0_98], %157 {strides = array<i32>} : memref<2x96xf32, #tpu.memory_space<vmem>>, vector<2x96xf32>,
    %c0_99 = arith.constant 0 : index
    %c4 = arith.constant 4 : index
    %c0_100 = arith.constant 0 : index
    %159 = vector.load %arg1[%c0_99, %c4, %c0_100] : memref<2x8x96xf32, #tpu.memory_space<vmem>>, vector<2x1x32xf32>
    %160 = vector.shape_cast %159 : vector<2x1x32xf32> to vector<2x32xf32>
    %c0_101 = arith.constant 0 : index
    %c0_102 = arith.constant 0 : index
    %161 = vector.load %arg6[%c0_101, %c0_102] : memref<2x96xf32, #tpu.memory_space<vmem>>, vector<2x32xf32>
    %162 = arith.addf %160, %161 : vector<2x32xf32>
    %163 = arith.negf %162 : vector<2x32xf32>
    %164 = math.exp %163 : vector<2x32xf32>
    %cst_103 = arith.constant 1.000000e+00 : f32
    %165 = vector.broadcast %cst_103 : f32 to vector<2x32xf32>
    %166 = arith.addf %165, %164 : vector<2x32xf32>
    %167 = arith.divf %165, %166 : vector<2x32xf32>
    %c0_104 = arith.constant 0 : index
    %c4_105 = arith.constant 4 : index
    %c32_106 = arith.constant 32 : index
    %168 = vector.load %arg1[%c0_104, %c4_105, %c32_106] : memref<2x8x96xf32, #tpu.memory_space<vmem>>, vector<2x1x32xf32>
    %169 = vector.shape_cast %168 : vector<2x1x32xf32> to vector<2x32xf32>
    %c0_107 = arith.constant 0 : index
    %c32_108 = arith.constant 32 : index
    %170 = vector.load %arg6[%c0_107, %c32_108] : memref<2x96xf32, #tpu.memory_space<vmem>>, vector<2x32xf32>
    %171 = arith.addf %169, %170 : vector<2x32xf32>
    %172 = arith.negf %171 : vector<2x32xf32>
    %173 = math.exp %172 : vector<2x32xf32>
    %cst_109 = arith.constant 1.000000e+00 : f32
    %174 = vector.broadcast %cst_109 : f32 to vector<2x32xf32>
    %175 = arith.addf %174, %173 : vector<2x32xf32>
    %176 = arith.divf %174, %175 : vector<2x32xf32>
    %c0_110 = arith.constant 0 : index
    %c4_111 = arith.constant 4 : index
    %c64_112 = arith.constant 64 : index
    %177 = vector.load %arg1[%c0_110, %c4_111, %c64_112] : memref<2x8x96xf32, #tpu.memory_space<vmem>>, vector<2x1x32xf32>
    %178 = vector.shape_cast %177 : vector<2x1x32xf32> to vector<2x32xf32>
    %c0_113 = arith.constant 0 : index
    %c64_114 = arith.constant 64 : index
    %179 = vector.load %arg6[%c0_113, %c64_114] : memref<2x96xf32, #tpu.memory_space<vmem>>, vector<2x32xf32>
    %180 = arith.mulf %167, %179 : vector<2x32xf32>
    %181 = arith.addf %178, %180 : vector<2x32xf32>
    %182 = math.tanh %181 : vector<2x32xf32>
    %cst_115 = arith.constant 1.000000e+00 : f32
    %183 = vector.broadcast %cst_115 : f32 to vector<2x32xf32>
    %184 = arith.subf %183, %176 : vector<2x32xf32>
    %185 = arith.mulf %184, %182 : vector<2x32xf32>
    %186 = arith.mulf %176, %150 : vector<2x32xf32>
    %187 = arith.addf %185, %186 : vector<2x32xf32>
    %c0_116 = arith.constant 0 : index
    %c4_117 = arith.constant 4 : index
    %c0_118 = arith.constant 0 : index
    %188 = vector.load %arg4[%c0_116, %c4_117, %c0_118] : memref<2x8x32xf32, #tpu.memory_space<vmem>>, vector<2x1x32xf32>
    %189 = vector.shape_cast %188 : vector<2x1x32xf32> to vector<2x32xf32>
    %190 = vector.shape_cast %187 : vector<2x32xf32> to vector<2x1x32xf32>
    tpu.vector_store %arg4[%c0_116, %c4_117, %c0_118], %190 {strides = array<i32>} : memref<2x8x32xf32, #tpu.memory_space<vmem>>, vector<2x1x32xf32>,
    %191 = arith.truncf %187 : vector<2x32xf32> to vector<2x32xbf16>
    %cst_119 = arith.constant dense<0.000000e+00> : vector<2x96xf32>
    %192 = tpu.matmul %191, %4, %cst_119 {dimension_numbers = #tpu.dot_dimension_numbers<[1], [0], [0], [1], [0, 0, 1, 1], [], []>} : vector<2x32xbf16>, vector<32x96xbf16>, vector<2x96xf32> -> vector<2x96xf32>
    %193 = vector.broadcast %5 : vector<1x96xf32> to vector<2x96xf32>
    %194 = arith.addf %192, %193 : vector<2x96xf32>
    %c0_120 = arith.constant 0 : index
    %c0_121 = arith.constant 0 : index
    %195 = vector.load %arg6[%c0_120, %c0_121] : memref<2x96xf32, #tpu.memory_space<vmem>>, vector<2x96xf32>
    tpu.vector_store %arg6[%c0_120, %c0_121], %194 {strides = array<i32>} : memref<2x96xf32, #tpu.memory_space<vmem>>, vector<2x96xf32>,
    %c0_122 = arith.constant 0 : index
    %c5 = arith.constant 5 : index
    %c0_123 = arith.constant 0 : index
    %196 = vector.load %arg1[%c0_122, %c5, %c0_123] : memref<2x8x96xf32, #tpu.memory_space<vmem>>, vector<2x1x32xf32>
    %197 = vector.shape_cast %196 : vector<2x1x32xf32> to vector<2x32xf32>
    %c0_124 = arith.constant 0 : index
    %c0_125 = arith.constant 0 : index
    %198 = vector.load %arg6[%c0_124, %c0_125] : memref<2x96xf32, #tpu.memory_space<vmem>>, vector<2x32xf32>
    %199 = arith.addf %197, %198 : vector<2x32xf32>
    %200 = arith.negf %199 : vector<2x32xf32>
    %201 = math.exp %200 : vector<2x32xf32>
    %cst_126 = arith.constant 1.000000e+00 : f32
    %202 = vector.broadcast %cst_126 : f32 to vector<2x32xf32>
    %203 = arith.addf %202, %201 : vector<2x32xf32>
    %204 = arith.divf %202, %203 : vector<2x32xf32>
    %c0_127 = arith.constant 0 : index
    %c5_128 = arith.constant 5 : index
    %c32_129 = arith.constant 32 : index
    %205 = vector.load %arg1[%c0_127, %c5_128, %c32_129] : memref<2x8x96xf32, #tpu.memory_space<vmem>>, vector<2x1x32xf32>
    %206 = vector.shape_cast %205 : vector<2x1x32xf32> to vector<2x32xf32>
    %c0_130 = arith.constant 0 : index
    %c32_131 = arith.constant 32 : index
    %207 = vector.load %arg6[%c0_130, %c32_131] : memref<2x96xf32, #tpu.memory_space<vmem>>, vector<2x32xf32>
    %208 = arith.addf %206, %207 : vector<2x32xf32>
    %209 = arith.negf %208 : vector<2x32xf32>
    %210 = math.exp %209 : vector<2x32xf32>
    %cst_132 = arith.constant 1.000000e+00 : f32
    %211 = vector.broadcast %cst_132 : f32 to vector<2x32xf32>
    %212 = arith.addf %211, %210 : vector<2x32xf32>
    %213 = arith.divf %211, %212 : vector<2x32xf32>
    %c0_133 = arith.constant 0 : index
    %c5_134 = arith.constant 5 : index
    %c64_135 = arith.constant 64 : index
    %214 = vector.load %arg1[%c0_133, %c5_134, %c64_135] : memref<2x8x96xf32, #tpu.memory_space<vmem>>, vector<2x1x32xf32>
    %215 = vector.shape_cast %214 : vector<2x1x32xf32> to vector<2x32xf32>
    %c0_136 = arith.constant 0 : index
    %c64_137 = arith.constant 64 : index
    %216 = vector.load %arg6[%c0_136, %c64_137] : memref<2x96xf32, #tpu.memory_space<vmem>>, vector<2x32xf32>
    %217 = arith.mulf %204, %216 : vector<2x32xf32>
    %218 = arith.addf %215, %217 : vector<2x32xf32>
    %219 = math.tanh %218 : vector<2x32xf32>
    %cst_138 = arith.constant 1.000000e+00 : f32
    %220 = vector.broadcast %cst_138 : f32 to vector<2x32xf32>
    %221 = arith.subf %220, %213 : vector<2x32xf32>
    %222 = arith.mulf %221, %219 : vector<2x32xf32>
    %223 = arith.mulf %213, %187 : vector<2x32xf32>
    %224 = arith.addf %222, %223 : vector<2x32xf32>
    %c0_139 = arith.constant 0 : index
    %c5_140 = arith.constant 5 : index
    %c0_141 = arith.constant 0 : index
    %225 = vector.load %arg4[%c0_139, %c5_140, %c0_141] : memref<2x8x32xf32, #tpu.memory_space<vmem>>, vector<2x1x32xf32>
    %226 = vector.shape_cast %225 : vector<2x1x32xf32> to vector<2x32xf32>
    %227 = vector.shape_cast %224 : vector<2x32xf32> to vector<2x1x32xf32>
    tpu.vector_store %arg4[%c0_139, %c5_140, %c0_141], %227 {strides = array<i32>} : memref<2x8x32xf32, #tpu.memory_space<vmem>>, vector<2x1x32xf32>,
    %228 = arith.truncf %224 : vector<2x32xf32> to vector<2x32xbf16>
    %cst_142 = arith.constant dense<0.000000e+00> : vector<2x96xf32>
    %229 = tpu.matmul %228, %4, %cst_142 {dimension_numbers = #tpu.dot_dimension_numbers<[1], [0], [0], [1], [0, 0, 1, 1], [], []>} : vector<2x32xbf16>, vector<32x96xbf16>, vector<2x96xf32> -> vector<2x96xf32>
    %230 = vector.broadcast %5 : vector<1x96xf32> to vector<2x96xf32>
    %231 = arith.addf %229, %230 : vector<2x96xf32>
    %c0_143 = arith.constant 0 : index
    %c0_144 = arith.constant 0 : index
    %232 = vector.load %arg6[%c0_143, %c0_144] : memref<2x96xf32, #tpu.memory_space<vmem>>, vector<2x96xf32>
    tpu.vector_store %arg6[%c0_143, %c0_144], %231 {strides = array<i32>} : memref<2x96xf32, #tpu.memory_space<vmem>>, vector<2x96xf32>,
    %c0_145 = arith.constant 0 : index
    %c6 = arith.constant 6 : index
    %c0_146 = arith.constant 0 : index
    %233 = vector.load %arg1[%c0_145, %c6, %c0_146] : memref<2x8x96xf32, #tpu.memory_space<vmem>>, vector<2x1x32xf32>
    %234 = vector.shape_cast %233 : vector<2x1x32xf32> to vector<2x32xf32>
    %c0_147 = arith.constant 0 : index
    %c0_148 = arith.constant 0 : index
    %235 = vector.load %arg6[%c0_147, %c0_148] : memref<2x96xf32, #tpu.memory_space<vmem>>, vector<2x32xf32>
    %236 = arith.addf %234, %235 : vector<2x32xf32>
    %237 = arith.negf %236 : vector<2x32xf32>
    %238 = math.exp %237 : vector<2x32xf32>
    %cst_149 = arith.constant 1.000000e+00 : f32
    %239 = vector.broadcast %cst_149 : f32 to vector<2x32xf32>
    %240 = arith.addf %239, %238 : vector<2x32xf32>
    %241 = arith.divf %239, %240 : vector<2x32xf32>
    %c0_150 = arith.constant 0 : index
    %c6_151 = arith.constant 6 : index
    %c32_152 = arith.constant 32 : index
    %242 = vector.load %arg1[%c0_150, %c6_151, %c32_152] : memref<2x8x96xf32, #tpu.memory_space<vmem>>, vector<2x1x32xf32>
    %243 = vector.shape_cast %242 : vector<2x1x32xf32> to vector<2x32xf32>
    %c0_153 = arith.constant 0 : index
    %c32_154 = arith.constant 32 : index
    %244 = vector.load %arg6[%c0_153, %c32_154] : memref<2x96xf32, #tpu.memory_space<vmem>>, vector<2x32xf32>
    %245 = arith.addf %243, %244 : vector<2x32xf32>
    %246 = arith.negf %245 : vector<2x32xf32>
    %247 = math.exp %246 : vector<2x32xf32>
    %cst_155 = arith.constant 1.000000e+00 : f32
    %248 = vector.broadcast %cst_155 : f32 to vector<2x32xf32>
    %249 = arith.addf %248, %247 : vector<2x32xf32>
    %250 = arith.divf %248, %249 : vector<2x32xf32>
    %c0_156 = arith.constant 0 : index
    %c6_157 = arith.constant 6 : index
    %c64_158 = arith.constant 64 : index
    %251 = vector.load %arg1[%c0_156, %c6_157, %c64_158] : memref<2x8x96xf32, #tpu.memory_space<vmem>>, vector<2x1x32xf32>
    %252 = vector.shape_cast %251 : vector<2x1x32xf32> to vector<2x32xf32>
    %c0_159 = arith.constant 0 : index
    %c64_160 = arith.constant 64 : index
    %253 = vector.load %arg6[%c0_159, %c64_160] : memref<2x96xf32, #tpu.memory_space<vmem>>, vector<2x32xf32>
    %254 = arith.mulf %241, %253 : vector<2x32xf32>
    %255 = arith.addf %252, %254 : vector<2x32xf32>
    %256 = math.tanh %255 : vector<2x32xf32>
    %cst_161 = arith.constant 1.000000e+00 : f32
    %257 = vector.broadcast %cst_161 : f32 to vector<2x32xf32>
    %258 = arith.subf %257, %250 : vector<2x32xf32>
    %259 = arith.mulf %258, %256 : vector<2x32xf32>
    %260 = arith.mulf %250, %224 : vector<2x32xf32>
    %261 = arith.addf %259, %260 : vector<2x32xf32>
    %c0_162 = arith.constant 0 : index
    %c6_163 = arith.constant 6 : index
    %c0_164 = arith.constant 0 : index
    %262 = vector.load %arg4[%c0_162, %c6_163, %c0_164] : memref<2x8x32xf32, #tpu.memory_space<vmem>>, vector<2x1x32xf32>
    %263 = vector.shape_cast %262 : vector<2x1x32xf32> to vector<2x32xf32>
    %264 = vector.shape_cast %261 : vector<2x32xf32> to vector<2x1x32xf32>
    tpu.vector_store %arg4[%c0_162, %c6_163, %c0_164], %264 {strides = array<i32>} : memref<2x8x32xf32, #tpu.memory_space<vmem>>, vector<2x1x32xf32>,
    %265 = arith.truncf %261 : vector<2x32xf32> to vector<2x32xbf16>
    %cst_165 = arith.constant dense<0.000000e+00> : vector<2x96xf32>
    %266 = tpu.matmul %265, %4, %cst_165 {dimension_numbers = #tpu.dot_dimension_numbers<[1], [0], [0], [1], [0, 0, 1, 1], [], []>} : vector<2x32xbf16>, vector<32x96xbf16>, vector<2x96xf32> -> vector<2x96xf32>
    %267 = vector.broadcast %5 : vector<1x96xf32> to vector<2x96xf32>
    %268 = arith.addf %266, %267 : vector<2x96xf32>
    %c0_166 = arith.constant 0 : index
    %c0_167 = arith.constant 0 : index
    %269 = vector.load %arg6[%c0_166, %c0_167] : memref<2x96xf32, #tpu.memory_space<vmem>>, vector<2x96xf32>
    tpu.vector_store %arg6[%c0_166, %c0_167], %268 {strides = array<i32>} : memref<2x96xf32, #tpu.memory_space<vmem>>, vector<2x96xf32>,
    %c0_168 = arith.constant 0 : index
    %c7 = arith.constant 7 : index
    %c0_169 = arith.constant 0 : index
    %270 = vector.load %arg1[%c0_168, %c7, %c0_169] : memref<2x8x96xf32, #tpu.memory_space<vmem>>, vector<2x1x32xf32>
    %271 = vector.shape_cast %270 : vector<2x1x32xf32> to vector<2x32xf32>
    %c0_170 = arith.constant 0 : index
    %c0_171 = arith.constant 0 : index
    %272 = vector.load %arg6[%c0_170, %c0_171] : memref<2x96xf32, #tpu.memory_space<vmem>>, vector<2x32xf32>
    %273 = arith.addf %271, %272 : vector<2x32xf32>
    %274 = arith.negf %273 : vector<2x32xf32>
    %275 = math.exp %274 : vector<2x32xf32>
    %cst_172 = arith.constant 1.000000e+00 : f32
    %276 = vector.broadcast %cst_172 : f32 to vector<2x32xf32>
    %277 = arith.addf %276, %275 : vector<2x32xf32>
    %278 = arith.divf %276, %277 : vector<2x32xf32>
    %c0_173 = arith.constant 0 : index
    %c7_174 = arith.constant 7 : index
    %c32_175 = arith.constant 32 : index
    %279 = vector.load %arg1[%c0_173, %c7_174, %c32_175] : memref<2x8x96xf32, #tpu.memory_space<vmem>>, vector<2x1x32xf32>
    %280 = vector.shape_cast %279 : vector<2x1x32xf32> to vector<2x32xf32>
    %c0_176 = arith.constant 0 : index
    %c32_177 = arith.constant 32 : index
    %281 = vector.load %arg6[%c0_176, %c32_177] : memref<2x96xf32, #tpu.memory_space<vmem>>, vector<2x32xf32>
    %282 = arith.addf %280, %281 : vector<2x32xf32>
    %283 = arith.negf %282 : vector<2x32xf32>
    %284 = math.exp %283 : vector<2x32xf32>
    %cst_178 = arith.constant 1.000000e+00 : f32
    %285 = vector.broadcast %cst_178 : f32 to vector<2x32xf32>
    %286 = arith.addf %285, %284 : vector<2x32xf32>
    %287 = arith.divf %285, %286 : vector<2x32xf32>
    %c0_179 = arith.constant 0 : index
    %c7_180 = arith.constant 7 : index
    %c64_181 = arith.constant 64 : index
    %288 = vector.load %arg1[%c0_179, %c7_180, %c64_181] : memref<2x8x96xf32, #tpu.memory_space<vmem>>, vector<2x1x32xf32>
    %289 = vector.shape_cast %288 : vector<2x1x32xf32> to vector<2x32xf32>
    %c0_182 = arith.constant 0 : index
    %c64_183 = arith.constant 64 : index
    %290 = vector.load %arg6[%c0_182, %c64_183] : memref<2x96xf32, #tpu.memory_space<vmem>>, vector<2x32xf32>
    %291 = arith.mulf %278, %290 : vector<2x32xf32>
    %292 = arith.addf %289, %291 : vector<2x32xf32>
    %293 = math.tanh %292 : vector<2x32xf32>
    %cst_184 = arith.constant 1.000000e+00 : f32
    %294 = vector.broadcast %cst_184 : f32 to vector<2x32xf32>
    %295 = arith.subf %294, %287 : vector<2x32xf32>
    %296 = arith.mulf %295, %293 : vector<2x32xf32>
    %297 = arith.mulf %287, %261 : vector<2x32xf32>
    %298 = arith.addf %296, %297 : vector<2x32xf32>
    %c0_185 = arith.constant 0 : index
    %c7_186 = arith.constant 7 : index
    %c0_187 = arith.constant 0 : index
    %299 = vector.load %arg4[%c0_185, %c7_186, %c0_187] : memref<2x8x32xf32, #tpu.memory_space<vmem>>, vector<2x1x32xf32>
    %300 = vector.shape_cast %299 : vector<2x1x32xf32> to vector<2x32xf32>
    %301 = vector.shape_cast %298 : vector<2x32xf32> to vector<2x1x32xf32>
    tpu.vector_store %arg4[%c0_185, %c7_186, %c0_187], %301 {strides = array<i32>} : memref<2x8x32xf32, #tpu.memory_space<vmem>>, vector<2x1x32xf32>,
    %c0_188 = arith.constant 0 : index
    %c0_189 = arith.constant 0 : index
    %302 = vector.load %arg5[%c0_188, %c0_189] : memref<2x32xf32, #tpu.memory_space<vmem>>, vector<2x32xf32>
    tpu.vector_store %arg5[%c0_188, %c0_189], %298 {strides = array<i32>} : memref<2x32xf32, #tpu.memory_space<vmem>>, vector<2x32xf32>,
    return
  }
  func.func @transform_0(%arg0: i32) -> (i32, i32, i32) {
    %c0_i32 = arith.constant 0 : i32
    %c0_i32_0 = arith.constant 0 : i32
    %c0_i32_1 = arith.constant 0 : i32
    return %c0_i32, %arg0, %c0_i32_0 : i32, i32, i32
  }
  func.func @transform_1(%arg0: i32) -> (i32, i32) {
    %c0_i32 = arith.constant 0 : i32
    %c0_i32_0 = arith.constant 0 : i32
    %c0_i32_1 = arith.constant 0 : i32
    return %c0_i32, %c0_i32_0 : i32, i32
  }
  func.func @transform_2(%arg0: i32) -> (i32, i32) {
    %c0_i32 = arith.constant 0 : i32
    %c0_i32_0 = arith.constant 0 : i32
    %c0_i32_1 = arith.constant 0 : i32
    return %c0_i32, %c0_i32_0 : i32, i32
  }
  func.func @transform_3(%arg0: i32) -> (i32, i32, i32) {
    %c0_i32 = arith.constant 0 : i32
    %c0_i32_0 = arith.constant 0 : i32
    %c0_i32_1 = arith.constant 0 : i32
    return %c0_i32, %arg0, %c0_i32_0 : i32, i32, i32
  }
}

module attributes {stable_mosaic.version = 11 : i64} {
  func.func @_matmul_bias_kernel(%arg0: i32, %arg1: i32, %arg2: memref<32x32xf32, #tpu.memory_space<vmem>>, %arg3: memref<32x96xbf16, #tpu.memory_space<vmem>>, %arg4: memref<1x96xf32, #tpu.memory_space<vmem>>, %arg5: memref<32x96xf32, #tpu.memory_space<vmem>>) attributes {dimension_semantics = [#tpu.dimension_semantics<parallel>, #tpu.dimension_semantics<parallel>], iteration_bounds = array<i64: 1, 1>, scalar_prefetch = 0 : i64, scratch_operands = 0 : i64, tpu.core_type = #tpu.core_type<tc>, window_params = [{transform_indices = @transform_0, window_bounds = array<i64: 32, 32>}, {transform_indices = @transform_1, window_bounds = array<i64: 32, 96>}, {transform_indices = @transform_2, window_bounds = array<i64: 1, 96>}, {transform_indices = @transform_3, window_bounds = array<i64: 32, 96>}]} {
    %c0 = arith.constant 0 : index
    %c0_0 = arith.constant 0 : index
    %0 = vector.load %arg2[%c0, %c0_0] : memref<32x32xf32, #tpu.memory_space<vmem>>, vector<32x32xf32>
    %1 = arith.truncf %0 : vector<32x32xf32> to vector<32x32xbf16>
    %c0_1 = arith.constant 0 : index
    %c0_2 = arith.constant 0 : index
    %2 = vector.load %arg3[%c0_1, %c0_2] : memref<32x96xbf16, #tpu.memory_space<vmem>>, vector<32x96xbf16>
    %cst = arith.constant dense<0.000000e+00> : vector<32x96xf32>
    %3 = tpu.matmul %1, %2, %cst {dimension_numbers = #tpu.dot_dimension_numbers<[1], [0], [0], [1], [0, 0, 1, 1], [], []>} : vector<32x32xbf16>, vector<32x96xbf16>, vector<32x96xf32> -> vector<32x96xf32>
    %c0_3 = arith.constant 0 : index
    %c0_4 = arith.constant 0 : index
    %4 = vector.load %arg4[%c0_3, %c0_4] : memref<1x96xf32, #tpu.memory_space<vmem>>, vector<1x96xf32>
    %5 = vector.broadcast %4 : vector<1x96xf32> to vector<32x96xf32>
    %6 = arith.addf %3, %5 : vector<32x96xf32>
    %c0_5 = arith.constant 0 : index
    %c0_6 = arith.constant 0 : index
    %7 = vector.load %arg5[%c0_5, %c0_6] : memref<32x96xf32, #tpu.memory_space<vmem>>, vector<32x96xf32>
    tpu.vector_store %arg5[%c0_5, %c0_6], %6 {strides = array<i32>} : memref<32x96xf32, #tpu.memory_space<vmem>>, vector<32x96xf32>,
    return
  }
  func.func @transform_0(%arg0: i32, %arg1: i32) -> (i32, i32) {
    %c0_i32 = arith.constant 0 : i32
    %c0_i32_0 = arith.constant 0 : i32
    return %arg0, %c0_i32 : i32, i32
  }
  func.func @transform_1(%arg0: i32, %arg1: i32) -> (i32, i32) {
    %c0_i32 = arith.constant 0 : i32
    %c0_i32_0 = arith.constant 0 : i32
    return %c0_i32, %arg1 : i32, i32
  }
  func.func @transform_2(%arg0: i32, %arg1: i32) -> (i32, i32) {
    %c0_i32 = arith.constant 0 : i32
    %c0_i32_0 = arith.constant 0 : i32
    return %c0_i32, %arg1 : i32, i32
  }
  func.func @transform_3(%arg0: i32, %arg1: i32) -> (i32, i32) {
    %c0_i32 = arith.constant 0 : i32
    return %arg0, %arg1 : i32, i32
  }
}

module attributes {stable_mosaic.version = 11 : i64} {
  func.func @_matmul_bias_kernel(%arg0: i32, %arg1: i32, %arg2: memref<32x132xf32, #tpu.memory_space<vmem>>, %arg3: memref<132x96xbf16, #tpu.memory_space<vmem>>, %arg4: memref<1x96xf32, #tpu.memory_space<vmem>>, %arg5: memref<32x96xf32, #tpu.memory_space<vmem>>) attributes {dimension_semantics = [#tpu.dimension_semantics<parallel>, #tpu.dimension_semantics<parallel>], iteration_bounds = array<i64: 1, 1>, scalar_prefetch = 0 : i64, scratch_operands = 0 : i64, tpu.core_type = #tpu.core_type<tc>, window_params = [{transform_indices = @transform_0, window_bounds = array<i64: 32, 132>}, {transform_indices = @transform_1, window_bounds = array<i64: 132, 96>}, {transform_indices = @transform_2, window_bounds = array<i64: 1, 96>}, {transform_indices = @transform_3, window_bounds = array<i64: 32, 96>}]} {
    %c0 = arith.constant 0 : index
    %c0_0 = arith.constant 0 : index
    %0 = vector.load %arg2[%c0, %c0_0] : memref<32x132xf32, #tpu.memory_space<vmem>>, vector<32x132xf32>
    %1 = arith.truncf %0 : vector<32x132xf32> to vector<32x132xbf16>
    %c0_1 = arith.constant 0 : index
    %c0_2 = arith.constant 0 : index
    %2 = vector.load %arg3[%c0_1, %c0_2] : memref<132x96xbf16, #tpu.memory_space<vmem>>, vector<132x96xbf16>
    %cst = arith.constant dense<0.000000e+00> : vector<32x96xf32>
    %3 = tpu.matmul %1, %2, %cst {dimension_numbers = #tpu.dot_dimension_numbers<[1], [0], [0], [1], [0, 0, 1, 1], [], []>} : vector<32x132xbf16>, vector<132x96xbf16>, vector<32x96xf32> -> vector<32x96xf32>
    %c0_3 = arith.constant 0 : index
    %c0_4 = arith.constant 0 : index
    %4 = vector.load %arg4[%c0_3, %c0_4] : memref<1x96xf32, #tpu.memory_space<vmem>>, vector<1x96xf32>
    %5 = vector.broadcast %4 : vector<1x96xf32> to vector<32x96xf32>
    %6 = arith.addf %3, %5 : vector<32x96xf32>
    %c0_5 = arith.constant 0 : index
    %c0_6 = arith.constant 0 : index
    %7 = vector.load %arg5[%c0_5, %c0_6] : memref<32x96xf32, #tpu.memory_space<vmem>>, vector<32x96xf32>
    tpu.vector_store %arg5[%c0_5, %c0_6], %6 {strides = array<i32>} : memref<32x96xf32, #tpu.memory_space<vmem>>, vector<32x96xf32>,
    return
  }
  func.func @transform_0(%arg0: i32, %arg1: i32) -> (i32, i32) {
    %c0_i32 = arith.constant 0 : i32
    %c0_i32_0 = arith.constant 0 : i32
    return %arg0, %c0_i32 : i32, i32
  }
  func.func @transform_1(%arg0: i32, %arg1: i32) -> (i32, i32) {
    %c0_i32 = arith.constant 0 : i32
    %c0_i32_0 = arith.constant 0 : i32
    return %c0_i32, %arg1 : i32, i32
  }
  func.func @transform_2(%arg0: i32, %arg1: i32) -> (i32, i32) {
    %c0_i32 = arith.constant 0 : i32
    %c0_i32_0 = arith.constant 0 : i32
    return %c0_i32, %arg1 : i32, i32
  }
  func.func @transform_3(%arg0: i32, %arg1: i32) -> (i32, i32) {
    %c0_i32 = arith.constant 0 : i32
    return %arg0, %arg1 : i32, i32
  }
}

module attributes {stable_mosaic.version = 11 : i64} {
  func.func @_inception_kernel(%arg0: i32, %arg1: memref<1x18x132xf32, #tpu.memory_space<vmem>>, %arg2: memref<132x32xbf16, #tpu.memory_space<vmem>>, %arg3: memref<1x32xf32, #tpu.memory_space<vmem>>, %arg4: memref<7x32x32xbf16, #tpu.memory_space<vmem>>, %arg5: memref<132x32xbf16, #tpu.memory_space<vmem>>, %arg6: memref<1x32xf32, #tpu.memory_space<vmem>>, %arg7: memref<1x16x32xf32, #tpu.memory_space<vmem>>, %arg8: memref<1x32x32xf32, #tpu.memory_space<vmem>>) attributes {dimension_semantics = [#tpu.dimension_semantics<parallel>], iteration_bounds = array<i64: 2>, scalar_prefetch = 0 : i64, scratch_operands = 1 : i64, tpu.core_type = #tpu.core_type<tc>, window_params = [{transform_indices = @transform_0, window_bounds = array<i64: 1, 18, 132>}, {pipeline_mode = #tpu.pipeline_mode<synchronous>, transform_indices = @transform_1, window_bounds = array<i64: 132, 32>}, {pipeline_mode = #tpu.pipeline_mode<synchronous>, transform_indices = @transform_2, window_bounds = array<i64: 1, 32>}, {pipeline_mode = #tpu.pipeline_mode<synchronous>, transform_indices = @transform_3, window_bounds = array<i64: 7, 32, 32>}, {pipeline_mode = #tpu.pipeline_mode<synchronous>, transform_indices = @transform_4, window_bounds = array<i64: 132, 32>}, {pipeline_mode = #tpu.pipeline_mode<synchronous>, transform_indices = @transform_5, window_bounds = array<i64: 1, 32>}, {transform_indices = @transform_6, window_bounds = array<i64: 1, 16, 32>}]} {
    %c0 = arith.constant 0 : index
    %c1 = arith.constant 1 : index
    %c0_0 = arith.constant 0 : index
    %0 = vector.load %arg1[%c0, %c1, %c0_0] : memref<1x18x132xf32, #tpu.memory_space<vmem>>, vector<1x16x132xf32>
    %1 = vector.shape_cast %0 : vector<1x16x132xf32> to vector<16x132xf32>
    %2 = arith.truncf %1 : vector<16x132xf32> to vector<16x132xbf16>
    %c0_1 = arith.constant 0 : index
    %c0_2 = arith.constant 0 : index
    %3 = vector.load %arg2[%c0_1, %c0_2] : memref<132x32xbf16, #tpu.memory_space<vmem>>, vector<132x32xbf16>
    %cst = arith.constant dense<0.000000e+00> : vector<16x32xf32>
    %4 = tpu.matmul %2, %3, %cst {dimension_numbers = #tpu.dot_dimension_numbers<[1], [0], [0], [1], [0, 0, 1, 1], [], []>} : vector<16x132xbf16>, vector<132x32xbf16>, vector<16x32xf32> -> vector<16x32xf32>
    %c0_3 = arith.constant 0 : index
    %c0_4 = arith.constant 0 : index
    %5 = vector.load %arg3[%c0_3, %c0_4] : memref<1x32xf32, #tpu.memory_space<vmem>>, vector<1x32xf32>
    %6 = vector.broadcast %5 : vector<1x32xf32> to vector<16x32xf32>
    %7 = arith.addf %4, %6 : vector<16x32xf32>
    %cst_5 = arith.constant 0.000000e+00 : f32
    %8 = vector.broadcast %cst_5 : f32 to vector<1x32x32xf32>
    %c0_6 = arith.constant 0 : index
    %c0_7 = arith.constant 0 : index
    %c0_8 = arith.constant 0 : index
    %9 = vector.load %arg8[%c0_6, %c0_7, %c0_8] : memref<1x32x32xf32, #tpu.memory_space<vmem>>, vector<1x32x32xf32>
    tpu.vector_store %arg8[%c0_6, %c0_7, %c0_8], %8 {strides = array<i32>} : memref<1x32x32xf32, #tpu.memory_space<vmem>>, vector<1x32x32xf32>,
    %c0_9 = arith.constant 0 : index
    %c8 = arith.constant 8 : index
    %c0_10 = arith.constant 0 : index
    %10 = vector.load %arg8[%c0_9, %c8, %c0_10] : memref<1x32x32xf32, #tpu.memory_space<vmem>>, vector<1x16x32xf32>
    %11 = vector.shape_cast %10 : vector<1x16x32xf32> to vector<16x32xf32>
    %12 = vector.shape_cast %7 : vector<16x32xf32> to vector<1x16x32xf32>
    tpu.vector_store %arg8[%c0_9, %c8, %c0_10], %12 {strides = array<i32>} : memref<1x32x32xf32, #tpu.memory_space<vmem>>, vector<1x16x32xf32>,
    %cst_11 = arith.constant 0.000000e+00 : f32
    %13 = vector.broadcast %cst_11 : f32 to vector<16x32xf32>
    %c0_12 = arith.constant 0 : index
    %c5 = arith.constant 5 : index
    %c0_13 = arith.constant 0 : index
    %14 = vector.load %arg8[%c0_12, %c5, %c0_13] : memref<1x32x32xf32, #tpu.memory_space<vmem>>, vector<1x16x32xf32>
    %15 = vector.shape_cast %14 : vector<1x16x32xf32> to vector<16x32xf32>
    %16 = arith.truncf %15 : vector<16x32xf32> to vector<16x32xbf16>
    %c0_14 = arith.constant 0 : index
    %c0_15 = arith.constant 0 : index
    %c0_16 = arith.constant 0 : index
    %17 = vector.load %arg4[%c0_14, %c0_15, %c0_16] : memref<7x32x32xbf16, #tpu.memory_space<vmem>>, vector<1x32x32xbf16>
    %18 = vector.shape_cast %17 : vector<1x32x32xbf16> to vector<32x32xbf16>
    %cst_17 = arith.constant dense<0.000000e+00> : vector<16x32xf32>
    %19 = tpu.matmul %16, %18, %cst_17 {dimension_numbers = #tpu.dot_dimension_numbers<[1], [0], [0], [1], [0, 0, 1, 1], [], []>} : vector<16x32xbf16>, vector<32x32xbf16>, vector<16x32xf32> -> vector<16x32xf32>
    %20 = arith.addf %13, %19 : vector<16x32xf32>
    %c0_18 = arith.constant 0 : index
    %c6 = arith.constant 6 : index
    %c0_19 = arith.constant 0 : index
    %21 = vector.load %arg8[%c0_18, %c6, %c0_19] : memref<1x32x32xf32, #tpu.memory_space<vmem>>, vector<1x16x32xf32>
    %22 = vector.shape_cast %21 : vector<1x16x32xf32> to vector<16x32xf32>
    %23 = arith.truncf %22 : vector<16x32xf32> to vector<16x32xbf16>
    %c1_20 = arith.constant 1 : index
    %c0_21 = arith.constant 0 : index
    %c0_22 = arith.constant 0 : index
    %24 = vector.load %arg4[%c1_20, %c0_21, %c0_22] : memref<7x32x32xbf16, #tpu.memory_space<vmem>>, vector<1x32x32xbf16>
    %25 = vector.shape_cast %24 : vector<1x32x32xbf16> to vector<32x32xbf16>
    %cst_23 = arith.constant dense<0.000000e+00> : vector<16x32xf32>
    %26 = tpu.matmul %23, %25, %cst_23 {dimension_numbers = #tpu.dot_dimension_numbers<[1], [0], [0], [1], [0, 0, 1, 1], [], []>} : vector<16x32xbf16>, vector<32x32xbf16>, vector<16x32xf32> -> vector<16x32xf32>
    %27 = arith.addf %20, %26 : vector<16x32xf32>
    %c0_24 = arith.constant 0 : index
    %c7 = arith.constant 7 : index
    %c0_25 = arith.constant 0 : index
    %28 = vector.load %arg8[%c0_24, %c7, %c0_25] : memref<1x32x32xf32, #tpu.memory_space<vmem>>, vector<1x16x32xf32>
    %29 = vector.shape_cast %28 : vector<1x16x32xf32> to vector<16x32xf32>
    %30 = arith.truncf %29 : vector<16x32xf32> to vector<16x32xbf16>
    %c2 = arith.constant 2 : index
    %c0_26 = arith.constant 0 : index
    %c0_27 = arith.constant 0 : index
    %31 = vector.load %arg4[%c2, %c0_26, %c0_27] : memref<7x32x32xbf16, #tpu.memory_space<vmem>>, vector<1x32x32xbf16>
    %32 = vector.shape_cast %31 : vector<1x32x32xbf16> to vector<32x32xbf16>
    %cst_28 = arith.constant dense<0.000000e+00> : vector<16x32xf32>
    %33 = tpu.matmul %30, %32, %cst_28 {dimension_numbers = #tpu.dot_dimension_numbers<[1], [0], [0], [1], [0, 0, 1, 1], [], []>} : vector<16x32xbf16>, vector<32x32xbf16>, vector<16x32xf32> -> vector<16x32xf32>
    %34 = arith.addf %27, %33 : vector<16x32xf32>
    %c0_29 = arith.constant 0 : index
    %c8_30 = arith.constant 8 : index
    %c0_31 = arith.constant 0 : index
    %35 = vector.load %arg8[%c0_29, %c8_30, %c0_31] : memref<1x32x32xf32, #tpu.memory_space<vmem>>, vector<1x16x32xf32>
    %36 = vector.shape_cast %35 : vector<1x16x32xf32> to vector<16x32xf32>
    %37 = arith.truncf %36 : vector<16x32xf32> to vector<16x32xbf16>
    %c3 = arith.constant 3 : index
    %c0_32 = arith.constant 0 : index
    %c0_33 = arith.constant 0 : index
    %38 = vector.load %arg4[%c3, %c0_32, %c0_33] : memref<7x32x32xbf16, #tpu.memory_space<vmem>>, vector<1x32x32xbf16>
    %39 = vector.shape_cast %38 : vector<1x32x32xbf16> to vector<32x32xbf16>
    %cst_34 = arith.constant dense<0.000000e+00> : vector<16x32xf32>
    %40 = tpu.matmul %37, %39, %cst_34 {dimension_numbers = #tpu.dot_dimension_numbers<[1], [0], [0], [1], [0, 0, 1, 1], [], []>} : vector<16x32xbf16>, vector<32x32xbf16>, vector<16x32xf32> -> vector<16x32xf32>
    %41 = arith.addf %34, %40 : vector<16x32xf32>
    %c0_35 = arith.constant 0 : index
    %c9 = arith.constant 9 : index
    %c0_36 = arith.constant 0 : index
    %42 = vector.load %arg8[%c0_35, %c9, %c0_36] : memref<1x32x32xf32, #tpu.memory_space<vmem>>, vector<1x16x32xf32>
    %43 = vector.shape_cast %42 : vector<1x16x32xf32> to vector<16x32xf32>
    %44 = arith.truncf %43 : vector<16x32xf32> to vector<16x32xbf16>
    %c4 = arith.constant 4 : index
    %c0_37 = arith.constant 0 : index
    %c0_38 = arith.constant 0 : index
    %45 = vector.load %arg4[%c4, %c0_37, %c0_38] : memref<7x32x32xbf16, #tpu.memory_space<vmem>>, vector<1x32x32xbf16>
    %46 = vector.shape_cast %45 : vector<1x32x32xbf16> to vector<32x32xbf16>
    %cst_39 = arith.constant dense<0.000000e+00> : vector<16x32xf32>
    %47 = tpu.matmul %44, %46, %cst_39 {dimension_numbers = #tpu.dot_dimension_numbers<[1], [0], [0], [1], [0, 0, 1, 1], [], []>} : vector<16x32xbf16>, vector<32x32xbf16>, vector<16x32xf32> -> vector<16x32xf32>
    %48 = arith.addf %41, %47 : vector<16x32xf32>
    %c0_40 = arith.constant 0 : index
    %c10 = arith.constant 10 : index
    %c0_41 = arith.constant 0 : index
    %49 = vector.load %arg8[%c0_40, %c10, %c0_41] : memref<1x32x32xf32, #tpu.memory_space<vmem>>, vector<1x16x32xf32>
    %50 = vector.shape_cast %49 : vector<1x16x32xf32> to vector<16x32xf32>
    %51 = arith.truncf %50 : vector<16x32xf32> to vector<16x32xbf16>
    %c5_42 = arith.constant 5 : index
    %c0_43 = arith.constant 0 : index
    %c0_44 = arith.constant 0 : index
    %52 = vector.load %arg4[%c5_42, %c0_43, %c0_44] : memref<7x32x32xbf16, #tpu.memory_space<vmem>>, vector<1x32x32xbf16>
    %53 = vector.shape_cast %52 : vector<1x32x32xbf16> to vector<32x32xbf16>
    %cst_45 = arith.constant dense<0.000000e+00> : vector<16x32xf32>
    %54 = tpu.matmul %51, %53, %cst_45 {dimension_numbers = #tpu.dot_dimension_numbers<[1], [0], [0], [1], [0, 0, 1, 1], [], []>} : vector<16x32xbf16>, vector<32x32xbf16>, vector<16x32xf32> -> vector<16x32xf32>
    %55 = arith.addf %48, %54 : vector<16x32xf32>
    %c0_46 = arith.constant 0 : index
    %c11 = arith.constant 11 : index
    %c0_47 = arith.constant 0 : index
    %56 = vector.load %arg8[%c0_46, %c11, %c0_47] : memref<1x32x32xf32, #tpu.memory_space<vmem>>, vector<1x16x32xf32>
    %57 = vector.shape_cast %56 : vector<1x16x32xf32> to vector<16x32xf32>
    %58 = arith.truncf %57 : vector<16x32xf32> to vector<16x32xbf16>
    %c6_48 = arith.constant 6 : index
    %c0_49 = arith.constant 0 : index
    %c0_50 = arith.constant 0 : index
    %59 = vector.load %arg4[%c6_48, %c0_49, %c0_50] : memref<7x32x32xbf16, #tpu.memory_space<vmem>>, vector<1x32x32xbf16>
    %60 = vector.shape_cast %59 : vector<1x32x32xbf16> to vector<32x32xbf16>
    %cst_51 = arith.constant dense<0.000000e+00> : vector<16x32xf32>
    %61 = tpu.matmul %58, %60, %cst_51 {dimension_numbers = #tpu.dot_dimension_numbers<[1], [0], [0], [1], [0, 0, 1, 1], [], []>} : vector<16x32xbf16>, vector<32x32xbf16>, vector<16x32xf32> -> vector<16x32xf32>
    %62 = arith.addf %55, %61 : vector<16x32xf32>
    %c0_52 = arith.constant 0 : index
    %c0_53 = arith.constant 0 : index
    %c0_54 = arith.constant 0 : index
    %63 = vector.load %arg1[%c0_52, %c0_53, %c0_54] : memref<1x18x132xf32, #tpu.memory_space<vmem>>, vector<1x16x132xf32>
    %64 = vector.shape_cast %63 : vector<1x16x132xf32> to vector<16x132xf32>
    %c0_55 = arith.constant 0 : index
    %c1_56 = arith.constant 1 : index
    %c0_57 = arith.constant 0 : index
    %65 = vector.load %arg1[%c0_55, %c1_56, %c0_57] : memref<1x18x132xf32, #tpu.memory_space<vmem>>, vector<1x16x132xf32>
    %66 = vector.shape_cast %65 : vector<1x16x132xf32> to vector<16x132xf32>
    %67 = arith.maximumf %64, %66 : vector<16x132xf32>
    %c0_58 = arith.constant 0 : index
    %c2_59 = arith.constant 2 : index
    %c0_60 = arith.constant 0 : index
    %68 = vector.load %arg1[%c0_58, %c2_59, %c0_60] : memref<1x18x132xf32, #tpu.memory_space<vmem>>, vector<1x16x132xf32>
    %69 = vector.shape_cast %68 : vector<1x16x132xf32> to vector<16x132xf32>
    %70 = arith.maximumf %67, %69 : vector<16x132xf32>
    %71 = arith.truncf %70 : vector<16x132xf32> to vector<16x132xbf16>
    %c0_61 = arith.constant 0 : index
    %c0_62 = arith.constant 0 : index
    %72 = vector.load %arg5[%c0_61, %c0_62] : memref<132x32xbf16, #tpu.memory_space<vmem>>, vector<132x32xbf16>
    %cst_63 = arith.constant dense<0.000000e+00> : vector<16x32xf32>
    %73 = tpu.matmul %71, %72, %cst_63 {dimension_numbers = #tpu.dot_dimension_numbers<[1], [0], [0], [1], [0, 0, 1, 1], [], []>} : vector<16x132xbf16>, vector<132x32xbf16>, vector<16x32xf32> -> vector<16x32xf32>
    %74 = arith.addf %62, %73 : vector<16x32xf32>
    %c0_64 = arith.constant 0 : index
    %c0_65 = arith.constant 0 : index
    %75 = vector.load %arg6[%c0_64, %c0_65] : memref<1x32xf32, #tpu.memory_space<vmem>>, vector<1x32xf32>
    %76 = vector.broadcast %75 : vector<1x32xf32> to vector<16x32xf32>
    %77 = arith.addf %74, %76 : vector<16x32xf32>
    %78 = math.tanh %77 : vector<16x32xf32>
    %c0_66 = arith.constant 0 : index
    %c0_67 = arith.constant 0 : index
    %c0_68 = arith.constant 0 : index
    %79 = vector.load %arg7[%c0_66, %c0_67, %c0_68] : memref<1x16x32xf32, #tpu.memory_space<vmem>>, vector<1x16x32xf32>
    %80 = vector.shape_cast %79 : vector<1x16x32xf32> to vector<16x32xf32>
    %81 = vector.shape_cast %78 : vector<16x32xf32> to vector<1x16x32xf32>
    tpu.vector_store %arg7[%c0_66, %c0_67, %c0_68], %81 {strides = array<i32>} : memref<1x16x32xf32, #tpu.memory_space<vmem>>, vector<1x16x32xf32>,
    return
  }
  func.func @transform_0(%arg0: i32) -> (i32, i32, i32) {
    %c0_i32 = arith.constant 0 : i32
    %c0_i32_0 = arith.constant 0 : i32
    %c0_i32_1 = arith.constant 0 : i32
    return %arg0, %c0_i32, %c0_i32_0 : i32, i32, i32
  }
  func.func @transform_1(%arg0: i32) -> (i32, i32) {
    %c0_i32 = arith.constant 0 : i32
    %c0_i32_0 = arith.constant 0 : i32
    %c0_i32_1 = arith.constant 0 : i32
    return %c0_i32, %c0_i32_0 : i32, i32
  }
  func.func @transform_2(%arg0: i32) -> (i32, i32) {
    %c0_i32 = arith.constant 0 : i32
    %c0_i32_0 = arith.constant 0 : i32
    %c0_i32_1 = arith.constant 0 : i32
    return %c0_i32, %c0_i32_0 : i32, i32
  }
  func.func @transform_3(%arg0: i32) -> (i32, i32, i32) {
    %c0_i32 = arith.constant 0 : i32
    %c0_i32_0 = arith.constant 0 : i32
    %c0_i32_1 = arith.constant 0 : i32
    %c0_i32_2 = arith.constant 0 : i32
    return %c0_i32, %c0_i32_0, %c0_i32_1 : i32, i32, i32
  }
  func.func @transform_4(%arg0: i32) -> (i32, i32) {
    %c0_i32 = arith.constant 0 : i32
    %c0_i32_0 = arith.constant 0 : i32
    %c0_i32_1 = arith.constant 0 : i32
    return %c0_i32, %c0_i32_0 : i32, i32
  }
  func.func @transform_5(%arg0: i32) -> (i32, i32) {
    %c0_i32 = arith.constant 0 : i32
    %c0_i32_0 = arith.constant 0 : i32
    %c0_i32_1 = arith.constant 0 : i32
    return %c0_i32, %c0_i32_0 : i32, i32
  }
  func.func @transform_6(%arg0: i32) -> (i32, i32, i32) {
    %c0_i32 = arith.constant 0 : i32
    %c0_i32_0 = arith.constant 0 : i32
    %c0_i32_1 = arith.constant 0 : i32
    return %arg0, %c0_i32, %c0_i32_0 : i32, i32, i32
  }
}

module attributes {stable_mosaic.version = 11 : i64} {
  func.func @_pool_ffn_kernel(%arg0: i32, %arg1: memref<1x16x32xf32, #tpu.memory_space<vmem>>, %arg2: memref<1x16x32xf32, #tpu.memory_space<vmem>>, %arg3: memref<4x32x3xbf16, #tpu.memory_space<vmem>>, %arg4: memref<1x3xf32, #tpu.memory_space<vmem>>, %arg5: memref<1x1x3xf32, #tpu.memory_space<vmem>>) attributes {dimension_semantics = [#tpu.dimension_semantics<parallel>], iteration_bounds = array<i64: 2>, scalar_prefetch = 0 : i64, scratch_operands = 0 : i64, tpu.core_type = #tpu.core_type<tc>, window_params = [{transform_indices = @transform_0, window_bounds = array<i64: 1, 16, 32>}, {transform_indices = @transform_1, window_bounds = array<i64: 1, 16, 32>}, {pipeline_mode = #tpu.pipeline_mode<synchronous>, transform_indices = @transform_2, window_bounds = array<i64: 4, 32, 3>}, {pipeline_mode = #tpu.pipeline_mode<synchronous>, transform_indices = @transform_3, window_bounds = array<i64: 1, 3>}, {transform_indices = @transform_4, window_bounds = array<i64: 1, 1, 3>}]} {
    %c0 = arith.constant 0 : index
    %c0_0 = arith.constant 0 : index
    %c0_1 = arith.constant 0 : index
    %0 = vector.load %arg1[%c0, %c0_0, %c0_1] : memref<1x16x32xf32, #tpu.memory_space<vmem>>, vector<1x16x32xf32>
    %1 = vector.shape_cast %0 : vector<1x16x32xf32> to vector<16x32xf32>
    %c0_2 = arith.constant 0 : index
    %c0_3 = arith.constant 0 : index
    %c0_4 = arith.constant 0 : index
    %2 = vector.load %arg2[%c0_2, %c0_3, %c0_4] : memref<1x16x32xf32, #tpu.memory_space<vmem>>, vector<1x16x32xf32>
    %3 = vector.shape_cast %2 : vector<1x16x32xf32> to vector<16x32xf32>
    %cst = arith.constant dense<0.000000e+00> : vector<32xf32>
    %4 = vector.multi_reduction <add>, %1, %cst [0] : vector<16x32xf32> to vector<32xf32>
    %5 = vector.shape_cast %4 : vector<32xf32> to vector<1x32xf32>
    %cst_5 = arith.constant 1.600000e+01 : f32
    %6 = vector.broadcast %cst_5 : f32 to vector<1x32xf32>
    %7 = arith.divf %5, %6 : vector<1x32xf32>
    %cst_6 = arith.constant dense<0xFF800000> : vector<32xf32>
    %8 = vector.multi_reduction <maximumf>, %1, %cst_6 [0] : vector<16x32xf32> to vector<32xf32>
    %9 = vector.shape_cast %8 : vector<32xf32> to vector<1x32xf32>
    %cst_7 = arith.constant dense<0.000000e+00> : vector<32xf32>
    %10 = vector.multi_reduction <add>, %3, %cst_7 [0] : vector<16x32xf32> to vector<32xf32>
    %11 = vector.shape_cast %10 : vector<32xf32> to vector<1x32xf32>
    %cst_8 = arith.constant 1.600000e+01 : f32
    %12 = vector.broadcast %cst_8 : f32 to vector<1x32xf32>
    %13 = arith.divf %11, %12 : vector<1x32xf32>
    %cst_9 = arith.constant dense<0xFF800000> : vector<32xf32>
    %14 = vector.multi_reduction <maximumf>, %3, %cst_9 [0] : vector<16x32xf32> to vector<32xf32>
    %15 = vector.shape_cast %14 : vector<32xf32> to vector<1x32xf32>
    %16 = arith.truncf %7 : vector<1x32xf32> to vector<1x32xbf16>
    %c0_10 = arith.constant 0 : index
    %c0_11 = arith.constant 0 : index
    %c0_12 = arith.constant 0 : index
    %17 = vector.load %arg3[%c0_10, %c0_11, %c0_12] : memref<4x32x3xbf16, #tpu.memory_space<vmem>>, vector<1x32x3xbf16>
    %18 = vector.shape_cast %17 : vector<1x32x3xbf16> to vector<32x3xbf16>
    %cst_13 = arith.constant dense<0.000000e+00> : vector<1x3xf32>
    %19 = tpu.matmul %16, %18, %cst_13 {dimension_numbers = #tpu.dot_dimension_numbers<[1], [0], [0], [1], [0, 0, 1, 1], [], []>} : vector<1x32xbf16>, vector<32x3xbf16>, vector<1x3xf32> -> vector<1x3xf32>
    %20 = arith.truncf %9 : vector<1x32xf32> to vector<1x32xbf16>
    %c1 = arith.constant 1 : index
    %c0_14 = arith.constant 0 : index
    %c0_15 = arith.constant 0 : index
    %21 = vector.load %arg3[%c1, %c0_14, %c0_15] : memref<4x32x3xbf16, #tpu.memory_space<vmem>>, vector<1x32x3xbf16>
    %22 = vector.shape_cast %21 : vector<1x32x3xbf16> to vector<32x3xbf16>
    %cst_16 = arith.constant dense<0.000000e+00> : vector<1x3xf32>
    %23 = tpu.matmul %20, %22, %cst_16 {dimension_numbers = #tpu.dot_dimension_numbers<[1], [0], [0], [1], [0, 0, 1, 1], [], []>} : vector<1x32xbf16>, vector<32x3xbf16>, vector<1x3xf32> -> vector<1x3xf32>
    %24 = arith.addf %19, %23 : vector<1x3xf32>
    %25 = arith.truncf %13 : vector<1x32xf32> to vector<1x32xbf16>
    %c2 = arith.constant 2 : index
    %c0_17 = arith.constant 0 : index
    %c0_18 = arith.constant 0 : index
    %26 = vector.load %arg3[%c2, %c0_17, %c0_18] : memref<4x32x3xbf16, #tpu.memory_space<vmem>>, vector<1x32x3xbf16>
    %27 = vector.shape_cast %26 : vector<1x32x3xbf16> to vector<32x3xbf16>
    %cst_19 = arith.constant dense<0.000000e+00> : vector<1x3xf32>
    %28 = tpu.matmul %25, %27, %cst_19 {dimension_numbers = #tpu.dot_dimension_numbers<[1], [0], [0], [1], [0, 0, 1, 1], [], []>} : vector<1x32xbf16>, vector<32x3xbf16>, vector<1x3xf32> -> vector<1x3xf32>
    %29 = arith.addf %24, %28 : vector<1x3xf32>
    %30 = arith.truncf %15 : vector<1x32xf32> to vector<1x32xbf16>
    %c3 = arith.constant 3 : index
    %c0_20 = arith.constant 0 : index
    %c0_21 = arith.constant 0 : index
    %31 = vector.load %arg3[%c3, %c0_20, %c0_21] : memref<4x32x3xbf16, #tpu.memory_space<vmem>>, vector<1x32x3xbf16>
    %32 = vector.shape_cast %31 : vector<1x32x3xbf16> to vector<32x3xbf16>
    %cst_22 = arith.constant dense<0.000000e+00> : vector<1x3xf32>
    %33 = tpu.matmul %30, %32, %cst_22 {dimension_numbers = #tpu.dot_dimension_numbers<[1], [0], [0], [1], [0, 0, 1, 1], [], []>} : vector<1x32xbf16>, vector<32x3xbf16>, vector<1x3xf32> -> vector<1x3xf32>
    %34 = arith.addf %29, %33 : vector<1x3xf32>
    %c0_23 = arith.constant 0 : index
    %c0_24 = arith.constant 0 : index
    %35 = vector.load %arg4[%c0_23, %c0_24] : memref<1x3xf32, #tpu.memory_space<vmem>>, vector<1x3xf32>
    %36 = arith.addf %34, %35 : vector<1x3xf32>
    %c0_25 = arith.constant 0 : index
    %c0_26 = arith.constant 0 : index
    %c0_27 = arith.constant 0 : index
    %37 = vector.load %arg5[%c0_25, %c0_26, %c0_27] : memref<1x1x3xf32, #tpu.memory_space<vmem>>, vector<1x1x3xf32>
    %38 = vector.shape_cast %37 : vector<1x1x3xf32> to vector<1x3xf32>
    %39 = vector.shape_cast %36 : vector<1x3xf32> to vector<1x1x3xf32>
    tpu.vector_store %arg5[%c0_25, %c0_26, %c0_27], %39 {strides = array<i32>} : memref<1x1x3xf32, #tpu.memory_space<vmem>>, vector<1x1x3xf32>,
    return
  }
  func.func @transform_0(%arg0: i32) -> (i32, i32, i32) {
    %c0_i32 = arith.constant 0 : i32
    %c0_i32_0 = arith.constant 0 : i32
    %c0_i32_1 = arith.constant 0 : i32
    return %arg0, %c0_i32, %c0_i32_0 : i32, i32, i32
  }
  func.func @transform_1(%arg0: i32) -> (i32, i32, i32) {
    %c0_i32 = arith.constant 0 : i32
    %c0_i32_0 = arith.constant 0 : i32
    %c0_i32_1 = arith.constant 0 : i32
    return %arg0, %c0_i32, %c0_i32_0 : i32, i32, i32
  }
  func.func @transform_2(%arg0: i32) -> (i32, i32, i32) {
    %c0_i32 = arith.constant 0 : i32
    %c0_i32_0 = arith.constant 0 : i32
    %c0_i32_1 = arith.constant 0 : i32
    %c0_i32_2 = arith.constant 0 : i32
    return %c0_i32, %c0_i32_0, %c0_i32_1 : i32, i32, i32
  }
  func.func @transform_3(%arg0: i32) -> (i32, i32) {
    %c0_i32 = arith.constant 0 : i32
    %c0_i32_0 = arith.constant 0 : i32
    %c0_i32_1 = arith.constant 0 : i32
    return %c0_i32, %c0_i32_0 : i32, i32
  }
  func.func @transform_4(%arg0: i32) -> (i32, i32, i32) {
    %c0_i32 = arith.constant 0 : i32
    %c0_i32_0 = arith.constant 0 : i32
    %c0_i32_1 = arith.constant 0 : i32
    return %arg0, %c0_i32, %c0_i32_0 : i32, i32, i32
  }
}

</mosaic_0001>

<llo_original>
// kernel: inception_gru_forward.7
$region0: #{inception_gru_forward.7}
  #allocation0 [shape = 'u32[]', space=smem, size = 0x4, offset = 0x4, fixed_abs, tag = 'smem constant byte address 0x4 - core index']
  #allocation1 [shape = 'u32[144,128]{1,0:T(1,128)}', space=vmem, size = 0x12000, scoped, tag = 'internal scratch']
  #allocation2 [shape = 'f32[1,32,32]{2,1,0:T(8,128)}', space=vmem, size = 0x4000, scoped, tag = 'scratch operand']
  %s0 = inlined_call_operand.vmem [shape: f32[2,18,4], index: 0, kind: input, shape index: {}]
  %s1 = inlined_call_operand.vmem [shape: bf16[4,32], index: 1, kind: input, shape index: {}]
  %s2 = inlined_call_operand.vmem [shape: f32[1,32], index: 2, kind: input, shape index: {}]
  %s3 = inlined_call_operand.vmem [shape: bf16[7,32,128], index: 3, kind: input, shape index: {}]
  %s4 = inlined_call_operand.vmem [shape: bf16[4,128], index: 4, kind: input, shape index: {}]
  %s5 = inlined_call_operand.vmem [shape: f32[1,128], index: 5, kind: input, shape index: {}]
  %s6 = inlined_call_operand.vmem [shape: f32[2,16,128], index: 6, kind: output, shape index: {}]
  %s7 = sld [smem:[#allocation0]]
  $region57: #{inception_gru_forward.7} parent=0
    _
  %s9 = ssub.s32 1, %s7
  %s10 = scalar_select 0, %s9, %s7
  loop: start=0, step=1, limit=4
  $region2: #{inception_gru_forward.7} parent=0 // loop_pre_header
    _
  $region3: #{inception_gru_forward.7} parent=0 // loop_header
    %s12 = sphi 0, %s16
    %p13 = scmp.ge.s32.totalorder %s12, 4
    %s22 = sphi 0, %s24
    %s25 = sphi 0, %s22
    %s26 = sphi 0, %s25
    %s42 = sphi 0, %s26
    %s46 = sphi 0, %s46
    %s48 = sphi 0, %s46
    %s49 = sphi 0, %s48
    %s63 = sphi 0, %s49
    %s67 = sphi 0, %s67
    %s69 = sphi 0, %s67
    %s70 = sphi 0, %s69
    %s84 = sphi 0, %s70
    %s88 = sphi 0, %s88
    %s90 = sphi 0, %s88
    %s91 = sphi 0, %s90
    %s105 = sphi 0, %s91
    %s109 = sphi 0, %s109
    %s111 = sphi 0, %s109
    %s112 = sphi 0, %s111
    %s126 = sphi 0, %s112
    %s130 = sphi 0, %s130
    %s132 = sphi 0, %s130
    %s133 = sphi 0, %s132
    %s147 = sphi 0, %s133
    %s153 = sphi 0, %s155
    %s156 = sphi 0, %s153
    %s157 = sphi 0, %s156
    %s173 = sphi 0, %s157
  $region4: #{inception_gru_forward.7} parent=0 // loop_header_branch
    %15 = sbr.rel (%p13) target = $region8
  $region5: #{inception_gru_forward.7} parent=0 // loop_body
    %s17 = ssub.s32 %s12, 1
    %s18 = ssub.s32 %s12, 2
    %s19 = sadd.s32 %s12, 1
    %s20 = ssub.s32 %s12, %s19
    %p21 = scmp.eq.s32.totalorder %s20, 0
    %s23 = sadd.s32 %s22, 1
    %s24 = scalar_select %p21, %s22, %s23
    %p27 = pneg %p21
    %p28 = scmp.eq.s32.totalorder %s12, 1
    %p29 = por %p27, %p28
    %p30 = scmp.ne.s32.totalorder %s22, %s25
    %p31 = scmp.eq.s32.totalorder %s12, 0
    %p32 = por %p30, %p31
    %p33 = scmp.ne.s32.totalorder %s22, %s25
    %p34 = scmp.eq.s32.totalorder %s17, 1
    %p35 = por %p33, %p34
    %p36 = scmp.ne.s32.totalorder %s25, %s26
    %p37 = scmp.eq.s32.totalorder %s17, 0
    %p38 = por %p36, %p37
    %p39 = scmp.ne.s32.totalorder %s25, %s26
    %p40 = scmp.eq.s32.totalorder %s18, 1
    %p41 = por %p39, %p40
    %p43 = scmp.ne.s32.totalorder %s26, %s42
    %p44 = scmp.eq.s32.totalorder %s18, 0
    %p45 = por %p43, %p44
    %s47 = sadd.s32 %s46, 1
    %p50 = scmp.eq.s32.totalorder %s12, 1
    %p51 = scmp.ne.s32.totalorder %s46, %s48
    %p52 = scmp.eq.s32.totalorder %s12, 0
    %p53 = por %p51, %p52
    %p54 = scmp.ne.s32.totalorder %s46, %s48
    %p55 = scmp.eq.s32.totalorder %s17, 1
    %p56 = por %p54, %p55
    %p57 = scmp.ne.s32.totalorder %s48, %s49
    %p58 = scmp.eq.s32.totalorder %s17, 0
    %p59 = por %p57, %p58
    %p60 = scmp.ne.s32.totalorder %s48, %s49
    %p61 = scmp.eq.s32.totalorder %s18, 1
    %p62 = por %p60, %p61
    %p64 = scmp.ne.s32.totalorder %s49, %s63
    %p65 = scmp.eq.s32.totalorder %s18, 0
    %p66 = por %p64, %p65
    %s68 = sadd.s32 %s67, 1
    %p71 = scmp.eq.s32.totalorder %s12, 1
    %p72 = scmp.ne.s32.totalorder %s67, %s69
    %p73 = scmp.eq.s32.totalorder %s12, 0
    %p74 = por %p72, %p73
    %p75 = scmp.ne.s32.totalorder %s67, %s69
    %p76 = scmp.eq.s32.totalorder %s17, 1
    %p77 = por %p75, %p76
    %p78 = scmp.ne.s32.totalorder %s69, %s70
    %p79 = scmp.eq.s32.totalorder %s17, 0
    %p80 = por %p78, %p79
    %p81 = scmp.ne.s32.totalorder %s69, %s70
    %p82 = scmp.eq.s32.totalorder %s18, 1
    %p83 = por %p81, %p82
    %p85 = scmp.ne.s32.totalorder %s70, %s84
    %p86 = scmp.eq.s32.totalorder %s18, 0
    %p87 = por %p85, %p86
    %s89 = sadd.s32 %s88, 1
    %p92 = scmp.eq.s32.totalorder %s12, 1
    %p93 = scmp.ne.s32.totalorder %s88, %s90
    %p94 = scmp.eq.s32.totalorder %s12, 0
    %p95 = por %p93, %p94
    %p96 = scmp.ne.s32.totalorder %s88, %s90
    %p97 = scmp.eq.s32.totalorder %s17, 1
    %p98 = por %p96, %p97
    %p99 = scmp.ne.s32.totalorder %s90, %s91
    %p100 = scmp.eq.s32.totalorder %s17, 0
    %p101 = por %p99, %p100
    %p102 = scmp.ne.s32.totalorder %s90, %s91
    %p103 = scmp.eq.s32.totalorder %s18, 1
    %p104 = por %p102, %p103
    %p106 = scmp.ne.s32.totalorder %s91, %s105
    %p107 = scmp.eq.s32.totalorder %s18, 0
    %p108 = por %p106, %p107
    %s110 = sadd.s32 %s109, 1
    %p113 = scmp.eq.s32.totalorder %s12, 1
    %p114 = scmp.ne.s32.totalorder %s109, %s111
    %p115 = scmp.eq.s32.totalorder %s12, 0
    %p116 = por %p114, %p115
    %p117 = scmp.ne.s32.totalorder %s109, %s111
    %p118 = scmp.eq.s32.totalorder %s17, 1
    %p119 = por %p117, %p118
    %p120 = scmp.ne.s32.totalorder %s111, %s112
    %p121 = scmp.eq.s32.totalorder %s17, 0
    %p122 = por %p120, %p121
    %p123 = scmp.ne.s32.totalorder %s111, %s112
    %p124 = scmp.eq.s32.totalorder %s18, 1
    %p125 = por %p123, %p124
    %p127 = scmp.ne.s32.totalorder %s112, %s126
    %p128 = scmp.eq.s32.totalorder %s18, 0
    %p129 = por %p127, %p128
    %s131 = sadd.s32 %s130, 1
    %p134 = scmp.eq.s32.totalorder %s12, 1
    %p135 = scmp.ne.s32.totalorder %s130, %s132
    %p136 = scmp.eq.s32.totalorder %s12, 0
    %p137 = por %p135, %p136
    %p138 = scmp.ne.s32.totalorder %s130, %s132
    %p139 = scmp.eq.s32.totalorder %s17, 1
    %p140 = por %p138, %p139
    %p141 = scmp.ne.s32.totalorder %s132, %s133
    %p142 = scmp.eq.s32.totalorder %s17, 0
    %p143 = por %p141, %p142
    %p144 = scmp.ne.s32.totalorder %s132, %s133
    %p145 = scmp.eq.s32.totalorder %s18, 1
    %p146 = por %p144, %p145
    %p148 = scmp.ne.s32.totalorder %s133, %s147
    %p149 = scmp.eq.s32.totalorder %s18, 0
    %p150 = por %p148, %p149
    %s151 = ssub.s32 %s12, %s19
    %p152 = scmp.eq.s32.totalorder %s151, 0
    %s154 = sadd.s32 %s153, 1
    %s155 = scalar_select %p152, %s153, %s154
    %p158 = pneg %p152
    %p159 = scmp.eq.s32.totalorder %s12, 1
    %p160 = por %p158, %p159
    %p161 = scmp.ne.s32.totalorder %s153, %s156
    %p162 = scmp.eq.s32.totalorder %s12, 0
    %p163 = por %p161, %p162
    %p164 = scmp.ne.s32.totalorder %s153, %s156
    %p165 = scmp.eq.s32.totalorder %s17, 1
    %p166 = por %p164, %p165
    %p167 = scmp.ne.s32.totalorder %s156, %s157
    %p168 = scmp.eq.s32.totalorder %s17, 0
    %p169 = por %p167, %p168
    %p170 = scmp.ne.s32.totalorder %s156, %s157
    %p171 = scmp.eq.s32.totalorder %s18, 1
    %p172 = por %p170, %p171
    %p174 = scmp.ne.s32.totalorder %s157, %s173
    %p175 = scmp.eq.s32.totalorder %s18, 0
    %p176 = por %p174, %p175
    %p177 = scmp.le.s32.totalorder 1, %s12
    %p178 = scmp.lt.s32.totalorder %s12, 3
    %p179 = pnand %p177, %p178
    %p180 = pneg %p179
    // Predicated region
    $region9: #{inception_gru_forward.7} parent=5 // pred_check
      _
    $region10: #{inception_gru_forward.7} parent=5 // pred_check_branch
      %182 = sbr.rel (%p179) target = $region12
    $region11: #{inception_gru_forward.7} parent=5 // pred_region
      %s183 = ssub.s32 %s12, 1
      // Predicated region
      $region13: #{inception_gru_forward.7} parent=11 // pred_check
        %p184 = pneg %p59
      $region14: #{inception_gru_forward.7} parent=11 // pred_check_branch
        %186 = sbr.rel (%p184) target = $region16
      $region15: #{inception_gru_forward.7} parent=11 // pred_region
        _
      $region16: #{inception_gru_forward.7} parent=11 // pred_fallthru
        _
      // Predicated region
      $region17: #{inception_gru_forward.7} parent=11 // pred_check
        %p187 = pneg %p80
      $region18: #{inception_gru_forward.7} parent=11 // pred_check_branch
        %189 = sbr.rel (%p187) target = $region20
      $region19: #{inception_gru_forward.7} parent=11 // pred_region
        _
      $region20: #{inception_gru_forward.7} parent=11 // pred_fallthru
        _
      // Predicated region
      $region21: #{inception_gru_forward.7} parent=11 // pred_check
        %p190 = pneg %p101
      $region22: #{inception_gru_forward.7} parent=11 // pred_check_branch
        %192 = sbr.rel (%p190) target = $region24
      $region23: #{inception_gru_forward.7} parent=11 // pred_region
        _
      $region24: #{inception_gru_forward.7} parent=11 // pred_fallthru
        _
      // Predicated region
      $region25: #{inception_gru_forward.7} parent=11 // pred_check
        %p193 = pneg %p122
      $region26: #{inception_gru_forward.7} parent=11 // pred_check_branch
        %195 = sbr.rel (%p193) target = $region28
      $region27: #{inception_gru_forward.7} parent=11 // pred_region
        _
      $region28: #{inception_gru_forward.7} parent=11 // pred_fallthru
        _
      // Predicated region
      $region29: #{inception_gru_forward.7} parent=11 // pred_check
        %p196 = pneg %p143
      $region30: #{inception_gru_forward.7} parent=11 // pred_check_branch
        %198 = sbr.rel (%p196) target = $region32
      $region31: #{inception_gru_forward.7} parent=11 // pred_region
        _
      $region32: #{inception_gru_forward.7} parent=11 // pred_fallthru
        _
    $region12: #{inception_gru_forward.7} parent=5 // pred_fallthru
      _
    %p199 = scmp.lt.s32.totalorder %s12, 2
    // Predicated region
    $region33: #{inception_gru_forward.7} parent=5 // pred_check
      %p200 = pneg %p199
    $region34: #{inception_gru_forward.7} parent=5 // pred_check_branch
      %202 = sbr.rel (%p200) target = $region36
    $region35: #{inception_gru_forward.7} parent=5 // pred_region
      // Predicated region
      $region37: #{inception_gru_forward.7} parent=35 // pred_check
        %p203 = pneg %p32
      $region38: #{inception_gru_forward.7} parent=35 // pred_check_branch
        %205 = sbr.rel (%p203) target = $region40
      $region39: #{inception_gru_forward.7} parent=35 // pred_region
        %p206 = scmp.lt.s32.totalorder %s12, 1
        %s207 = scalar_select %p206, %s12, 1
        %s208 = smul.addr %s207, 3
        %s209 = smul.addr %s208, 8
        %s210 = scalar_lea.vmem %s0, %s209
      $region40: #{inception_gru_forward.7} parent=35 // pred_fallthru
        _
    $region36: #{inception_gru_forward.7} parent=5 // pred_fallthru
      _
    %p211 = scmp.le.s32.totalorder 1, %s12
    %p212 = scmp.lt.s32.totalorder %s12, 3
    %p213 = pnand %p211, %p212
    %p214 = pneg %p213
    // Predicated region
    $region41: #{inception_gru_forward.7} parent=5 // pred_check
      _
    $region42: #{inception_gru_forward.7} parent=5 // pred_check_branch
      %216 = sbr.rel (%p213) target = $region44
    $region43: #{inception_gru_forward.7} parent=5 // pred_region
      %s217 = ssub.s32 %s12, 1
      %p218 = scmp.lt.s32.totalorder %s17, 1
      %s219 = scalar_select %p218, %s17, 1
      %s220 = smul.addr %s219, 3
      %s221 = smul.addr %s220, 8
      %s222 = scalar_lea.vmem %s0, %s221
      %p223 = pneg %p38
      %p224 = pneg %p35
      %p225 = pneg %p59
      %p226 = pneg %p56
      %p227 = pneg %p80
      %p228 = pneg %p77
      %p229 = pneg %p101
      %p230 = pneg %p98
      %p231 = pneg %p122
      %p232 = pneg %p119
      %p233 = pneg %p143
      %p234 = pneg %p140
      %p235 = pneg %p169
      %p236 = pneg %p166
      %p237 = scmp.lt.s32.totalorder %s17, 1
      %s238 = scalar_select %p237, %s17, 1
      %s239 = smul.addr %s238, 2
      %s240 = smul.addr %s239, 8
      %s241 = scalar_lea.vmem %s6, %s240
      %p242 = scmp.lt.s32.totalorder %s17, 1
      %s243 = scalar_select %p242, %s17, 1
      %s244 = smul.addr %s243, 3
      %s245 = smul.addr %s244, 8
      %s246 = scalar_lea.vmem %s0, %s245
      %p247 = scmp.lt.s32.totalorder %s17, 1
      %s248 = scalar_select %p247, %s17, 1
      %s249 = smul.addr %s248, 2
      %s250 = smul.addr %s249, 8
      %s251 = scalar_lea.vmem %s6, %s250
      %v253 = vld [vmem:[%s246 + $0x1] sm:$0xff]
      %v254 = vld [vmem:[%s246 + $0x9] sm:$0xff]
      %v255 = vpack.c.bf16 %v254, %v253
      %v256 = vld [vmem:[%s1] sm:$0x3]
      %v257 = vld [vmem:[%s2] sm:$0x1]
      %v259 = vlaneseq
      %v260 = vshrl.u32 %v259, 7
      %v261 = vsub.s32 0, %v260
      %v262 = vrot.slane %v257, %v261
      %vm264 = vcmask 31744
      %v266 = vsel %vm264, %v255, 0
      %vm268 = vcmask 1041408
      %v270 = vsel %vm268, %v256, 0
      %272 = vmatprep.subr.bf16.mxu0 0
      %273 = vmatpush1.bf16.msra.mxu0 %v270
      %274 = vmatprep.subr.bf16.mxu0 0
      %275 = vmatpush1.bf16.msra.mxu0 0
      %276 = vmatprep.subr.bf16.mxu0 0
      %277 = vmatpush1.bf16.msra.mxu0 0
      %278 = vmatprep.subr.bf16.mxu0 0
      %279 = vmatpush1.bf16.msra.mxu0 0
      %280 = vmatprep.subr.bf16.mxu0 0
      %281 = vmatpush1.bf16.msra.mxu0 0
      %282 = vmatprep.subr.bf16.mxu0 0
      %283 = vmatpush1.bf16.msra.mxu0 0
      %284 = vmatprep.subr.bf16.mxu0 0
      %285 = vmatpush1.bf16.msra.mxu0 0
      %286 = vmatprep.subr.bf16.mxu0 0
      %287 = vmatpush1.bf16.msra.mxu0 0
      %288 = vmatprep.subr.bf16.mxu0 0
      %289 = vmatpush1.bf16.msra.mxu0 0
      %290 = vmatprep.subr.bf16.mxu0 0
      %291 = vmatpush1.bf16.msra.mxu0 0
      %292 = vmatprep.subr.bf16.mxu0 0
      %293 = vmatpush1.bf16.msra.mxu0 0
      %294 = vmatprep.subr.bf16.mxu0 0
      %295 = vmatpush1.bf16.msra.mxu0 0
      %296 = vmatprep.subr.bf16.mxu0 0
      %297 = vmatpush1.bf16.msra.mxu0 0
      %298 = vmatprep.subr.bf16.mxu0 0
      %299 = vmatpush1.bf16.msra.mxu0 0
      %300 = vmatprep.subr.bf16.mxu0 0
      %301 = vmatpush1.bf16.msra.mxu0 0
      %302 = vmatprep.subr.bf16.mxu0 0
      %303 = vmatpush1.bf16.msra.mxu0 0
      %304 = vmatprep.mubr.bf16.mxu0 0
      %305 = vmatmul.mubr.bf16.gmra.mrb[0].mxu0 %v266
      %v306 = vpop.f32.mrb[0].mxu0
      %v307 = vadd.f32 %v262, %v306
      %v308 = vpop.f32.mrb[0].mxu0
      %v309 = vpop.f32.mrb[0].mxu0
      %v310 = vadd.f32 %v262, %v309
      %v311 = vpop.f32.mrb[0].mxu0
      %312 = vdwg.mxu0
      %vm313 = vcmask 261120
      %314 = vst.msk [vmem:[#allocation2] sm:$0xff] %vm313, 0.0
      %315 = vst.msk [vmem:[#allocation2 + $0x8] sm:$0xff] %vm313, 0.0
      %316 = vst.msk [vmem:[#allocation2 + $0x10] sm:$0xff] %vm313, 0.0
      %317 = vst.msk [vmem:[#allocation2 + $0x18] sm:$0xff] %vm313, 0.0
      %318 = vst.msk [vmem:[#allocation2 + $0x8] sm:$0xff] %vm313, %v307
      %319 = vst.msk [vmem:[#allocation2 + $0x10] sm:$0xff] %vm313, %v310
      %v320 = vld [vmem:[#allocation2 + $0x5] sm:$0xff]
      %v321 = vld [vmem:[#allocation2 + $0xd] sm:$0xff]
      %v322 = vpack.c.bf16 %v321, %v320
      %v323 = vld [vmem:[%s3] sm:$0xf]
      %v324 = vld [vmem:[%s3 + $0x4] sm:$0xf]
      %v325 = vld [vmem:[%s3 + $0x8] sm:$0xf]
      %v326 = vld [vmem:[%s3 + $0xc] sm:$0xf]
      %v327 = vld [vmem:[#allocation2 + $0x6] sm:$0xff]
      %v328 = vld [vmem:[#allocation2 + $0xe] sm:$0xff]
      %v329 = vpack.c.bf16 %v328, %v327
      %s330 = scalar_lea.vmem %s3, 16
      %v331 = vld [vmem:[%s330] sm:$0xf]
      %v332 = vld [vmem:[%s330 + $0x4] sm:$0xf]
      %v333 = vld [vmem:[%s330 + $0x8] sm:$0xf]
      %v334 = vld [vmem:[%s330 + $0xc] sm:$0xf]
      %v339 = vunpack.c.l.b16 %v331
      %v340 = vunpack.c.l.b16 %v332
      %v341 = vunpack.c.l.b16 %v333
      %v342 = vunpack.c.l.b16 %v334
      %v343 = vpack.c.b16 %v340, %v339
      %v344 = vpack.c.b16 %v342, %v341
      %v348 = vsel %vm313, %v329, 0
      %350 = vmatprep.subr.bf16.mxu0 0
      %351 = vmatpush1.bf16.msra.mxu0 %v343
      %352 = vmatprep.subr.bf16.mxu0 0
      %353 = vmatpush1.bf16.msra.mxu0 %v344
      %354 = vmatprep.subr.bf16.mxu0 0
      %355 = vmatpush1.bf16.msra.mxu0 0
      %356 = vmatprep.subr.bf16.mxu0 0
      %357 = vmatpush1.bf16.msra.mxu0 0
      %358 = vmatprep.subr.bf16.mxu0 0
      %359 = vmatpush1.bf16.msra.mxu0 0
      %360 = vmatprep.subr.bf16.mxu0 0
      %361 = vmatpush1.bf16.msra.mxu0 0
      %362 = vmatprep.subr.bf16.mxu0 0
      %363 = vmatpush1.bf16.msra.mxu0 0
      %364 = vmatprep.subr.bf16.mxu0 0
      %365 = vmatpush1.bf16.msra.mxu0 0
      %366 = vmatprep.subr.bf16.mxu0 0
      %367 = vmatpush1.bf16.msra.mxu0 0
      %368 = vmatprep.subr.bf16.mxu0 0
      %369 = vmatpush1.bf16.msra.mxu0 0
      %370 = vmatprep.subr.bf16.mxu0 0
      %371 = vmatpush1.bf16.msra.mxu0 0
      %372 = vmatprep.subr.bf16.mxu0 0
      %373 = vmatpush1.bf16.msra.mxu0 0
      %374 = vmatprep.subr.bf16.mxu0 0
      %375 = vmatpush1.bf16.msra.mxu0 0
      %376 = vmatprep.subr.bf16.mxu0 0
      %377 = vmatpush1.bf16.msra.mxu0 0
      %378 = vmatprep.subr.bf16.mxu0 0
      %379 = vmatpush1.bf16.msra.mxu0 0
      %380 = vmatprep.subr.bf16.mxu0 0
      %381 = vmatpush1.bf16.msra.mxu0 0
      %382 = vmatprep.mubr.bf16.mxu0 0
      %383 = vmatmul.mubr.bf16.gmra.mrb[0].mxu0 %v348
      %v384 = vpop.f32.mrb[0].mxu0
      %v385 = vadd.f32 0.0, %v384
      %v386 = vpop.f32.mrb[0].mxu0
      %v387 = vpop.f32.mrb[0].mxu0
      %v388 = vadd.f32 0.0, %v387
      %v389 = vpop.f32.mrb[0].mxu0
      %390 = vdwg.mxu0
      %v395 = vunpack.c.l.b16 %v323
      %v396 = vunpack.c.l.b16 %v324
      %v397 = vunpack.c.l.b16 %v325
      %v398 = vunpack.c.l.b16 %v326
      %v399 = vpack.c.b16 %v396, %v395
      %v400 = vpack.c.b16 %v398, %v397
      %v404 = vsel %vm313, %v322, 0
      %406 = vmatprep.subr.bf16.mxu0 0
      %407 = vmatpush1.bf16.msra.mxu0 %v399
      %408 = vmatprep.subr.bf16.mxu0 0
      %409 = vmatpush1.bf16.msra.mxu0 %v400
      %410 = vmatprep.subr.bf16.mxu0 0
      %411 = vmatpush1.bf16.msra.mxu0 0
      %412 = vmatprep.subr.bf16.mxu0 0
      %413 = vmatpush1.bf16.msra.mxu0 0
      %414 = vmatprep.subr.bf16.mxu0 0
      %415 = vmatpush1.bf16.msra.mxu0 0
      %416 = vmatprep.subr.bf16.mxu0 0
      %417 = vmatpush1.bf16.msra.mxu0 0
      %418 = vmatprep.subr.bf16.mxu0 0
      %419 = vmatpush1.bf16.msra.mxu0 0
      %420 = vmatprep.subr.bf16.mxu0 0
      %421 = vmatpush1.bf16.msra.mxu0 0
      %422 = vmatprep.subr.bf16.mxu0 0
      %423 = vmatpush1.bf16.msra.mxu0 0
      %424 = vmatprep.subr.bf16.mxu0 0
      %425 = vmatpush1.bf16.msra.mxu0 0
      %426 = vmatprep.subr.bf16.mxu0 0
      %427 = vmatpush1.bf16.msra.mxu0 0
      %428 = vmatprep.subr.bf16.mxu0 0
      %429 = vmatpush1.bf16.msra.mxu0 0
      %430 = vmatprep.subr.bf16.mxu0 0
      %431 = vmatpush1.bf16.msra.mxu0 0
      %432 = vmatprep.subr.bf16.mxu0 0
      %433 = vmatpush1.bf16.msra.mxu0 0
      %434 = vmatprep.subr.bf16.mxu0 0
      %435 = vmatpush1.bf16.msra.mxu0 0
      %436 = vmatprep.subr.bf16.mxu0 0
      %437 = vmatpush1.bf16.msra.mxu0 0
      %438 = vmatprep.mubr.bf16.mxu0 0
      %439 = vmatmul.mubr.bf16.gmra.mrb[0].mxu0 %v404
      %v440 = vpop.f32.mrb[0].mxu0
      %v441 = vadd.f32 %v385, %v440
      %v442 = vpop.f32.mrb[0].mxu0
      %v443 = vpop.f32.mrb[0].mxu0
      %v444 = vadd.f32 %v388, %v443
      %v445 = vpop.f32.mrb[0].mxu0
      %446 = vdwg.mxu0
      %v447 = vld [vmem:[#allocation2 + $0x7] sm:$0xff]
      %v448 = vld [vmem:[#allocation2 + $0xf] sm:$0xff]
      %v449 = vpack.c.bf16 %v448, %v447
      %s450 = scalar_lea.vmem %s3, 32
      %v451 = vld [vmem:[%s450] sm:$0xf]
      %v452 = vld [vmem:[%s450 + $0x4] sm:$0xf]
      %v453 = vld [vmem:[%s450 + $0x8] sm:$0xf]
      %v454 = vld [vmem:[%s450 + $0xc] sm:$0xf]
      %v459 = vunpack.c.l.b16 %v451
      %v460 = vunpack.c.l.b16 %v452
      %v461 = vunpack.c.l.b16 %v453
      %v462 = vunpack.c.l.b16 %v454
      %v463 = vpack.c.b16 %v460, %v459
      %v464 = vpack.c.b16 %v462, %v461
      %v468 = vsel %vm313, %v449, 0
      %470 = vmatprep.subr.bf16.mxu0 0
      %471 = vmatpush1.bf16.msra.mxu0 %v463
      %472 = vmatprep.subr.bf16.mxu0 0
      %473 = vmatpush1.bf16.msra.mxu0 %v464
      %474 = vmatprep.subr.bf16.mxu0 0
      %475 = vmatpush1.bf16.msra.mxu0 0
      %476 = vmatprep.subr.bf16.mxu0 0
      %477 = vmatpush1.bf16.msra.mxu0 0
      %478 = vmatprep.subr.bf16.mxu0 0
      %479 = vmatpush1.bf16.msra.mxu0 0
      %480 = vmatprep.subr.bf16.mxu0 0
      %481 = vmatpush1.bf16.msra.mxu0 0
      %482 = vmatprep.subr.bf16.mxu0 0
      %483 = vmatpush1.bf16.msra.mxu0 0
      %484 = vmatprep.subr.bf16.mxu0 0
      %485 = vmatpush1.bf16.msra.mxu0 0
      %486 = vmatprep.subr.bf16.mxu0 0
      %487 = vmatpush1.bf16.msra.mxu0 0
      %488 = vmatprep.subr.bf16.mxu0 0
      %489 = vmatpush1.bf16.msra.mxu0 0
      %490 = vmatprep.subr.bf16.mxu0 0
      %491 = vmatpush1.bf16.msra.mxu0 0
      %492 = vmatprep.subr.bf16.mxu0 0
      %493 = vmatpush1.bf16.msra.mxu0 0
      %494 = vmatprep.subr.bf16.mxu0 0
      %495 = vmatpush1.bf16.msra.mxu0 0
      %496 = vmatprep.subr.bf16.mxu0 0
      %497 = vmatpush1.bf16.msra.mxu0 0
      %498 = vmatprep.subr.bf16.mxu0 0
      %499 = vmatpush1.bf16.msra.mxu0 0
      %500 = vmatprep.subr.bf16.mxu0 0
      %501 = vmatpush1.bf16.msra.mxu0 0
      %502 = vmatprep.mubr.bf16.mxu0 0
      %503 = vmatmul.mubr.bf16.gmra.mrb[0].mxu0 %v468
      %v504 = vpop.f32.mrb[0].mxu0
      %v505 = vadd.f32 0.0, %v504
      %v506 = vpop.f32.mrb[0].mxu0
      %v507 = vpop.f32.mrb[0].mxu0
      %v508 = vadd.f32 0.0, %v507
      %v509 = vpop.f32.mrb[0].mxu0
      %510 = vdwg.mxu0
      %v511 = vadd.f32 %v441, %v505
      %v512 = vadd.f32 %v444, %v508
      %v513 = vld [vmem:[#allocation2 + $0x8] sm:$0xff]
      %v514 = vld [vmem:[#allocation2 + $0x10] sm:$0xff]
      %v515 = vpack.c.bf16 %v514, %v513
      %s516 = scalar_lea.vmem %s3, 48
      %v517 = vld [vmem:[%s516] sm:$0xf]
      %v518 = vld [vmem:[%s516 + $0x4] sm:$0xf]
      %v519 = vld [vmem:[%s516 + $0x8] sm:$0xf]
      %v520 = vld [vmem:[%s516 + $0xc] sm:$0xf]
      %v525 = vunpack.c.l.b16 %v517
      %v526 = vunpack.c.l.b16 %v518
      %v527 = vunpack.c.l.b16 %v519
      %v528 = vunpack.c.l.b16 %v520
      %v529 = vpack.c.b16 %v526, %v525
      %v530 = vpack.c.b16 %v528, %v527
      %v534 = vsel %vm313, %v515, 0
      %536 = vmatprep.subr.bf16.mxu0 0
      %537 = vmatpush1.bf16.msra.mxu0 %v529
      %538 = vmatprep.subr.bf16.mxu0 0
      %539 = vmatpush1.bf16.msra.mxu0 %v530
      %540 = vmatprep.subr.bf16.mxu0 0
      %541 = vmatpush1.bf16.msra.mxu0 0
      %542 = vmatprep.subr.bf16.mxu0 0
      %543 = vmatpush1.bf16.msra.mxu0 0
      %544 = vmatprep.subr.bf16.mxu0 0
      %545 = vmatpush1.bf16.msra.mxu0 0
      %546 = vmatprep.subr.bf16.mxu0 0
      %547 = vmatpush1.bf16.msra.mxu0 0
      %548 = vmatprep.subr.bf16.mxu0 0
      %549 = vmatpush1.bf16.msra.mxu0 0
      %550 = vmatprep.subr.bf16.mxu0 0
      %551 = vmatpush1.bf16.msra.mxu0 0
      %552 = vmatprep.subr.bf16.mxu0 0
      %553 = vmatpush1.bf16.msra.mxu0 0
      %554 = vmatprep.subr.bf16.mxu0 0
      %555 = vmatpush1.bf16.msra.mxu0 0
      %556 = vmatprep.subr.bf16.mxu0 0
      %557 = vmatpush1.bf16.msra.mxu0 0
      %558 = vmatprep.subr.bf16.mxu0 0
      %559 = vmatpush1.bf16.msra.mxu0 0
      %560 = vmatprep.subr.bf16.mxu0 0
      %561 = vmatpush1.bf16.msra.mxu0 0
      %562 = vmatprep.subr.bf16.mxu0 0
      %563 = vmatpush1.bf16.msra.mxu0 0
      %564 = vmatprep.subr.bf16.mxu0 0
      %565 = vmatpush1.bf16.msra.mxu0 0
      %566 = vmatprep.subr.bf16.mxu0 0
      %567 = vmatpush1.bf16.msra.mxu0 0
      %568 = vmatprep.mubr.bf16.mxu0 0
      %569 = vmatmul.mubr.bf16.gmra.mrb[0].mxu0 %v534
      %v570 = vpop.f32.mrb[0].mxu0
      %v571 = vadd.f32 0.0, %v570
      %v572 = vpop.f32.mrb[0].mxu0
      %v573 = vpop.f32.mrb[0].mxu0
      %v574 = vadd.f32 0.0, %v573
      %v575 = vpop.f32.mrb[0].mxu0
      %576 = vdwg.mxu0
      %v577 = vadd.f32 %v511, %v571
      %v578 = vadd.f32 %v512, %v574
      %v579 = vld [vmem:[#allocation2 + $0x9] sm:$0xff]
      %v580 = vld [vmem:[#allocation2 + $0x11] sm:$0xff]
      %v581 = vpack.c.bf16 %v580, %v579
      %s582 = scalar_lea.vmem %s3, 64
      %v583 = vld [vmem:[%s582] sm:$0xf]
      %v584 = vld [vmem:[%s582 + $0x4] sm:$0xf]
      %v585 = vld [vmem:[%s582 + $0x8] sm:$0xf]
      %v586 = vld [vmem:[%s582 + $0xc] sm:$0xf]
      %v591 = vunpack.c.l.b16 %v583
      %v592 = vunpack.c.l.b16 %v584
      %v593 = vunpack.c.l.b16 %v585
      %v594 = vunpack.c.l.b16 %v586
      %v595 = vpack.c.b16 %v592, %v591
      %v596 = vpack.c.b16 %v594, %v593
      %v600 = vsel %vm313, %v581, 0
      %602 = vmatprep.subr.bf16.mxu0 0
      %603 = vmatpush1.bf16.msra.mxu0 %v595
      %604 = vmatprep.subr.bf16.mxu0 0
      %605 = vmatpush1.bf16.msra.mxu0 %v596
      %606 = vmatprep.subr.bf16.mxu0 0
      %607 = vmatpush1.bf16.msra.mxu0 0
      %608 = vmatprep.subr.bf16.mxu0 0
      %609 = vmatpush1.bf16.msra.mxu0 0
      %610 = vmatprep.subr.bf16.mxu0 0
      %611 = vmatpush1.bf16.msra.mxu0 0
      %612 = vmatprep.subr.bf16.mxu0 0
      %613 = vmatpush1.bf16.msra.mxu0 0
      %614 = vmatprep.subr.bf16.mxu0 0
      %615 = vmatpush1.bf16.msra.mxu0 0
      %616 = vmatprep.subr.bf16.mxu0 0
      %617 = vmatpush1.bf16.msra.mxu0 0
      %618 = vmatprep.subr.bf16.mxu0 0
      %619 = vmatpush1.bf16.msra.mxu0 0
      %620 = vmatprep.subr.bf16.mxu0 0
      %621 = vmatpush1.bf16.msra.mxu0 0
      %622 = vmatprep.subr.bf16.mxu0 0
      %623 = vmatpush1.bf16.msra.mxu0 0
      %624 = vmatprep.subr.bf16.mxu0 0
      %625 = vmatpush1.bf16.msra.mxu0 0
      %626 = vmatprep.subr.bf16.mxu0 0
      %627 = vmatpush1.bf16.msra.mxu0 0
      %628 = vmatprep.subr.bf16.mxu0 0
      %629 = vmatpush1.bf16.msra.mxu0 0
      %630 = vmatprep.subr.bf16.mxu0 0
      %631 = vmatpush1.bf16.msra.mxu0 0
      %632 = vmatprep.subr.bf16.mxu0 0
      %633 = vmatpush1.bf16.msra.mxu0 0
      %634 = vmatprep.mubr.bf16.mxu0 0
      %635 = vmatmul.mubr.bf16.gmra.mrb[0].mxu0 %v600
      %v636 = vpop.f32.mrb[0].mxu0
      %v637 = vadd.f32 0.0, %v636
      %v638 = vpop.f32.mrb[0].mxu0
      %v639 = vpop.f32.mrb[0].mxu0
      %v640 = vadd.f32 0.0, %v639
      %v641 = vpop.f32.mrb[0].mxu0
      %642 = vdwg.mxu0
      %v643 = vadd.f32 %v577, %v637
      %v644 = vadd.f32 %v578, %v640
      %v645 = vld [vmem:[#allocation2 + $0xa] sm:$0xff]
      %v646 = vld [vmem:[#allocation2 + $0x12] sm:$0xff]
      %v647 = vpack.c.bf16 %v646, %v645
      %s648 = scalar_lea.vmem %s3, 80
      %v649 = vld [vmem:[%s648] sm:$0xf]
      %v650 = vld [vmem:[%s648 + $0x4] sm:$0xf]
      %v651 = vld [vmem:[%s648 + $0x8] sm:$0xf]
      %v652 = vld [vmem:[%s648 + $0xc] sm:$0xf]
      %v657 = vunpack.c.l.b16 %v649
      %v658 = vunpack.c.l.b16 %v650
      %v659 = vunpack.c.l.b16 %v651
      %v660 = vunpack.c.l.b16 %v652
      %v661 = vpack.c.b16 %v658, %v657
      %v662 = vpack.c.b16 %v660, %v659
      %v666 = vsel %vm313, %v647, 0
      %668 = vmatprep.subr.bf16.mxu0 0
      %669 = vmatpush1.bf16.msra.mxu0 %v661
      %670 = vmatprep.subr.bf16.mxu0 0
      %671 = vmatpush1.bf16.msra.mxu0 %v662
      %672 = vmatprep.subr.bf16.mxu0 0
      %673 = vmatpush1.bf16.msra.mxu0 0
      %674 = vmatprep.subr.bf16.mxu0 0
      %675 = vmatpush1.bf16.msra.mxu0 0
      %676 = vmatprep.subr.bf16.mxu0 0
      %677 = vmatpush1.bf16.msra.mxu0 0
      %678 = vmatprep.subr.bf16.mxu0 0
      %679 = vmatpush1.bf16.msra.mxu0 0
      %680 = vmatprep.subr.bf16.mxu0 0
      %681 = vmatpush1.bf16.msra.mxu0 0
      %682 = vmatprep.subr.bf16.mxu0 0
      %683 = vmatpush1.bf16.msra.mxu0 0
      %684 = vmatprep.subr.bf16.mxu0 0
      %685 = vmatpush1.bf16.msra.mxu0 0
      %686 = vmatprep.subr.bf16.mxu0 0
      %687 = vmatpush1.bf16.msra.mxu0 0
      %688 = vmatprep.subr.bf16.mxu0 0
      %689 = vmatpush1.bf16.msra.mxu0 0
      %690 = vmatprep.subr.bf16.mxu0 0
      %691 = vmatpush1.bf16.msra.mxu0 0
      %692 = vmatprep.subr.bf16.mxu0 0
      %693 = vmatpush1.bf16.msra.mxu0 0
      %694 = vmatprep.subr.bf16.mxu0 0
      %695 = vmatpush1.bf16.msra.mxu0 0
      %696 = vmatprep.subr.bf16.mxu0 0
      %697 = vmatpush1.bf16.msra.mxu0 0
      %698 = vmatprep.subr.bf16.mxu0 0
      %699 = vmatpush1.bf16.msra.mxu0 0
      %700 = vmatprep.mubr.bf16.mxu0 0
      %701 = vmatmul.mubr.bf16.gmra.mrb[0].mxu0 %v666
      %v702 = vpop.f32.mrb[0].mxu0
      %v703 = vadd.f32 0.0, %v702
      %v704 = vpop.f32.mrb[0].mxu0
      %v705 = vpop.f32.mrb[0].mxu0
      %v706 = vadd.f32 0.0, %v705
      %v707 = vpop.f32.mrb[0].mxu0
      %708 = vdwg.mxu0
      %v709 = vadd.f32 %v643, %v703
      %v710 = vadd.f32 %v644, %v706
      %v711 = vld [vmem:[#allocation2 + $0xb] sm:$0xff]
      %v712 = vld [vmem:[#allocation2 + $0x13] sm:$0xff]
      %v713 = vpack.c.bf16 %v712, %v711
      %s714 = scalar_lea.vmem %s3, 96
      %v715 = vld [vmem:[%s714] sm:$0xf]
      %v716 = vld [vmem:[%s714 + $0x4] sm:$0xf]
      %v717 = vld [vmem:[%s714 + $0x8] sm:$0xf]
      %v718 = vld [vmem:[%s714 + $0xc] sm:$0xf]
      %v723 = vunpack.c.l.b16 %v715
      %v724 = vunpack.c.l.b16 %v716
      %v725 = vunpack.c.l.b16 %v717
      %v726 = vunpack.c.l.b16 %v718
      %v727 = vpack.c.b16 %v724, %v723
      %v728 = vpack.c.b16 %v726, %v725
      %v732 = vsel %vm313, %v713, 0
      %734 = vmatprep.subr.bf16.mxu0 0
      %735 = vmatpush1.bf16.msra.mxu0 %v727
      %736 = vmatprep.subr.bf16.mxu0 0
      %737 = vmatpush1.bf16.msra.mxu0 %v728
      %738 = vmatprep.subr.bf16.mxu0 0
      %739 = vmatpush1.bf16.msra.mxu0 0
      %740 = vmatprep.subr.bf16.mxu0 0
      %741 = vmatpush1.bf16.msra.mxu0 0
      %742 = vmatprep.subr.bf16.mxu0 0
      %743 = vmatpush1.bf16.msra.mxu0 0
      %744 = vmatprep.subr.bf16.mxu0 0
      %745 = vmatpush1.bf16.msra.mxu0 0
      %746 = vmatprep.subr.bf16.mxu0 0
      %747 = vmatpush1.bf16.msra.mxu0 0
      %748 = vmatprep.subr.bf16.mxu0 0
      %749 = vmatpush1.bf16.msra.mxu0 0
      %750 = vmatprep.subr.bf16.mxu0 0
      %751 = vmatpush1.bf16.msra.mxu0 0
      %752 = vmatprep.subr.bf16.mxu0 0
      %753 = vmatpush1.bf16.msra.mxu0 0
      %754 = vmatprep.subr.bf16.mxu0 0
      %755 = vmatpush1.bf16.msra.mxu0 0
      %756 = vmatprep.subr.bf16.mxu0 0
      %757 = vmatpush1.bf16.msra.mxu0 0
      %758 = vmatprep.subr.bf16.mxu0 0
      %759 = vmatpush1.bf16.msra.mxu0 0
      %760 = vmatprep.subr.bf16.mxu0 0
      %761 = vmatpush1.bf16.msra.mxu0 0
      %762 = vmatprep.subr.bf16.mxu0 0
      %763 = vmatpush1.bf16.msra.mxu0 0
      %764 = vmatprep.subr.bf16.mxu0 0
      %765 = vmatpush1.bf16.msra.mxu0 0
      %766 = vmatprep.mubr.bf16.mxu0 0
      %767 = vmatmul.mubr.bf16.gmra.mrb[0].mxu0 %v732
      %v768 = vpop.f32.mrb[0].mxu0
      %v769 = vadd.f32 0.0, %v768
      %v770 = vpop.f32.mrb[0].mxu0
      %v771 = vpop.f32.mrb[0].mxu0
      %v772 = vadd.f32 0.0, %v771
      %v773 = vpop.f32.mrb[0].mxu0
      %774 = vdwg.mxu0
      %v775 = vadd.f32 %v709, %v769
      %v776 = vadd.f32 %v710, %v772
      %v777 = vld [vmem:[%s246] sm:$0xff]
      %v778 = vld [vmem:[%s246 + $0x8] sm:$0xff]
      %v779 = vld [vmem:[%s246 + $0x1] sm:$0xff]
      %v780 = vld [vmem:[%s246 + $0x9] sm:$0xff]
      %v781 = vmax.f32 %v777, %v779
      %v782 = vmax.f32 %v778, %v780
      %v783 = vld [vmem:[%s246 + $0x2] sm:$0xff]
      %v784 = vld [vmem:[%s246 + $0xa] sm:$0xff]
      %v785 = vmax.f32 %v781, %v783
      %v786 = vmax.f32 %v782, %v784
      %v787 = vpack.c.bf16 %v786, %v785
      %v788 = vld [vmem:[%s4] sm:$0x3]
      %v790 = vsel %vm264, %v787, 0
      %v793 = vsel %vm268, %v788, 0
      %795 = vmatprep.subr.bf16.mxu0 0
      %796 = vmatpush1.bf16.msra.mxu0 %v793
      %797 = vmatprep.subr.bf16.mxu0 0
      %798 = vmatpush1.bf16.msra.mxu0 0
      %799 = vmatprep.subr.bf16.mxu0 0
      %800 = vmatpush1.bf16.msra.mxu0 0
      %801 = vmatprep.subr.bf16.mxu0 0
      %802 = vmatpush1.bf16.msra.mxu0 0
      %803 = vmatprep.subr.bf16.mxu0 0
      %804 = vmatpush1.bf16.msra.mxu0 0
      %805 = vmatprep.subr.bf16.mxu0 0
      %806 = vmatpush1.bf16.msra.mxu0 0
      %807 = vmatprep.subr.bf16.mxu0 0
      %808 = vmatpush1.bf16.msra.mxu0 0
      %809 = vmatprep.subr.bf16.mxu0 0
      %810 = vmatpush1.bf16.msra.mxu0 0
      %811 = vmatprep.subr.bf16.mxu0 0
      %812 = vmatpush1.bf16.msra.mxu0 0
      %813 = vmatprep.subr.bf16.mxu0 0
      %814 = vmatpush1.bf16.msra.mxu0 0
      %815 = vmatprep.subr.bf16.mxu0 0
      %816 = vmatpush1.bf16.msra.mxu0 0
      %817 = vmatprep.subr.bf16.mxu0 0
      %818 = vmatpush1.bf16.msra.mxu0 0
      %819 = vmatprep.subr.bf16.mxu0 0
      %820 = vmatpush1.bf16.msra.mxu0 0
      %821 = vmatprep.subr.bf16.mxu0 0
      %822 = vmatpush1.bf16.msra.mxu0 0
      %823 = vmatprep.subr.bf16.mxu0 0
      %824 = vmatpush1.bf16.msra.mxu0 0
      %825 = vmatprep.subr.bf16.mxu0 0
      %826 = vmatpush1.bf16.msra.mxu0 0
      %827 = vmatprep.mubr.bf16.mxu0 0
      %828 = vmatmul.mubr.bf16.gmra.mrb[0].mxu0 %v790
      %v829 = vpop.f32.mrb[0].mxu0
      %v830 = vadd.f32 0.0, %v829
      %v831 = vpop.f32.mrb[0].mxu0
      %v832 = vpop.f32.mrb[0].mxu0
      %v833 = vadd.f32 0.0, %v832
      %v834 = vpop.f32.mrb[0].mxu0
      %835 = vdwg.mxu0
      %v836 = vadd.f32 %v775, %v830
      %v837 = vadd.f32 %v776, %v833
      %v838 = vld [vmem:[%s5] sm:$0x1]
      %v840 = vlaneseq
      %v841 = vshrl.u32 %v840, 7
      %v842 = vsub.s32 0, %v841
      %v843 = vrot.slane %v838, %v842
      %v845 = vadd.f32 %v836, %v843
      %v846 = vadd.f32 %v837, %v843
      %v847 = vtanh.pop %v845
      %v848 = vtanh.pop %v846
      %849 = vst [vmem:[%s251] sm:$0xff] %v847
      %850 = vst [vmem:[%s251 + $0x8] sm:$0xff] %v848
      %p851 = scmp.lt.s32.totalorder %s17, 1
      %s852 = scalar_select %p851, %s17, 1
      %s853 = smul.addr %s852, 2
      %s854 = smul.addr %s853, 8
      %s855 = scalar_lea.vmem %s6, %s854
      // Predicated region
      $region45: #{inception_gru_forward.7} parent=43 // pred_check
        %p856 = pneg %p166
      $region46: #{inception_gru_forward.7} parent=43 // pred_check_branch
        %858 = sbr.rel (%p856) target = $region48
      $region47: #{inception_gru_forward.7} parent=43 // pred_region
        _
      $region48: #{inception_gru_forward.7} parent=43 // pred_fallthru
        _
    $region44: #{inception_gru_forward.7} parent=5 // pred_fallthru
      _
    %p859 = scmp.le.s32.totalorder 2, %s12
    // Predicated region
    $region49: #{inception_gru_forward.7} parent=5 // pred_check
      %p860 = pneg %p859
    $region50: #{inception_gru_forward.7} parent=5 // pred_check_branch
      %862 = sbr.rel (%p860) target = $region52
    $region51: #{inception_gru_forward.7} parent=5 // pred_region
      %s863 = ssub.s32 %s12, 2
      // Predicated region
      $region53: #{inception_gru_forward.7} parent=51 // pred_check
        %p864 = pneg %p172
      $region54: #{inception_gru_forward.7} parent=51 // pred_check_branch
        %866 = sbr.rel (%p864) target = $region56
      $region55: #{inception_gru_forward.7} parent=51 // pred_region
        %p867 = scmp.lt.s32.totalorder %s18, 1
        %s868 = scalar_select %p867, %s18, 1
        %s869 = smul.addr %s868, 2
        %s870 = smul.addr %s869, 8
        %s871 = scalar_lea.vmem %s6, %s870
      $region56: #{inception_gru_forward.7} parent=51 // pred_fallthru
        _
    $region52: #{inception_gru_forward.7} parent=5 // pred_fallthru
      _
  $region6: #{inception_gru_forward.7} parent=0 // loop_footer
    %s16 = sadd.s32 1, %s12
  $region7: #{inception_gru_forward.7} parent=0 // loop_footer_branch
    %11 = sbr.rel target = $region3
  $region8: #{inception_gru_forward.7} parent=0 // loop_exit
    _

// kernel: inception_gru_forward.11
$region0: #{inception_gru_forward.11}
  #allocation0 [shape = 'u32[]', space=smem, size = 0x4, offset = 0x4, fixed_abs, tag = 'smem constant byte address 0x4 - core index']
  #allocation1 [shape = 'u32[144,128]{1,0:T(1,128)}', space=vmem, size = 0x12000, scoped, tag = 'internal scratch']
  %s0 = inlined_call_operand.vmem [shape: f32[32,32], index: 0, kind: input, shape index: {}]
  %s1 = inlined_call_operand.vmem [shape: bf16[32,96], index: 1, kind: input, shape index: {}]
  %s2 = inlined_call_operand.vmem [shape: f32[1,96], index: 2, kind: input, shape index: {}]
  %s3 = inlined_call_operand.vmem [shape: f32[32,96], index: 3, kind: output, shape index: {}]
  %s4 = sld [smem:[#allocation0]]
  $region22: #{inception_gru_forward.11} parent=0
    _
  %s6 = ssub.s32 1, %s4
  %s7 = scalar_select 0, %s6, %s4
  // Predicated region
  $region2: #{inception_gru_forward.11} parent=0 // pred_check
    _
  $region3: #{inception_gru_forward.11} parent=0 // pred_check_branch
    %9 = sbr.rel (0) target = $region5
  $region4: #{inception_gru_forward.11} parent=0 // pred_region
    _
  $region5: #{inception_gru_forward.11} parent=0 // pred_fallthru
    _
  // Predicated region
  $region6: #{inception_gru_forward.11} parent=0 // pred_check
    _
  $region7: #{inception_gru_forward.11} parent=0 // pred_check_branch
    %11 = sbr.rel (0) target = $region9
  $region8: #{inception_gru_forward.11} parent=0 // pred_region
    _
  $region9: #{inception_gru_forward.11} parent=0 // pred_fallthru
    _
  // Predicated region
  $region10: #{inception_gru_forward.11} parent=0 // pred_check
    _
  $region11: #{inception_gru_forward.11} parent=0 // pred_check_branch
    %13 = sbr.rel (0) target = $region13
  $region12: #{inception_gru_forward.11} parent=0 // pred_region
    _
  $region13: #{inception_gru_forward.11} parent=0 // pred_fallthru
    _
  %v15 = vld [vmem:[%s0] sm:$0xff]
  %v16 = vld [vmem:[%s0 + $0x8] sm:$0xff]
  %v17 = vld [vmem:[%s0 + $0x10] sm:$0xff]
  %v18 = vld [vmem:[%s0 + $0x18] sm:$0xff]
  %v19 = vpack.c.bf16 %v16, %v15
  %v20 = vpack.c.bf16 %v18, %v17
  %v21 = vld [vmem:[%s1] sm:$0xf]
  %v22 = vld [vmem:[%s1 + $0x4] sm:$0xf]
  %v23 = vld [vmem:[%s1 + $0x8] sm:$0xf]
  %v24 = vld [vmem:[%s1 + $0xc] sm:$0xf]
  %v25 = vld [vmem:[%s2] sm:$0x1]
  %v27 = vlaneseq
  %v28 = vshrl.u32 %v27, 7
  %v29 = vsub.s32 0, %v28
  %v30 = vrot.slane %v25, %v29
  %v36 = vunpack.c.l.b16 %v21
  %v37 = vunpack.c.l.b16 %v22
  %v38 = vunpack.c.l.b16 %v23
  %v39 = vunpack.c.l.b16 %v24
  %v40 = vpack.c.b16 %v37, %v36
  %v41 = vpack.c.b16 %v39, %v38
  %vm44 = vcmask 261120
  %v46 = vsel %vm44, %v19, 0
  %v49 = vsel %vm44, %v20, 0
  %51 = vmatprep.subr.bf16.mxu0 0
  %52 = vmatpush1.bf16.msra.mxu0 %v40
  %53 = vmatprep.subr.bf16.mxu0 0
  %54 = vmatpush1.bf16.msra.mxu0 %v41
  %55 = vmatprep.subr.bf16.mxu0 0
  %56 = vmatpush1.bf16.msra.mxu0 0
  %57 = vmatprep.subr.bf16.mxu0 0
  %58 = vmatpush1.bf16.msra.mxu0 0
  %59 = vmatprep.subr.bf16.mxu0 0
  %60 = vmatpush1.bf16.msra.mxu0 0
  %61 = vmatprep.subr.bf16.mxu0 0
  %62 = vmatpush1.bf16.msra.mxu0 0
  %63 = vmatprep.subr.bf16.mxu0 0
  %64 = vmatpush1.bf16.msra.mxu0 0
  %65 = vmatprep.subr.bf16.mxu0 0
  %66 = vmatpush1.bf16.msra.mxu0 0
  %67 = vmatprep.subr.bf16.mxu0 0
  %68 = vmatpush1.bf16.msra.mxu0 0
  %69 = vmatprep.subr.bf16.mxu0 0
  %70 = vmatpush1.bf16.msra.mxu0 0
  %71 = vmatprep.subr.bf16.mxu0 0
  %72 = vmatpush1.bf16.msra.mxu0 0
  %73 = vmatprep.subr.bf16.mxu0 0
  %74 = vmatpush1.bf16.msra.mxu0 0
  %75 = vmatprep.subr.bf16.mxu0 0
  %76 = vmatpush1.bf16.msra.mxu0 0
  %77 = vmatprep.subr.bf16.mxu0 0
  %78 = vmatpush1.bf16.msra.mxu0 0
  %79 = vmatprep.subr.bf16.mxu0 0
  %80 = vmatpush1.bf16.msra.mxu0 0
  %81 = vmatprep.subr.bf16.mxu0 0
  %82 = vmatpush1.bf16.msra.mxu0 0
  %83 = vmatprep.mubr.bf16.mxu0 0
  %84 = vmatmul.mubr.bf16.gmra.mrb[0].mxu0 %v46
  %v85 = vpop.f32.mrb[0].mxu0
  %v86 = vadd.f32 %v30, %v85
  %v87 = vpop.f32.mrb[0].mxu0
  %v88 = vpop.f32.mrb[0].mxu0
  %v89 = vadd.f32 %v30, %v88
  %v90 = vpop.f32.mrb[0].mxu0
  %91 = vmatprep.mubr.bf16.mxu0 0
  %92 = vmatmul.mubr.bf16.gmra.mrb[0].mxu0 %v49
  %v93 = vpop.f32.mrb[0].mxu0
  %v94 = vadd.f32 %v30, %v93
  %v95 = vpop.f32.mrb[0].mxu0
  %v96 = vpop.f32.mrb[0].mxu0
  %v97 = vadd.f32 %v30, %v96
  %v98 = vpop.f32.mrb[0].mxu0
  %99 = vdwg.mxu0
  %vm100 = vcmask 785408
  %101 = vst.msk [vmem:[%s3] sm:$0xff] %vm100, %v86
  %102 = vst.msk [vmem:[%s3 + $0x8] sm:$0xff] %vm100, %v89
  %103 = vst.msk [vmem:[%s3 + $0x10] sm:$0xff] %vm100, %v94
  %104 = vst.msk [vmem:[%s3 + $0x18] sm:$0xff] %vm100, %v97
  // Predicated region
  $region14: #{inception_gru_forward.11} parent=0 // pred_check
    _
  $region15: #{inception_gru_forward.11} parent=0 // pred_check_branch
    %106 = sbr.rel (0) target = $region17
  $region16: #{inception_gru_forward.11} parent=0 // pred_region
    _
  $region17: #{inception_gru_forward.11} parent=0 // pred_fallthru
    _
  // Predicated region
  $region18: #{inception_gru_forward.11} parent=0 // pred_check
    _
  $region19: #{inception_gru_forward.11} parent=0 // pred_check_branch
    %108 = sbr.rel (0) target = $region21
  $region20: #{inception_gru_forward.11} parent=0 // pred_region
    _
  $region21: #{inception_gru_forward.11} parent=0 // pred_fallthru
    _

// kernel: inception_gru_forward.9
$region0: #{inception_gru_forward.9}
  #allocation0 [shape = 'u32[]', space=smem, size = 0x4, offset = 0x4, fixed_abs, tag = 'smem constant byte address 0x4 - core index']
  #allocation1 [shape = 'u32[144,128]{1,0:T(1,128)}', space=vmem, size = 0x12000, scoped, tag = 'internal scratch']
  %s0 = inlined_call_operand.vmem [shape: f32[32,132], index: 0, kind: input, shape index: {}]
  %s1 = inlined_call_operand.vmem [shape: bf16[132,96], index: 1, kind: input, shape index: {}]
  %s2 = inlined_call_operand.vmem [shape: f32[1,96], index: 2, kind: input, shape index: {}]
  %s3 = inlined_call_operand.vmem [shape: f32[32,96], index: 3, kind: output, shape index: {}]
  %s4 = sld [smem:[#allocation0]]
  $region22: #{inception_gru_forward.9} parent=0
    _
  %s6 = ssub.s32 1, %s4
  %s7 = scalar_select 0, %s6, %s4
  // Predicated region
  $region2: #{inception_gru_forward.9} parent=0 // pred_check
    _
  $region3: #{inception_gru_forward.9} parent=0 // pred_check_branch
    %9 = sbr.rel (0) target = $region5
  $region4: #{inception_gru_forward.9} parent=0 // pred_region
    _
  $region5: #{inception_gru_forward.9} parent=0 // pred_fallthru
    _
  // Predicated region
  $region6: #{inception_gru_forward.9} parent=0 // pred_check
    _
  $region7: #{inception_gru_forward.9} parent=0 // pred_check_branch
    %11 = sbr.rel (0) target = $region9
  $region8: #{inception_gru_forward.9} parent=0 // pred_region
    _
  $region9: #{inception_gru_forward.9} parent=0 // pred_fallthru
    _
  // Predicated region
  $region10: #{inception_gru_forward.9} parent=0 // pred_check
    _
  $region11: #{inception_gru_forward.9} parent=0 // pred_check_branch
    %13 = sbr.rel (0) target = $region13
  $region12: #{inception_gru_forward.9} parent=0 // pred_region
    _
  $region13: #{inception_gru_forward.9} parent=0 // pred_fallthru
    _
  %v15 = vld [vmem:[%s0] sm:$0xff]
  %v16 = vld [vmem:[%s0 + $0x8] sm:$0xff]
  %v17 = vld [vmem:[%s0 + $0x10] sm:$0xff]
  %v18 = vld [vmem:[%s0 + $0x18] sm:$0xff]
  %v19 = vld [vmem:[%s0 + $0x20] sm:$0xff]
  %v20 = vld [vmem:[%s0 + $0x28] sm:$0xff]
  %v21 = vld [vmem:[%s0 + $0x30] sm:$0xff]
  %v22 = vld [vmem:[%s0 + $0x38] sm:$0xff]
  %v23 = vpack.c.bf16 %v17, %v15
  %v24 = vpack.c.bf16 %v18, %v16
  %v25 = vpack.c.bf16 %v21, %v19
  %v26 = vpack.c.bf16 %v22, %v20
  %v27 = vld [vmem:[%s1] sm:$0xf]
  %v28 = vld [vmem:[%s1 + $0x4] sm:$0xf]
  %v29 = vld [vmem:[%s1 + $0x8] sm:$0xf]
  %v30 = vld [vmem:[%s1 + $0xc] sm:$0xf]
  %v31 = vld [vmem:[%s1 + $0x10] sm:$0xf]
  %v32 = vld [vmem:[%s1 + $0x14] sm:$0xf]
  %v33 = vld [vmem:[%s1 + $0x18] sm:$0xf]
  %v34 = vld [vmem:[%s1 + $0x1c] sm:$0xf]
  %v35 = vld [vmem:[%s1 + $0x20] sm:$0xf]
  %v36 = vld [vmem:[%s1 + $0x24] sm:$0xf]
  %v37 = vld [vmem:[%s1 + $0x28] sm:$0xf]
  %v38 = vld [vmem:[%s1 + $0x2c] sm:$0xf]
  %v39 = vld [vmem:[%s1 + $0x30] sm:$0xf]
  %v40 = vld [vmem:[%s1 + $0x34] sm:$0xf]
  %v41 = vld [vmem:[%s1 + $0x38] sm:$0xf]
  %v42 = vld [vmem:[%s1 + $0x3c] sm:$0xf]
  %v43 = vld [vmem:[%s1 + $0x40] sm:$0x3]
  %v44 = vld [vmem:[%s2] sm:$0x1]
  %v46 = vlaneseq
  %v47 = vshrl.u32 %v46, 7
  %v48 = vsub.s32 0, %v47
  %v49 = vrot.slane %v44, %v48
  %v68 = vunpack.c.l.b16 %v27
  %v69 = vunpack.c.l.b16 %v28
  %v70 = vunpack.c.l.b16 %v29
  %v71 = vunpack.c.l.b16 %v30
  %v72 = vunpack.c.l.b16 %v31
  %v73 = vunpack.c.l.b16 %v32
  %v74 = vunpack.c.l.b16 %v33
  %v75 = vunpack.c.l.b16 %v34
  %v76 = vunpack.c.l.b16 %v35
  %v77 = vunpack.c.l.b16 %v36
  %v78 = vunpack.c.l.b16 %v37
  %v79 = vunpack.c.l.b16 %v38
  %v80 = vunpack.c.l.b16 %v39
  %v81 = vunpack.c.l.b16 %v40
  %v82 = vunpack.c.l.b16 %v41
  %v83 = vunpack.c.l.b16 %v42
  %v84 = vunpack.c.l.b16 %v43
  %v85 = vpack.c.b16 %v69, %v68
  %v86 = vpack.c.b16 %v71, %v70
  %v87 = vpack.c.b16 %v73, %v72
  %v88 = vpack.c.b16 %v75, %v74
  %v89 = vpack.c.b16 %v77, %v76
  %v90 = vpack.c.b16 %v79, %v78
  %v91 = vpack.c.b16 %v81, %v80
  %v92 = vpack.c.b16 %v83, %v82
  %v93 = vpack.c.b16 %v84, %v84
  %vm102 = vcmask 31744
  %v104 = vsel %vm102, %v24, 0
  %v107 = vsel %vm102, %v26, 0
  %vm109 = vcmask 1041408
  %v111 = vsel %vm109, %v93, 0
  %113 = vmatprep.subr.bf16.mxu0 0
  %114 = vmatpush1.bf16.msra.mxu0 %v85
  %115 = vmatprep.subr.bf16.mxu0 0
  %116 = vmatpush1.bf16.msra.mxu0 %v86
  %117 = vmatprep.subr.bf16.mxu0 0
  %118 = vmatpush1.bf16.msra.mxu0 %v87
  %119 = vmatprep.subr.bf16.mxu0 0
  %120 = vmatpush1.bf16.msra.mxu0 %v88
  %121 = vmatprep.subr.bf16.mxu0 0
  %122 = vmatpush1.bf16.msra.mxu0 %v89
  %123 = vmatprep.subr.bf16.mxu0 0
  %124 = vmatpush1.bf16.msra.mxu0 %v90
  %125 = vmatprep.subr.bf16.mxu0 0
  %126 = vmatpush1.bf16.msra.mxu0 %v91
  %127 = vmatprep.subr.bf16.mxu0 0
  %128 = vmatpush1.bf16.msra.mxu0 %v92
  %129 = vmatprep.subr.bf16.mxu0 0
  %130 = vmatpush1.bf16.msra.mxu0 %v111
  %131 = vmatprep.subr.bf16.mxu0 0
  %132 = vmatpush1.bf16.msra.mxu0 0
  %133 = vmatprep.subr.bf16.mxu0 0
  %134 = vmatpush1.bf16.msra.mxu0 0
  %135 = vmatprep.subr.bf16.mxu0 0
  %136 = vmatpush1.bf16.msra.mxu0 0
  %137 = vmatprep.subr.bf16.mxu0 0
  %138 = vmatpush1.bf16.msra.mxu0 0
  %139 = vmatprep.subr.bf16.mxu0 0
  %140 = vmatpush1.bf16.msra.mxu0 0
  %141 = vmatprep.subr.bf16.mxu0 0
  %142 = vmatpush1.bf16.msra.mxu0 0
  %143 = vmatprep.subr.bf16.mxu0 0
  %144 = vmatpush1.bf16.msra.mxu0 0
  %145 = vmatprep.mubr.bf16.mxu0 %v104
  %146 = vmatmul.mubr.bf16.gmra.mrb[0].mxu0 %v23
  %v147 = vpop.f32.mrb[0].mxu0
  %v148 = vadd.f32 %v49, %v147
  %v149 = vpop.f32.mrb[0].mxu0
  %v150 = vpop.f32.mrb[0].mxu0
  %v151 = vadd.f32 %v49, %v150
  %v152 = vpop.f32.mrb[0].mxu0
  %153 = vmatprep.mubr.bf16.mxu0 %v107
  %154 = vmatmul.mubr.bf16.gmra.mrb[0].mxu0 %v25
  %v155 = vpop.f32.mrb[0].mxu0
  %v156 = vadd.f32 %v49, %v155
  %v157 = vpop.f32.mrb[0].mxu0
  %v158 = vpop.f32.mrb[0].mxu0
  %v159 = vadd.f32 %v49, %v158
  %v160 = vpop.f32.mrb[0].mxu0
  %161 = vdwg.mxu0
  %vm162 = vcmask 785408
  %163 = vst.msk [vmem:[%s3] sm:$0xff] %vm162, %v148
  %164 = vst.msk [vmem:[%s3 + $0x8] sm:$0xff] %vm162, %v151
  %165 = vst.msk [vmem:[%s3 + $0x10] sm:$0xff] %vm162, %v156
  %166 = vst.msk [vmem:[%s3 + $0x18] sm:$0xff] %vm162, %v159
  // Predicated region
  $region14: #{inception_gru_forward.9} parent=0 // pred_check
    _
  $region15: #{inception_gru_forward.9} parent=0 // pred_check_branch
    %168 = sbr.rel (0) target = $region17
  $region16: #{inception_gru_forward.9} parent=0 // pred_region
    _
  $region17: #{inception_gru_forward.9} parent=0 // pred_fallthru
    _
  // Predicated region
  $region18: #{inception_gru_forward.9} parent=0 // pred_check
    _
  $region19: #{inception_gru_forward.9} parent=0 // pred_check_branch
    %170 = sbr.rel (0) target = $region21
  $region20: #{inception_gru_forward.9} parent=0 // pred_region
    _
  $region21: #{inception_gru_forward.9} parent=0 // pred_fallthru
    _

// kernel: inception_gru_forward.10
$region0: #{inception_gru_forward.10}
  #allocation0 [shape = 'u32[]', space=smem, size = 0x4, offset = 0x4, fixed_abs, tag = 'smem constant byte address 0x4 - core index']
  #allocation1 [shape = 'u32[144,128]{1,0:T(1,128)}', space=vmem, size = 0x12000, scoped, tag = 'internal scratch']
  #allocation2 [shape = 'f32[2,32]{1,0:T(2,128)}', space=vmem, size = 0x400, scoped, tag = 'scratch operand']
  #allocation3 [shape = 'f32[2,96]{1,0:T(2,128)}', space=vmem, size = 0x400, scoped, tag = 'scratch operand']
  %s0 = inlined_call_operand.vmem [shape: f32[2,16,96], index: 0, kind: input, shape index: {}]
  %s1 = inlined_call_operand.vmem [shape: bf16[32,96], index: 1, kind: input, shape index: {}]
  %s2 = inlined_call_operand.vmem [shape: f32[1,96], index: 2, kind: input, shape index: {}]
  %s3 = inlined_call_operand.vmem [shape: f32[2,16,32], index: 3, kind: output, shape index: {}]
  %s4 = sld [smem:[#allocation0]]
  $region121: #{inception_gru_forward.10} parent=0
    _
  %s6 = ssub.s32 1, %s4
  %s7 = scalar_select 0, %s6, %s4
  $region1: #{inception_gru_forward.10} parent=0
    #allocation4 [shape = 'u8[16384]{0}', space=vmem, size = 0x4000, scoped, tag = 'input window, operand 0']
    #allocation5 [shape = 'u8[16384]{0}', space=vmem, size = 0x4000, scoped, tag = 'output window, operand 0']
    loop: start=0, step=1, limit=4
    $region2: #{inception_gru_forward.10} parent=1 // loop_pre_header
      _
    $region3: #{inception_gru_forward.10} parent=1 // loop_header
      %s9 = sphi 0, %s13
      %p10 = scmp.ge.s32.totalorder %s9, 4
      %s19 = sphi 0, %s21
      %s22 = sphi 0, %s19
      %s23 = sphi 0, %s22
      %s39 = sphi 0, %s23
      %s43 = sphi 0, %s43
      %s45 = sphi 0, %s43
      %s46 = sphi 0, %s45
      %s60 = sphi 0, %s46
      %s64 = sphi 0, %s64
      %s66 = sphi 0, %s64
      %s67 = sphi 0, %s66
      %s81 = sphi 0, %s67
      %s87 = sphi 0, %s89
      %s90 = sphi 0, %s87
      %s91 = sphi 0, %s90
      %s107 = sphi 0, %s91
    $region4: #{inception_gru_forward.10} parent=1 // loop_header_branch
      %12 = sbr.rel (%p10) target = $region8
    $region5: #{inception_gru_forward.10} parent=1 // loop_body
      %s14 = ssub.s32 %s9, 1
      %s15 = ssub.s32 %s9, 2
      %s16 = sadd.s32 %s9, 1
      %s17 = ssub.s32 %s9, %s16
      %p18 = scmp.eq.s32.totalorder %s17, 0
      %s20 = sadd.s32 %s19, 1
      %s21 = scalar_select %p18, %s19, %s20
      %p24 = pneg %p18
      %p25 = scmp.eq.s32.totalorder %s9, 1
      %p26 = por %p24, %p25
      %p27 = scmp.ne.s32.totalorder %s19, %s22
      %p28 = scmp.eq.s32.totalorder %s9, 0
      %p29 = por %p27, %p28
      %p30 = scmp.ne.s32.totalorder %s19, %s22
      %p31 = scmp.eq.s32.totalorder %s14, 1
      %p32 = por %p30, %p31
      %p33 = scmp.ne.s32.totalorder %s22, %s23
      %p34 = scmp.eq.s32.totalorder %s14, 0
      %p35 = por %p33, %p34
      %p36 = scmp.ne.s32.totalorder %s22, %s23
      %p37 = scmp.eq.s32.totalorder %s15, 1
      %p38 = por %p36, %p37
      %p40 = scmp.ne.s32.totalorder %s23, %s39
      %p41 = scmp.eq.s32.totalorder %s15, 0
      %p42 = por %p40, %p41
      %s44 = sadd.s32 %s43, 1
      %p47 = scmp.eq.s32.totalorder %s9, 1
      %p48 = scmp.ne.s32.totalorder %s43, %s45
      %p49 = scmp.eq.s32.totalorder %s9, 0
      %p50 = por %p48, %p49
      %p51 = scmp.ne.s32.totalorder %s43, %s45
      %p52 = scmp.eq.s32.totalorder %s14, 1
      %p53 = por %p51, %p52
      %p54 = scmp.ne.s32.totalorder %s45, %s46
      %p55 = scmp.eq.s32.totalorder %s14, 0
      %p56 = por %p54, %p55
      %p57 = scmp.ne.s32.totalorder %s45, %s46
      %p58 = scmp.eq.s32.totalorder %s15, 1
      %p59 = por %p57, %p58
      %p61 = scmp.ne.s32.totalorder %s46, %s60
      %p62 = scmp.eq.s32.totalorder %s15, 0
      %p63 = por %p61, %p62
      %s65 = sadd.s32 %s64, 1
      %p68 = scmp.eq.s32.totalorder %s9, 1
      %p69 = scmp.ne.s32.totalorder %s64, %s66
      %p70 = scmp.eq.s32.totalorder %s9, 0
      %p71 = por %p69, %p70
      %p72 = scmp.ne.s32.totalorder %s64, %s66
      %p73 = scmp.eq.s32.totalorder %s14, 1
      %p74 = por %p72, %p73
      %p75 = scmp.ne.s32.totalorder %s66, %s67
      %p76 = scmp.eq.s32.totalorder %s14, 0
      %p77 = por %p75, %p76
      %p78 = scmp.ne.s32.totalorder %s66, %s67
      %p79 = scmp.eq.s32.totalorder %s15, 1
      %p80 = por %p78, %p79
      %p82 = scmp.ne.s32.totalorder %s67, %s81
      %p83 = scmp.eq.s32.totalorder %s15, 0
      %p84 = por %p82, %p83
      %s85 = ssub.s32 %s9, %s16
      %p86 = scmp.eq.s32.totalorder %s85, 0
      %s88 = sadd.s32 %s87, 1
      %s89 = scalar_select %p86, %s87, %s88
      %p92 = pneg %p86
      %p93 = scmp.eq.s32.totalorder %s9, 1
      %p94 = por %p92, %p93
      %p95 = scmp.ne.s32.totalorder %s87, %s90
      %p96 = scmp.eq.s32.totalorder %s9, 0
      %p97 = por %p95, %p96
      %p98 = scmp.ne.s32.totalorder %s87, %s90
      %p99 = scmp.eq.s32.totalorder %s14, 1
      %p100 = por %p98, %p99
      %p101 = scmp.ne.s32.totalorder %s90, %s91
      %p102 = scmp.eq.s32.totalorder %s14, 0
      %p103 = por %p101, %p102
      %p104 = scmp.ne.s32.totalorder %s90, %s91
      %p105 = scmp.eq.s32.totalorder %s15, 1
      %p106 = por %p104, %p105
      %p108 = scmp.ne.s32.totalorder %s91, %s107
      %p109 = scmp.eq.s32.totalorder %s15, 0
      %p110 = por %p108, %p109
      %p111 = scmp.le.s32.totalorder 1, %s9
      %p112 = scmp.lt.s32.totalorder %s9, 3
      %p113 = pnand %p111, %p112
      %p114 = pneg %p113
      // Predicated region
      $region9: #{inception_gru_forward.10} parent=5 // pred_check
        _
      $region10: #{inception_gru_forward.10} parent=5 // pred_check_branch
        %116 = sbr.rel (%p113) target = $region12
      $region11: #{inception_gru_forward.10} parent=5 // pred_region
        %s117 = ssub.s32 %s9, 1
        // Predicated region
        $region13: #{inception_gru_forward.10} parent=11 // pred_check
          %p118 = pneg %p56
        $region14: #{inception_gru_forward.10} parent=11 // pred_check_branch
          %120 = sbr.rel (%p118) target = $region16
        $region15: #{inception_gru_forward.10} parent=11 // pred_region
          _
        $region16: #{inception_gru_forward.10} parent=11 // pred_fallthru
          _
        // Predicated region
        $region17: #{inception_gru_forward.10} parent=11 // pred_check
          %p121 = pneg %p77
        $region18: #{inception_gru_forward.10} parent=11 // pred_check_branch
          %123 = sbr.rel (%p121) target = $region20
        $region19: #{inception_gru_forward.10} parent=11 // pred_region
          _
        $region20: #{inception_gru_forward.10} parent=11 // pred_fallthru
          _
      $region12: #{inception_gru_forward.10} parent=5 // pred_fallthru
        _
      %p124 = scmp.lt.s32.totalorder %s9, 2
      // Predicated region
      $region21: #{inception_gru_forward.10} parent=5 // pred_check
        %p125 = pneg %p124
      $region22: #{inception_gru_forward.10} parent=5 // pred_check_branch
        %127 = sbr.rel (%p125) target = $region24
      $region23: #{inception_gru_forward.10} parent=5 // pred_region
        // Predicated region
        $region25: #{inception_gru_forward.10} parent=23 // pred_check
          %p128 = pneg %p29
        $region26: #{inception_gru_forward.10} parent=23 // pred_check_branch
          %130 = sbr.rel (%p128) target = $region28
        $region27: #{inception_gru_forward.10} parent=23 // pred_region
          %s131 = sand.u32 %s19, 1
          %s132 = sand.u32 %s19, 1
          %s133 = smul.addr %s132, 16
          %s134 = scalar_lea.vmem [#allocation4], %s133
          %s135 = smul.addr %s9, 8
          %s136 = scalar_lea.vmem %s0, %s135
          // Predicated region
          $region29: #{inception_gru_forward.10} parent=27 // pred_check
            _
          $region30: #{inception_gru_forward.10} parent=27 // pred_check_branch
            %138 = sbr.rel (0) target = $region32
          $region31: #{inception_gru_forward.10} parent=27 // pred_region
            // Predicated region
            $region33: #{inception_gru_forward.10} parent=31 // pred_check
              _
            $region34: #{inception_gru_forward.10} parent=31 // pred_check_branch
              %140 = sbr.rel (0) target = $region36
            $region35: #{inception_gru_forward.10} parent=31 // pred_region
              // Predicated region
              $region48: #{inception_gru_forward.10} parent=35 // pred_check
                _
              $region49: #{inception_gru_forward.10} parent=35 // pred_check_branch
                %157 = sbr.rel (0) target = $region51
              $region50: #{inception_gru_forward.10} parent=35 // pred_region
                loop: start=0, step=1, limit=1
                $region52: #{inception_gru_forward.10} parent=50 // loop_pre_header
                  _
                $region53: #{inception_gru_forward.10} parent=50 // loop_header
                  %s159 = sphi 0, %s163
                  %p160 = scmp.ge.s32.totalorder %s159, 1
                  %s164 = sphi %s136, %s136
                  %s165 = sphi %s134, %s134
                $region54: #{inception_gru_forward.10} parent=50 // loop_header_branch
                  %162 = sbr.rel (%p160) target = $region58
                $region55: #{inception_gru_forward.10} parent=50 // loop_body
                  %v166 = vld [vmem:[%s164] sm:$0xff]
                  %167 = vst [vmem:[%s165] sm:$0xff] %v166
                  %v168 = vld [vmem:[%s164 + $0x10] sm:$0xff]
                  %169 = vst [vmem:[%s165 + $0x8] sm:$0xff] %v168
                $region56: #{inception_gru_forward.10} parent=50 // loop_footer
                  %s163 = sadd.s32 1, %s159
                $region57: #{inception_gru_forward.10} parent=50 // loop_footer_branch
                  %158 = sbr.rel target = $region53
                $region58: #{inception_gru_forward.10} parent=50 // loop_exit
                  _
              $region51: #{inception_gru_forward.10} parent=35 // pred_fallthru
                _
              // Predicated region
              $region59: #{inception_gru_forward.10} parent=35 // pred_check
                _
              $region60: #{inception_gru_forward.10} parent=35 // pred_check_branch
                %171 = sbr.rel target = $region62
              $region61: #{inception_gru_forward.10} parent=35 // pred_region
                _
              $region62: #{inception_gru_forward.10} parent=35 // pred_fallthru
                _
            $region36: #{inception_gru_forward.10} parent=31 // pred_fallthru
              _
            // Predicated region
            $region37: #{inception_gru_forward.10} parent=31 // pred_check
              _
            $region38: #{inception_gru_forward.10} parent=31 // pred_check_branch
              %142 = sbr.rel target = $region40
            $region39: #{inception_gru_forward.10} parent=31 // pred_region
              loop: start=0, step=1, limit=1
              $region41: #{inception_gru_forward.10} parent=39 // loop_pre_header
                _
              $region42: #{inception_gru_forward.10} parent=39 // loop_header
                %s145 = sphi 0, %s149
                %p146 = scmp.ge.s32.totalorder %s145, 1
                %s150 = sphi %s136, %s136
                %s151 = sphi %s134, %s134
              $region43: #{inception_gru_forward.10} parent=39 // loop_header_branch
                %148 = sbr.rel (%p146) target = $region47
              $region44: #{inception_gru_forward.10} parent=39 // loop_body
                %v152 = vld [vmem:[%s150] sm:$0xff]
                %153 = vst [vmem:[%s151] sm:$0xff] %v152
                %v154 = vld [vmem:[%s150 + $0x10] sm:$0xff]
                %155 = vst [vmem:[%s151 + $0x8] sm:$0xff] %v154
              $region45: #{inception_gru_forward.10} parent=39 // loop_footer
                %s149 = sadd.s32 1, %s145
              $region46: #{inception_gru_forward.10} parent=39 // loop_footer_branch
                %144 = sbr.rel target = $region42
              $region47: #{inception_gru_forward.10} parent=39 // loop_exit
                _
            $region40: #{inception_gru_forward.10} parent=31 // pred_fallthru
              _
          $region32: #{inception_gru_forward.10} parent=27 // pred_fallthru
            _
          %172 = vnop
        $region28: #{inception_gru_forward.10} parent=23 // pred_fallthru
          _
      $region24: #{inception_gru_forward.10} parent=5 // pred_fallthru
        _
      %p173 = scmp.le.s32.totalorder 1, %s9
      %p174 = scmp.lt.s32.totalorder %s9, 3
      %p175 = pnand %p173, %p174
      %p176 = pneg %p175
      // Predicated region
      $region63: #{inception_gru_forward.10} parent=5 // pred_check
        _
      $region64: #{inception_gru_forward.10} parent=5 // pred_check_branch
        %178 = sbr.rel (%p175) target = $region66
      $region65: #{inception_gru_forward.10} parent=5 // pred_region
        %s179 = ssub.s32 %s9, 1
        %s180 = sand.u32 %s22, 1
        %s181 = sand.u32 %s22, 1
        %s182 = smul.addr %s181, 16
        %s183 = scalar_lea.vmem [#allocation4], %s182
        // Predicated region
        $region67: #{inception_gru_forward.10} parent=65 // pred_check
          %p184 = pneg %p35
        $region68: #{inception_gru_forward.10} parent=65 // pred_check_branch
          %186 = sbr.rel (%p184) target = $region70
        $region69: #{inception_gru_forward.10} parent=65 // pred_region
          _
        $region70: #{inception_gru_forward.10} parent=65 // pred_fallthru
          _
        %s187 = sand.u32 %s22, 1
        %s188 = sand.u32 %s22, 1
        %s189 = smul.addr %s188, 16
        %s190 = scalar_lea.vmem [#allocation4], %s189
        %p191 = pneg %p35
        %p192 = pneg %p32
        %p193 = pneg %p56
        %p194 = pneg %p53
        %p195 = pneg %p77
        %p196 = pneg %p74
        %p197 = pneg %p103
        %p198 = pneg %p100
        %s199 = sand.u32 %s90, 1
        %s200 = sand.u32 %s90, 1
        %s201 = smul.addr %s200, 16
        %s202 = scalar_lea.vmem [#allocation5], %s201
        %p204 = scmp.eq.s32.totalorder %s14, 0
        // Predicated region
        $region71: #{inception_gru_forward.10} parent=65 // pred_check
          %p205 = pneg %p204
        $region72: #{inception_gru_forward.10} parent=65 // pred_check_branch
          %207 = sbr.rel (%p205) target = $region74
        $region73: #{inception_gru_forward.10} parent=65 // pred_region
          %vm208 = vcmask 254976
          %209 = vst.msk [vmem:[#allocation2] sm:$0x3] %vm208, 0.0
        $region74: #{inception_gru_forward.10} parent=65 // pred_fallthru
          _
        %v210 = vld [vmem:[#allocation2] sm:$0x3]
        %v211 = vld [vmem:[%s1] sm:$0xf]
        %v212 = vld [vmem:[%s1 + $0x4] sm:$0xf]
        %v213 = vld [vmem:[%s1 + $0x8] sm:$0xf]
        %v214 = vld [vmem:[%s1 + $0xc] sm:$0xf]
        %v215 = vld [vmem:[%s2] sm:$0x1]
        %v216 = vpack.c.bf16 %v210, %v210
        %v218 = vlaneseq
        %v219 = vshrl.u32 %v218, 7
        %v220 = vsub.s32 0, %v219
        %v221 = vrot.slane %v215, %v220
        %v227 = vunpack.c.l.b16 %v211
        %v228 = vunpack.c.l.b16 %v212
        %v229 = vunpack.c.l.b16 %v213
        %v230 = vunpack.c.l.b16 %v214
        %v231 = vpack.c.b16 %v228, %v227
        %v232 = vpack.c.b16 %v230, %v229
        %vm235 = vcmask 261120
        %v237 = vsel %vm235, %v216, 0
        %239 = vmatprep.subr.bf16.mxu0 0
        %240 = vmatpush1.bf16.msra.mxu0 %v231
        %241 = vmatprep.subr.bf16.mxu0 0
        %242 = vmatpush1.bf16.msra.mxu0 %v232
        %243 = vmatprep.subr.bf16.mxu0 0
        %244 = vmatpush1.bf16.msra.mxu0 0
        %245 = vmatprep.subr.bf16.mxu0 0
        %246 = vmatpush1.bf16.msra.mxu0 0
        %247 = vmatprep.subr.bf16.mxu0 0
        %248 = vmatpush1.bf16.msra.mxu0 0
        %249 = vmatprep.subr.bf16.mxu0 0
        %250 = vmatpush1.bf16.msra.mxu0 0
        %251 = vmatprep.subr.bf16.mxu0 0
        %252 = vmatpush1.bf16.msra.mxu0 0
        %253 = vmatprep.subr.bf16.mxu0 0
        %254 = vmatpush1.bf16.msra.mxu0 0
        %255 = vmatprep.subr.bf16.mxu0 0
        %256 = vmatpush1.bf16.msra.mxu0 0
        %257 = vmatprep.subr.bf16.mxu0 0
        %258 = vmatpush1.bf16.msra.mxu0 0
        %259 = vmatprep.subr.bf16.mxu0 0
        %260 = vmatpush1.bf16.msra.mxu0 0
        %261 = vmatprep.subr.bf16.mxu0 0
        %262 = vmatpush1.bf16.msra.mxu0 0
        %263 = vmatprep.subr.bf16.mxu0 0
        %264 = vmatpush1.bf16.msra.mxu0 0
        %265 = vmatprep.subr.bf16.mxu0 0
        %266 = vmatpush1.bf16.msra.mxu0 0
        %267 = vmatprep.subr.bf16.mxu0 0
        %268 = vmatpush1.bf16.msra.mxu0 0
        %269 = vmatprep.subr.bf16.mxu0 0
        %270 = vmatpush1.bf16.msra.mxu0 0
        %271 = vmatprep.mubr.bf16.mxu0 0
        %272 = vmatmul.mubr.bf16.gmra.mrb[0].mxu0 %v237
        %v273 = vpop.f32.mrb[0].mxu0
        %v274 = vadd.f32 %v221, %v273
        %v275 = vpop.f32.mrb[0].mxu0
        %v276 = vpop.f32.mrb[0].mxu0
        %v277 = vpop.f32.mrb[0].mxu0
        %278 = vdwg.mxu0
        %vm279 = vcmask 779264
        %280 = vst.msk [vmem:[#allocation3] sm:$0x3] %vm279, %v274
        %v281 = vld [vmem:[%s183] sm:$0x1]
        %v282 = vld [vmem:[%s183 + $0x8] sm:$0x1]
        %v283 = vld [vmem:[#allocation3] sm:$0x3]
        %v285 = vrot.slane %v283, 1
        %v288 = vadd.f32 %v281, %v283
        %v289 = vadd.f32 %v282, %v285
        %v290 = vxor.u32 %v288, 2147483648
        %v291 = vxor.u32 %v289, 2147483648
        %v292 = vmul.f32 %v290, 1.442695
        %v293 = vpow.pop %v292
        %v294 = vmul.f32 %v291, 1.442695
        %v295 = vpow.pop %v294
        %v296 = vadd.f32 %v293, 1.0
        %v297 = vadd.f32 %v295, 1.0
        %v298 = vrcp.pop %v296
        %v299 = vmul.f32 1.0, %v298
        %v300 = vrcp.pop %v297
        %v301 = vmul.f32 1.0, %v300
        %302 = vrot.lane.b32.xlu0 %v283, 64
        %v303 = vpop.permute.xlu0 %302
        %304 = vrot.lane.b32.xlu0 %v285, 64
        %v305 = vpop.permute.xlu0 %304
        %v308 = vmul.f32 %v299, %v303
        %v309 = vmul.f32 %v301, %v305
        %312 = vrot.lane.b32.xlu0 %v308, 64
        %v313 = vpop.permute.xlu0 %312
        %314 = vrot.lane.b32.xlu0 %v309, 64
        %v315 = vpop.permute.xlu0 %314
        %v318 = vadd.f32 %v281, %v313
        %v319 = vadd.f32 %v282, %v315
        %v320 = vtanh.pop %v318
        %v321 = vtanh.pop %v319
        %v322 = vsub.f32 1.0, %v299
        %v323 = vsub.f32 1.0, %v301
        %326 = vrot.lane.b32.xlu0 %v320, 96
        %v327 = vpop.permute.xlu0 %326
        %328 = vrot.lane.b32.xlu0 %v321, 96
        %v329 = vpop.permute.xlu0 %328
        %v332 = vmul.f32 %v322, %v327
        %v333 = vmul.f32 %v323, %v329
        %v335 = vrot.slane %v210, 1
        %336 = vrot.lane.b32.xlu0 %v210, 32
        %v337 = vpop.permute.xlu0 %336
        %338 = vrot.lane.b32.xlu0 %v335, 32
        %v339 = vpop.permute.xlu0 %338
        %v342 = vmul.f32 %v299, %v337
        %v343 = vmul.f32 %v301, %v339
        %v344 = vadd.f32 %v332, %v342
        %v345 = vadd.f32 %v333, %v343
        %348 = vrot.lane.b32.xlu0 %v344, 96
        %v349 = vpop.permute.xlu0 %348
        %350 = vrot.lane.b32.xlu0 %v345, 96
        %v351 = vpop.permute.xlu0 %350
        %vm354 = vcmask 253952
        %355 = vst.msk [vmem:[%s202] sm:$0x1] %vm354, %v349
        %356 = vst.msk [vmem:[%s202 + $0x8] sm:$0x1] %vm354, %v351
        %v357 = vpack.c.bf16 %v344, %v344
        %v358 = vpack.c.bf16 %v345, %v345
        %v361 = vunpack.c.l.b16 %v357
        %v362 = vunpack.c.l.b16 %v358
        %v363 = vrot.slane %v362, 7
        %vm364 = vcmask 1041409
        %v365 = vsel %vm364, %v363, %v361
        %v366 = vpack.c.b16 %v365, %v365
        %367 = vrot.lane.b32.xlu0 %v366, 96
        %v368 = vpop.permute.xlu0 %367
        %v370 = vsel %vm235, %v368, 0
        %372 = vmatprep.subr.bf16.mxu0 0
        %373 = vmatpush1.bf16.msra.mxu0 %v231
        %374 = vmatprep.subr.bf16.mxu0 0
        %375 = vmatpush1.bf16.msra.mxu0 %v232
        %376 = vmatprep.subr.bf16.mxu0 0
        %377 = vmatpush1.bf16.msra.mxu0 0
        %378 = vmatprep.subr.bf16.mxu0 0
        %379 = vmatpush1.bf16.msra.mxu0 0
        %380 = vmatprep.subr.bf16.mxu0 0
        %381 = vmatpush1.bf16.msra.mxu0 0
        %382 = vmatprep.subr.bf16.mxu0 0
        %383 = vmatpush1.bf16.msra.mxu0 0
        %384 = vmatprep.subr.bf16.mxu0 0
        %385 = vmatpush1.bf16.msra.mxu0 0
        %386 = vmatprep.subr.bf16.mxu0 0
        %387 = vmatpush1.bf16.msra.mxu0 0
        %388 = vmatprep.subr.bf16.mxu0 0
        %389 = vmatpush1.bf16.msra.mxu0 0
        %390 = vmatprep.subr.bf16.mxu0 0
        %391 = vmatpush1.bf16.msra.mxu0 0
        %392 = vmatprep.subr.bf16.mxu0 0
        %393 = vmatpush1.bf16.msra.mxu0 0
        %394 = vmatprep.subr.bf16.mxu0 0
        %395 = vmatpush1.bf16.msra.mxu0 0
        %396 = vmatprep.subr.bf16.mxu0 0
        %397 = vmatpush1.bf16.msra.mxu0 0
        %398 = vmatprep.subr.bf16.mxu0 0
        %399 = vmatpush1.bf16.msra.mxu0 0
        %400 = vmatprep.subr.bf16.mxu0 0
        %401 = vmatpush1.bf16.msra.mxu0 0
        %402 = vmatprep.subr.bf16.mxu0 0
        %403 = vmatpush1.bf16.msra.mxu0 0
        %404 = vmatprep.mubr.bf16.mxu0 0
        %405 = vmatmul.mubr.bf16.gmra.mrb[0].mxu0 %v370
        %v406 = vpop.f32.mrb[0].mxu0
        %v407 = vadd.f32 %v221, %v406
        %v408 = vpop.f32.mrb[0].mxu0
        %v409 = vpop.f32.mrb[0].mxu0
        %v410 = vpop.f32.mrb[0].mxu0
        %411 = vdwg.mxu0
        %412 = vst.msk [vmem:[#allocation3] sm:$0x3] %vm279, %v407
        %v413 = vld [vmem:[%s183 + $0x1] sm:$0x1]
        %v414 = vld [vmem:[%s183 + $0x9] sm:$0x1]
        %v415 = vld [vmem:[#allocation3] sm:$0x3]
        %v417 = vrot.slane %v415, 1
        %v420 = vadd.f32 %v413, %v415
        %v421 = vadd.f32 %v414, %v417
        %v422 = vxor.u32 %v420, 2147483648
        %v423 = vxor.u32 %v421, 2147483648
        %v424 = vmul.f32 %v422, 1.442695
        %v425 = vpow.pop %v424
        %v426 = vmul.f32 %v423, 1.442695
        %v427 = vpow.pop %v426
        %v428 = vadd.f32 %v425, 1.0
        %v429 = vadd.f32 %v427, 1.0
        %v430 = vrcp.pop %v428
        %v431 = vmul.f32 1.0, %v430
        %v432 = vrcp.pop %v429
        %v433 = vmul.f32 1.0, %v432
        %434 = vrot.lane.b32.xlu0 %v415, 64
        %v435 = vpop.permute.xlu0 %434
        %436 = vrot.lane.b32.xlu0 %v417, 64
        %v437 = vpop.permute.xlu0 %436
        %v440 = vmul.f32 %v431, %v435
        %v441 = vmul.f32 %v433, %v437
        %444 = vrot.lane.b32.xlu0 %v440, 64
        %v445 = vpop.permute.xlu0 %444
        %446 = vrot.lane.b32.xlu0 %v441, 64
        %v447 = vpop.permute.xlu0 %446
        %v450 = vadd.f32 %v413, %v445
        %v451 = vadd.f32 %v414, %v447
        %v452 = vtanh.pop %v450
        %v453 = vtanh.pop %v451
        %v454 = vsub.f32 1.0, %v431
        %v455 = vsub.f32 1.0, %v433
        %458 = vrot.lane.b32.xlu0 %v452, 96
        %v459 = vpop.permute.xlu0 %458
        %460 = vrot.lane.b32.xlu0 %v453, 96
        %v461 = vpop.permute.xlu0 %460
        %v464 = vmul.f32 %v454, %v459
        %v465 = vmul.f32 %v455, %v461
        %v466 = vmul.f32 %v431, %v344
        %v467 = vmul.f32 %v433, %v345
        %v468 = vadd.f32 %v464, %v466
        %v469 = vadd.f32 %v465, %v467
        %472 = vrot.lane.b32.xlu0 %v468, 96
        %v473 = vpop.permute.xlu0 %472
        %474 = vrot.lane.b32.xlu0 %v469, 96
        %v475 = vpop.permute.xlu0 %474
        %478 = vst.msk [vmem:[%s202 + $0x1] sm:$0x1] %vm354, %v473
        %479 = vst.msk [vmem:[%s202 + $0x9] sm:$0x1] %vm354, %v475
        %v480 = vpack.c.bf16 %v468, %v468
        %v481 = vpack.c.bf16 %v469, %v469
        %v484 = vunpack.c.l.b16 %v480
        %v485 = vunpack.c.l.b16 %v481
        %v486 = vrot.slane %v485, 7
        %v487 = vsel %vm364, %v486, %v484
        %v488 = vpack.c.b16 %v487, %v487
        %489 = vrot.lane.b32.xlu0 %v488, 96
        %v490 = vpop.permute.xlu0 %489
        %v492 = vsel %vm235, %v490, 0
        %494 = vmatprep.subr.bf16.mxu0 0
        %495 = vmatpush1.bf16.msra.mxu0 %v231
        %496 = vmatprep.subr.bf16.mxu0 0
        %497 = vmatpush1.bf16.msra.mxu0 %v232
        %498 = vmatprep.subr.bf16.mxu0 0
        %499 = vmatpush1.bf16.msra.mxu0 0
        %500 = vmatprep.subr.bf16.mxu0 0
        %501 = vmatpush1.bf16.msra.mxu0 0
        %502 = vmatprep.subr.bf16.mxu0 0
        %503 = vmatpush1.bf16.msra.mxu0 0
        %504 = vmatprep.subr.bf16.mxu0 0
        %505 = vmatpush1.bf16.msra.mxu0 0
        %506 = vmatprep.subr.bf16.mxu0 0
        %507 = vmatpush1.bf16.msra.mxu0 0
        %508 = vmatprep.subr.bf16.mxu0 0
        %509 = vmatpush1.bf16.msra.mxu0 0
        %510 = vmatprep.subr.bf16.mxu0 0
        %511 = vmatpush1.bf16.msra.mxu0 0
        %512 = vmatprep.subr.bf16.mxu0 0
        %513 = vmatpush1.bf16.msra.mxu0 0
        %514 = vmatprep.subr.bf16.mxu0 0
        %515 = vmatpush1.bf16.msra.mxu0 0
        %516 = vmatprep.subr.bf16.mxu0 0
        %517 = vmatpush1.bf16.msra.mxu0 0
        %518 = vmatprep.subr.bf16.mxu0 0
        %519 = vmatpush1.bf16.msra.mxu0 0
        %520 = vmatprep.subr.bf16.mxu0 0
        %521 = vmatpush1.bf16.msra.mxu0 0
        %522 = vmatprep.subr.bf16.mxu0 0
        %523 = vmatpush1.bf16.msra.mxu0 0
        %524 = vmatprep.subr.bf16.mxu0 0
        %525 = vmatpush1.bf16.msra.mxu0 0
        %526 = vmatprep.mubr.bf16.mxu0 0
        %527 = vmatmul.mubr.bf16.gmra.mrb[0].mxu0 %v492
        %v528 = vpop.f32.mrb[0].mxu0
        %v529 = vadd.f32 %v221, %v528
        %v530 = vpop.f32.mrb[0].mxu0
        %v531 = vpop.f32.mrb[0].mxu0
        %v532 = vpop.f32.mrb[0].mxu0
        %533 = vdwg.mxu0
        %534 = vst.msk [vmem:[#allocation3] sm:$0x3] %vm279, %v529
        %v535 = vld [vmem:[%s183 + $0x2] sm:$0x1]
        %v536 = vld [vmem:[%s183 + $0xa] sm:$0x1]
        %v537 = vld [vmem:[#allocation3] sm:$0x3]
        %v539 = vrot.slane %v537, 1
        %v542 = vadd.f32 %v535, %v537
        %v543 = vadd.f32 %v536, %v539
        %v544 = vxor.u32 %v542, 2147483648
        %v545 = vxor.u32 %v543, 2147483648
        %v546 = vmul.f32 %v544, 1.442695
        %v547 = vpow.pop %v546
        %v548 = vmul.f32 %v545, 1.442695
        %v549 = vpow.pop %v548
        %v550 = vadd.f32 %v547, 1.0
        %v551 = vadd.f32 %v549, 1.0
        %v552 = vrcp.pop %v550
        %v553 = vmul.f32 1.0, %v552
        %v554 = vrcp.pop %v551
        %v555 = vmul.f32 1.0, %v554
        %556 = vrot.lane.b32.xlu0 %v537, 64
        %v557 = vpop.permute.xlu0 %556
        %558 = vrot.lane.b32.xlu0 %v539, 64
        %v559 = vpop.permute.xlu0 %558
        %v562 = vmul.f32 %v553, %v557
        %v563 = vmul.f32 %v555, %v559
        %566 = vrot.lane.b32.xlu0 %v562, 64
        %v567 = vpop.permute.xlu0 %566
        %568 = vrot.lane.b32.xlu0 %v563, 64
        %v569 = vpop.permute.xlu0 %568
        %v572 = vadd.f32 %v535, %v567
        %v573 = vadd.f32 %v536, %v569
        %v574 = vtanh.pop %v572
        %v575 = vtanh.pop %v573
        %v576 = vsub.f32 1.0, %v553
        %v577 = vsub.f32 1.0, %v555
        %580 = vrot.lane.b32.xlu0 %v574, 96
        %v581 = vpop.permute.xlu0 %580
        %582 = vrot.lane.b32.xlu0 %v575, 96
        %v583 = vpop.permute.xlu0 %582
        %v586 = vmul.f32 %v576, %v581
        %v587 = vmul.f32 %v577, %v583
        %v588 = vmul.f32 %v553, %v468
        %v589 = vmul.f32 %v555, %v469
        %v590 = vadd.f32 %v586, %v588
        %v591 = vadd.f32 %v587, %v589
        %594 = vrot.lane.b32.xlu0 %v590, 96
        %v595 = vpop.permute.xlu0 %594
        %596 = vrot.lane.b32.xlu0 %v591, 96
        %v597 = vpop.permute.xlu0 %596
        %600 = vst.msk [vmem:[%s202 + $0x2] sm:$0x1] %vm354, %v595
        %601 = vst.msk [vmem:[%s202 + $0xa] sm:$0x1] %vm354, %v597
        %v602 = vpack.c.bf16 %v590, %v590
        %v603 = vpack.c.bf16 %v591, %v591
        %v606 = vunpack.c.l.b16 %v602
        %v607 = vunpack.c.l.b16 %v603
        %v608 = vrot.slane %v607, 7
        %v609 = vsel %vm364, %v608, %v606
        %v610 = vpack.c.b16 %v609, %v609
        %611 = vrot.lane.b32.xlu0 %v610, 96
        %v612 = vpop.permute.xlu0 %611
        %v614 = vsel %vm235, %v612, 0
        %616 = vmatprep.subr.bf16.mxu0 0
        %617 = vmatpush1.bf16.msra.mxu0 %v231
        %618 = vmatprep.subr.bf16.mxu0 0
        %619 = vmatpush1.bf16.msra.mxu0 %v232
        %620 = vmatprep.subr.bf16.mxu0 0
        %621 = vmatpush1.bf16.msra.mxu0 0
        %622 = vmatprep.subr.bf16.mxu0 0
        %623 = vmatpush1.bf16.msra.mxu0 0
        %624 = vmatprep.subr.bf16.mxu0 0
        %625 = vmatpush1.bf16.msra.mxu0 0
        %626 = vmatprep.subr.bf16.mxu0 0
        %627 = vmatpush1.bf16.msra.mxu0 0
        %628 = vmatprep.subr.bf16.mxu0 0
        %629 = vmatpush1.bf16.msra.mxu0 0
        %630 = vmatprep.subr.bf16.mxu0 0
        %631 = vmatpush1.bf16.msra.mxu0 0
        %632 = vmatprep.subr.bf16.mxu0 0
        %633 = vmatpush1.bf16.msra.mxu0 0
        %634 = vmatprep.subr.bf16.mxu0 0
        %635 = vmatpush1.bf16.msra.mxu0 0
        %636 = vmatprep.subr.bf16.mxu0 0
        %637 = vmatpush1.bf16.msra.mxu0 0
        %638 = vmatprep.subr.bf16.mxu0 0
        %639 = vmatpush1.bf16.msra.mxu0 0
        %640 = vmatprep.subr.bf16.mxu0 0
        %641 = vmatpush1.bf16.msra.mxu0 0
        %642 = vmatprep.subr.bf16.mxu0 0
        %643 = vmatpush1.bf16.msra.mxu0 0
        %644 = vmatprep.subr.bf16.mxu0 0
        %645 = vmatpush1.bf16.msra.mxu0 0
        %646 = vmatprep.subr.bf16.mxu0 0
        %647 = vmatpush1.bf16.msra.mxu0 0
        %648 = vmatprep.mubr.bf16.mxu0 0
        %649 = vmatmul.mubr.bf16.gmra.mrb[0].mxu0 %v614
        %v650 = vpop.f32.mrb[0].mxu0
        %v651 = vadd.f32 %v221, %v650
        %v652 = vpop.f32.mrb[0].mxu0
        %v653 = vpop.f32.mrb[0].mxu0
        %v654 = vpop.f32.mrb[0].mxu0
        %655 = vdwg.mxu0
        %656 = vst.msk [vmem:[#allocation3] sm:$0x3] %vm279, %v651
        %v657 = vld [vmem:[%s183 + $0x3] sm:$0x1]
        %v658 = vld [vmem:[%s183 + $0xb] sm:$0x1]
        %v659 = vld [vmem:[#allocation3] sm:$0x3]
        %v661 = vrot.slane %v659, 1
        %v664 = vadd.f32 %v657, %v659
        %v665 = vadd.f32 %v658, %v661
        %v666 = vxor.u32 %v664, 2147483648
        %v667 = vxor.u32 %v665, 2147483648
        %v668 = vmul.f32 %v666, 1.442695
        %v669 = vpow.pop %v668
        %v670 = vmul.f32 %v667, 1.442695
        %v671 = vpow.pop %v670
        %v672 = vadd.f32 %v669, 1.0
        %v673 = vadd.f32 %v671, 1.0
        %v674 = vrcp.pop %v672
        %v675 = vmul.f32 1.0, %v674
        %v676 = vrcp.pop %v673
        %v677 = vmul.f32 1.0, %v676
        %678 = vrot.lane.b32.xlu0 %v659, 64
        %v679 = vpop.permute.xlu0 %678
        %680 = vrot.lane.b32.xlu0 %v661, 64
        %v681 = vpop.permute.xlu0 %680
        %v684 = vmul.f32 %v675, %v679
        %v685 = vmul.f32 %v677, %v681
        %688 = vrot.lane.b32.xlu0 %v684, 64
        %v689 = vpop.permute.xlu0 %688
        %690 = vrot.lane.b32.xlu0 %v685, 64
        %v691 = vpop.permute.xlu0 %690
        %v694 = vadd.f32 %v657, %v689
        %v695 = vadd.f32 %v658, %v691
        %v696 = vtanh.pop %v694
        %v697 = vtanh.pop %v695
        %v698 = vsub.f32 1.0, %v675
        %v699 = vsub.f32 1.0, %v677
        %702 = vrot.lane.b32.xlu0 %v696, 96
        %v703 = vpop.permute.xlu0 %702
        %704 = vrot.lane.b32.xlu0 %v697, 96
        %v705 = vpop.permute.xlu0 %704
        %v708 = vmul.f32 %v698, %v703
        %v709 = vmul.f32 %v699, %v705
        %v710 = vmul.f32 %v675, %v590
        %v711 = vmul.f32 %v677, %v591
        %v712 = vadd.f32 %v708, %v710
        %v713 = vadd.f32 %v709, %v711
        %716 = vrot.lane.b32.xlu0 %v712, 96
        %v717 = vpop.permute.xlu0 %716
        %718 = vrot.lane.b32.xlu0 %v713, 96
        %v719 = vpop.permute.xlu0 %718
        %722 = vst.msk [vmem:[%s202 + $0x3] sm:$0x1] %vm354, %v717
        %723 = vst.msk [vmem:[%s202 + $0xb] sm:$0x1] %vm354, %v719
        %v724 = vpack.c.bf16 %v712, %v712
        %v725 = vpack.c.bf16 %v713, %v713
        %v728 = vunpack.c.l.b16 %v724
        %v729 = vunpack.c.l.b16 %v725
        %v730 = vrot.slane %v729, 7
        %v731 = vsel %vm364, %v730, %v728
        %v732 = vpack.c.b16 %v731, %v731
        %733 = vrot.lane.b32.xlu0 %v732, 96
        %v734 = vpop.permute.xlu0 %733
        %v736 = vsel %vm235, %v734, 0
        %738 = vmatprep.subr.bf16.mxu0 0
        %739 = vmatpush1.bf16.msra.mxu0 %v231
        %740 = vmatprep.subr.bf16.mxu0 0
        %741 = vmatpush1.bf16.msra.mxu0 %v232
        %742 = vmatprep.subr.bf16.mxu0 0
        %743 = vmatpush1.bf16.msra.mxu0 0
        %744 = vmatprep.subr.bf16.mxu0 0
        %745 = vmatpush1.bf16.msra.mxu0 0
        %746 = vmatprep.subr.bf16.mxu0 0
        %747 = vmatpush1.bf16.msra.mxu0 0
        %748 = vmatprep.subr.bf16.mxu0 0
        %749 = vmatpush1.bf16.msra.mxu0 0
        %750 = vmatprep.subr.bf16.mxu0 0
        %751 = vmatpush1.bf16.msra.mxu0 0
        %752 = vmatprep.subr.bf16.mxu0 0
        %753 = vmatpush1.bf16.msra.mxu0 0
        %754 = vmatprep.subr.bf16.mxu0 0
        %755 = vmatpush1.bf16.msra.mxu0 0
        %756 = vmatprep.subr.bf16.mxu0 0
        %757 = vmatpush1.bf16.msra.mxu0 0
        %758 = vmatprep.subr.bf16.mxu0 0
        %759 = vmatpush1.bf16.msra.mxu0 0
        %760 = vmatprep.subr.bf16.mxu0 0
        %761 = vmatpush1.bf16.msra.mxu0 0
        %762 = vmatprep.subr.bf16.mxu0 0
        %763 = vmatpush1.bf16.msra.mxu0 0
        %764 = vmatprep.subr.bf16.mxu0 0
        %765 = vmatpush1.bf16.msra.mxu0 0
        %766 = vmatprep.subr.bf16.mxu0 0
        %767 = vmatpush1.bf16.msra.mxu0 0
        %768 = vmatprep.subr.bf16.mxu0 0
        %769 = vmatpush1.bf16.msra.mxu0 0
        %770 = vmatprep.mubr.bf16.mxu0 0
        %771 = vmatmul.mubr.bf16.gmra.mrb[0].mxu0 %v736
        %v772 = vpop.f32.mrb[0].mxu0
        %v773 = vadd.f32 %v221, %v772
        %v774 = vpop.f32.mrb[0].mxu0
        %v775 = vpop.f32.mrb[0].mxu0
        %v776 = vpop.f32.mrb[0].mxu0
        %777 = vdwg.mxu0
        %778 = vst.msk [vmem:[#allocation3] sm:$0x3] %vm279, %v773
        %v779 = vld [vmem:[%s183 + $0x4] sm:$0x1]
        %v780 = vld [vmem:[%s183 + $0xc] sm:$0x1]
        %v781 = vld [vmem:[#allocation3] sm:$0x3]
        %v783 = vrot.slane %v781, 1
        %v786 = vadd.f32 %v779, %v781
        %v787 = vadd.f32 %v780, %v783
        %v788 = vxor.u32 %v786, 2147483648
        %v789 = vxor.u32 %v787, 2147483648
        %v790 = vmul.f32 %v788, 1.442695
        %v791 = vpow.pop %v790
        %v792 = vmul.f32 %v789, 1.442695
        %v793 = vpow.pop %v792
        %v794 = vadd.f32 %v791, 1.0
        %v795 = vadd.f32 %v793, 1.0
        %v796 = vrcp.pop %v794
        %v797 = vmul.f32 1.0, %v796
        %v798 = vrcp.pop %v795
        %v799 = vmul.f32 1.0, %v798
        %800 = vrot.lane.b32.xlu0 %v781, 64
        %v801 = vpop.permute.xlu0 %800
        %802 = vrot.lane.b32.xlu0 %v783, 64
        %v803 = vpop.permute.xlu0 %802
        %v806 = vmul.f32 %v797, %v801
        %v807 = vmul.f32 %v799, %v803
        %810 = vrot.lane.b32.xlu0 %v806, 64
        %v811 = vpop.permute.xlu0 %810
        %812 = vrot.lane.b32.xlu0 %v807, 64
        %v813 = vpop.permute.xlu0 %812
        %v816 = vadd.f32 %v779, %v811
        %v817 = vadd.f32 %v780, %v813
        %v818 = vtanh.pop %v816
        %v819 = vtanh.pop %v817
        %v820 = vsub.f32 1.0, %v797
        %v821 = vsub.f32 1.0, %v799
        %824 = vrot.lane.b32.xlu0 %v818, 96
        %v825 = vpop.permute.xlu0 %824
        %826 = vrot.lane.b32.xlu0 %v819, 96
        %v827 = vpop.permute.xlu0 %826
        %v830 = vmul.f32 %v820, %v825
        %v831 = vmul.f32 %v821, %v827
        %v832 = vmul.f32 %v797, %v712
        %v833 = vmul.f32 %v799, %v713
        %v834 = vadd.f32 %v830, %v832
        %v835 = vadd.f32 %v831, %v833
        %838 = vrot.lane.b32.xlu0 %v834, 96
        %v839 = vpop.permute.xlu0 %838
        %840 = vrot.lane.b32.xlu0 %v835, 96
        %v841 = vpop.permute.xlu0 %840
        %844 = vst.msk [vmem:[%s202 + $0x4] sm:$0x1] %vm354, %v839
        %845 = vst.msk [vmem:[%s202 + $0xc] sm:$0x1] %vm354, %v841
        %v846 = vpack.c.bf16 %v834, %v834
        %v847 = vpack.c.bf16 %v835, %v835
        %v850 = vunpack.c.l.b16 %v846
        %v851 = vunpack.c.l.b16 %v847
        %v852 = vrot.slane %v851, 7
        %v853 = vsel %vm364, %v852, %v850
        %v854 = vpack.c.b16 %v853, %v853
        %855 = vrot.lane.b32.xlu0 %v854, 96
        %v856 = vpop.permute.xlu0 %855
        %v858 = vsel %vm235, %v856, 0
        %860 = vmatprep.subr.bf16.mxu0 0
        %861 = vmatpush1.bf16.msra.mxu0 %v231
        %862 = vmatprep.subr.bf16.mxu0 0
        %863 = vmatpush1.bf16.msra.mxu0 %v232
        %864 = vmatprep.subr.bf16.mxu0 0
        %865 = vmatpush1.bf16.msra.mxu0 0
        %866 = vmatprep.subr.bf16.mxu0 0
        %867 = vmatpush1.bf16.msra.mxu0 0
        %868 = vmatprep.subr.bf16.mxu0 0
        %869 = vmatpush1.bf16.msra.mxu0 0
        %870 = vmatprep.subr.bf16.mxu0 0
        %871 = vmatpush1.bf16.msra.mxu0 0
        %872 = vmatprep.subr.bf16.mxu0 0
        %873 = vmatpush1.bf16.msra.mxu0 0
        %874 = vmatprep.subr.bf16.mxu0 0
        %875 = vmatpush1.bf16.msra.mxu0 0
        %876 = vmatprep.subr.bf16.mxu0 0
        %877 = vmatpush1.bf16.msra.mxu0 0
        %878 = vmatprep.subr.bf16.mxu0 0
        %879 = vmatpush1.bf16.msra.mxu0 0
        %880 = vmatprep.subr.bf16.mxu0 0
        %881 = vmatpush1.bf16.msra.mxu0 0
        %882 = vmatprep.subr.bf16.mxu0 0
        %883 = vmatpush1.bf16.msra.mxu0 0
        %884 = vmatprep.subr.bf16.mxu0 0
        %885 = vmatpush1.bf16.msra.mxu0 0
        %886 = vmatprep.subr.bf16.mxu0 0
        %887 = vmatpush1.bf16.msra.mxu0 0
        %888 = vmatprep.subr.bf16.mxu0 0
        %889 = vmatpush1.bf16.msra.mxu0 0
        %890 = vmatprep.subr.bf16.mxu0 0
        %891 = vmatpush1.bf16.msra.mxu0 0
        %892 = vmatprep.mubr.bf16.mxu0 0
        %893 = vmatmul.mubr.bf16.gmra.mrb[0].mxu0 %v858
        %v894 = vpop.f32.mrb[0].mxu0
        %v895 = vadd.f32 %v221, %v894
        %v896 = vpop.f32.mrb[0].mxu0
        %v897 = vpop.f32.mrb[0].mxu0
        %v898 = vpop.f32.mrb[0].mxu0
        %899 = vdwg.mxu0
        %900 = vst.msk [vmem:[#allocation3] sm:$0x3] %vm279, %v895
        %v901 = vld [vmem:[%s183 + $0x5] sm:$0x1]
        %v902 = vld [vmem:[%s183 + $0xd] sm:$0x1]
        %v903 = vld [vmem:[#allocation3] sm:$0x3]
        %v905 = vrot.slane %v903, 1
        %v908 = vadd.f32 %v901, %v903
        %v909 = vadd.f32 %v902, %v905
        %v910 = vxor.u32 %v908, 2147483648
        %v911 = vxor.u32 %v909, 2147483648
        %v912 = vmul.f32 %v910, 1.442695
        %v913 = vpow.pop %v912
        %v914 = vmul.f32 %v911, 1.442695
        %v915 = vpow.pop %v914
        %v916 = vadd.f32 %v913, 1.0
        %v917 = vadd.f32 %v915, 1.0
        %v918 = vrcp.pop %v916
        %v919 = vmul.f32 1.0, %v918
        %v920 = vrcp.pop %v917
        %v921 = vmul.f32 1.0, %v920
        %922 = vrot.lane.b32.xlu0 %v903, 64
        %v923 = vpop.permute.xlu0 %922
        %924 = vrot.lane.b32.xlu0 %v905, 64
        %v925 = vpop.permute.xlu0 %924
        %v928 = vmul.f32 %v919, %v923
        %v929 = vmul.f32 %v921, %v925
        %932 = vrot.lane.b32.xlu0 %v928, 64
        %v933 = vpop.permute.xlu0 %932
        %934 = vrot.lane.b32.xlu0 %v929, 64
        %v935 = vpop.permute.xlu0 %934
        %v938 = vadd.f32 %v901, %v933
        %v939 = vadd.f32 %v902, %v935
        %v940 = vtanh.pop %v938
        %v941 = vtanh.pop %v939
        %v942 = vsub.f32 1.0, %v919
        %v943 = vsub.f32 1.0, %v921
        %946 = vrot.lane.b32.xlu0 %v940, 96
        %v947 = vpop.permute.xlu0 %946
        %948 = vrot.lane.b32.xlu0 %v941, 96
        %v949 = vpop.permute.xlu0 %948
        %v952 = vmul.f32 %v942, %v947
        %v953 = vmul.f32 %v943, %v949
        %v954 = vmul.f32 %v919, %v834
        %v955 = vmul.f32 %v921, %v835
        %v956 = vadd.f32 %v952, %v954
        %v957 = vadd.f32 %v953, %v955
        %960 = vrot.lane.b32.xlu0 %v956, 96
        %v961 = vpop.permute.xlu0 %960
        %962 = vrot.lane.b32.xlu0 %v957, 96
        %v963 = vpop.permute.xlu0 %962
        %966 = vst.msk [vmem:[%s202 + $0x5] sm:$0x1] %vm354, %v961
        %967 = vst.msk [vmem:[%s202 + $0xd] sm:$0x1] %vm354, %v963
        %v968 = vpack.c.bf16 %v956, %v956
        %v969 = vpack.c.bf16 %v957, %v957
        %v972 = vunpack.c.l.b16 %v968
        %v973 = vunpack.c.l.b16 %v969
        %v974 = vrot.slane %v973, 7
        %v975 = vsel %vm364, %v974, %v972
        %v976 = vpack.c.b16 %v975, %v975
        %977 = vrot.lane.b32.xlu0 %v976, 96
        %v978 = vpop.permute.xlu0 %977
        %v980 = vsel %vm235, %v978, 0
        %982 = vmatprep.subr.bf16.mxu0 0
        %983 = vmatpush1.bf16.msra.mxu0 %v231
        %984 = vmatprep.subr.bf16.mxu0 0
        %985 = vmatpush1.bf16.msra.mxu0 %v232
        %986 = vmatprep.subr.bf16.mxu0 0
        %987 = vmatpush1.bf16.msra.mxu0 0
        %988 = vmatprep.subr.bf16.mxu0 0
        %989 = vmatpush1.bf16.msra.mxu0 0
        %990 = vmatprep.subr.bf16.mxu0 0
        %991 = vmatpush1.bf16.msra.mxu0 0
        %992 = vmatprep.subr.bf16.mxu0 0
        %993 = vmatpush1.bf16.msra.mxu0 0
        %994 = vmatprep.subr.bf16.mxu0 0
        %995 = vmatpush1.bf16.msra.mxu0 0
        %996 = vmatprep.subr.bf16.mxu0 0
        %997 = vmatpush1.bf16.msra.mxu0 0
        %998 = vmatprep.subr.bf16.mxu0 0
        %999 = vmatpush1.bf16.msra.mxu0 0
        %1000 = vmatprep.subr.bf16.mxu0 0
        %1001 = vmatpush1.bf16.msra.mxu0 0
        %1002 = vmatprep.subr.bf16.mxu0 0
        %1003 = vmatpush1.bf16.msra.mxu0 0
        %1004 = vmatprep.subr.bf16.mxu0 0
        %1005 = vmatpush1.bf16.msra.mxu0 0
        %1006 = vmatprep.subr.bf16.mxu0 0
        %1007 = vmatpush1.bf16.msra.mxu0 0
        %1008 = vmatprep.subr.bf16.mxu0 0
        %1009 = vmatpush1.bf16.msra.mxu0 0
        %1010 = vmatprep.subr.bf16.mxu0 0
        %1011 = vmatpush1.bf16.msra.mxu0 0
        %1012 = vmatprep.subr.bf16.mxu0 0
        %1013 = vmatpush1.bf16.msra.mxu0 0
        %1014 = vmatprep.mubr.bf16.mxu0 0
        %1015 = vmatmul.mubr.bf16.gmra.mrb[0].mxu0 %v980
        %v1016 = vpop.f32.mrb[0].mxu0
        %v1017 = vadd.f32 %v221, %v1016
        %v1018 = vpop.f32.mrb[0].mxu0
        %v1019 = vpop.f32.mrb[0].mxu0
        %v1020 = vpop.f32.mrb[0].mxu0
        %1021 = vdwg.mxu0
        %1022 = vst.msk [vmem:[#allocation3] sm:$0x3] %vm279, %v1017
        %v1023 = vld [vmem:[%s183 + $0x6] sm:$0x1]
        %v1024 = vld [vmem:[%s183 + $0xe] sm:$0x1]
        %v1025 = vld [vmem:[#allocation3] sm:$0x3]
        %v1027 = vrot.slane %v1025, 1
        %v1030 = vadd.f32 %v1023, %v1025
        %v1031 = vadd.f32 %v1024, %v1027
        %v1032 = vxor.u32 %v1030, 2147483648
        %v1033 = vxor.u32 %v1031, 2147483648
        %v1034 = vmul.f32 %v1032, 1.442695
        %v1035 = vpow.pop %v1034
        %v1036 = vmul.f32 %v1033, 1.442695
        %v1037 = vpow.pop %v1036
        %v1038 = vadd.f32 %v1035, 1.0
        %v1039 = vadd.f32 %v1037, 1.0
        %v1040 = vrcp.pop %v1038
        %v1041 = vmul.f32 1.0, %v1040
        %v1042 = vrcp.pop %v1039
        %v1043 = vmul.f32 1.0, %v1042
        %1044 = vrot.lane.b32.xlu0 %v1025, 64
        %v1045 = vpop.permute.xlu0 %1044
        %1046 = vrot.lane.b32.xlu0 %v1027, 64
        %v1047 = vpop.permute.xlu0 %1046
        %v1050 = vmul.f32 %v1041, %v1045
        %v1051 = vmul.f32 %v1043, %v1047
        %1054 = vrot.lane.b32.xlu0 %v1050, 64
        %v1055 = vpop.permute.xlu0 %1054
        %1056 = vrot.lane.b32.xlu0 %v1051, 64
        %v1057 = vpop.permute.xlu0 %1056
        %v1060 = vadd.f32 %v1023, %v1055
        %v1061 = vadd.f32 %v1024, %v1057
        %v1062 = vtanh.pop %v1060
        %v1063 = vtanh.pop %v1061
        %v1064 = vsub.f32 1.0, %v1041
        %v1065 = vsub.f32 1.0, %v1043
        %1068 = vrot.lane.b32.xlu0 %v1062, 96
        %v1069 = vpop.permute.xlu0 %1068
        %1070 = vrot.lane.b32.xlu0 %v1063, 96
        %v1071 = vpop.permute.xlu0 %1070
        %v1074 = vmul.f32 %v1064, %v1069
        %v1075 = vmul.f32 %v1065, %v1071
        %v1076 = vmul.f32 %v1041, %v956
        %v1077 = vmul.f32 %v1043, %v957
        %v1078 = vadd.f32 %v1074, %v1076
        %v1079 = vadd.f32 %v1075, %v1077
        %1082 = vrot.lane.b32.xlu0 %v1078, 96
        %v1083 = vpop.permute.xlu0 %1082
        %1084 = vrot.lane.b32.xlu0 %v1079, 96
        %v1085 = vpop.permute.xlu0 %1084
        %1088 = vst.msk [vmem:[%s202 + $0x6] sm:$0x1] %vm354, %v1083
        %1089 = vst.msk [vmem:[%s202 + $0xe] sm:$0x1] %vm354, %v1085
        %v1090 = vpack.c.bf16 %v1078, %v1078
        %v1091 = vpack.c.bf16 %v1079, %v1079
        %v1094 = vunpack.c.l.b16 %v1090
        %v1095 = vunpack.c.l.b16 %v1091
        %v1096 = vrot.slane %v1095, 7
        %v1097 = vsel %vm364, %v1096, %v1094
        %v1098 = vpack.c.b16 %v1097, %v1097
        %1099 = vrot.lane.b32.xlu0 %v1098, 96
        %v1100 = vpop.permute.xlu0 %1099
        %v1102 = vsel %vm235, %v1100, 0
        %1104 = vmatprep.subr.bf16.mxu0 0
        %1105 = vmatpush1.bf16.msra.mxu0 %v231
        %1106 = vmatprep.subr.bf16.mxu0 0
        %1107 = vmatpush1.bf16.msra.mxu0 %v232
        %1108 = vmatprep.subr.bf16.mxu0 0
        %1109 = vmatpush1.bf16.msra.mxu0 0
        %1110 = vmatprep.subr.bf16.mxu0 0
        %1111 = vmatpush1.bf16.msra.mxu0 0
        %1112 = vmatprep.subr.bf16.mxu0 0
        %1113 = vmatpush1.bf16.msra.mxu0 0
        %1114 = vmatprep.subr.bf16.mxu0 0
        %1115 = vmatpush1.bf16.msra.mxu0 0
        %1116 = vmatprep.subr.bf16.mxu0 0
        %1117 = vmatpush1.bf16.msra.mxu0 0
        %1118 = vmatprep.subr.bf16.mxu0 0
        %1119 = vmatpush1.bf16.msra.mxu0 0
        %1120 = vmatprep.subr.bf16.mxu0 0
        %1121 = vmatpush1.bf16.msra.mxu0 0
        %1122 = vmatprep.subr.bf16.mxu0 0
        %1123 = vmatpush1.bf16.msra.mxu0 0
        %1124 = vmatprep.subr.bf16.mxu0 0
        %1125 = vmatpush1.bf16.msra.mxu0 0
        %1126 = vmatprep.subr.bf16.mxu0 0
        %1127 = vmatpush1.bf16.msra.mxu0 0
        %1128 = vmatprep.subr.bf16.mxu0 0
        %1129 = vmatpush1.bf16.msra.mxu0 0
        %1130 = vmatprep.subr.bf16.mxu0 0
        %1131 = vmatpush1.bf16.msra.mxu0 0
        %1132 = vmatprep.subr.bf16.mxu0 0
        %1133 = vmatpush1.bf16.msra.mxu0 0
        %1134 = vmatprep.subr.bf16.mxu0 0
        %1135 = vmatpush1.bf16.msra.mxu0 0
        %1136 = vmatprep.mubr.bf16.mxu0 0
        %1137 = vmatmul.mubr.bf16.gmra.mrb[0].mxu0 %v1102
        %v1138 = vpop.f32.mrb[0].mxu0
        %v1139 = vadd.f32 %v221, %v1138
        %v1140 = vpop.f32.mrb[0].mxu0
        %v1141 = vpop.f32.mrb[0].mxu0
        %v1142 = vpop.f32.mrb[0].mxu0
        %1143 = vdwg.mxu0
        %1144 = vst.msk [vmem:[#allocation3] sm:$0x3] %vm279, %v1139
        %v1145 = vld [vmem:[%s183 + $0x7] sm:$0x1]
        %v1146 = vld [vmem:[%s183 + $0xf] sm:$0x1]
        %v1147 = vld [vmem:[#allocation3] sm:$0x3]
        %v1149 = vrot.slane %v1147, 1
        %v1152 = vadd.f32 %v1145, %v1147
        %v1153 = vadd.f32 %v1146, %v1149
        %v1154 = vxor.u32 %v1152, 2147483648
        %v1155 = vxor.u32 %v1153, 2147483648
        %v1156 = vmul.f32 %v1154, 1.442695
        %v1157 = vpow.pop %v1156
        %v1158 = vmul.f32 %v1155, 1.442695
        %v1159 = vpow.pop %v1158
        %v1160 = vadd.f32 %v1157, 1.0
        %v1161 = vadd.f32 %v1159, 1.0
        %v1162 = vrcp.pop %v1160
        %v1163 = vmul.f32 1.0, %v1162
        %v1164 = vrcp.pop %v1161
        %v1165 = vmul.f32 1.0, %v1164
        %1166 = vrot.lane.b32.xlu0 %v1147, 64
        %v1167 = vpop.permute.xlu0 %1166
        %1168 = vrot.lane.b32.xlu0 %v1149, 64
        %v1169 = vpop.permute.xlu0 %1168
        %v1172 = vmul.f32 %v1163, %v1167
        %v1173 = vmul.f32 %v1165, %v1169
        %1176 = vrot.lane.b32.xlu0 %v1172, 64
        %v1177 = vpop.permute.xlu0 %1176
        %1178 = vrot.lane.b32.xlu0 %v1173, 64
        %v1179 = vpop.permute.xlu0 %1178
        %v1182 = vadd.f32 %v1145, %v1177
        %v1183 = vadd.f32 %v1146, %v1179
        %v1184 = vtanh.pop %v1182
        %v1185 = vtanh.pop %v1183
        %v1186 = vsub.f32 1.0, %v1163
        %v1187 = vsub.f32 1.0, %v1165
        %1190 = vrot.lane.b32.xlu0 %v1184, 96
        %v1191 = vpop.permute.xlu0 %1190
        %1192 = vrot.lane.b32.xlu0 %v1185, 96
        %v1193 = vpop.permute.xlu0 %1192
        %v1196 = vmul.f32 %v1186, %v1191
        %v1197 = vmul.f32 %v1187, %v1193
        %v1198 = vmul.f32 %v1163, %v1078
        %v1199 = vmul.f32 %v1165, %v1079
        %v1200 = vadd.f32 %v1196, %v1198
        %v1201 = vadd.f32 %v1197, %v1199
        %1204 = vrot.lane.b32.xlu0 %v1200, 96
        %v1205 = vpop.permute.xlu0 %1204
        %1206 = vrot.lane.b32.xlu0 %v1201, 96
        %v1207 = vpop.permute.xlu0 %1206
        %1210 = vst.msk [vmem:[%s202 + $0x7] sm:$0x1] %vm354, %v1205
        %1211 = vst.msk [vmem:[%s202 + $0xf] sm:$0x1] %vm354, %v1207
        %v1212 = vrot.slane %v1201, 7
        %v1213 = vsel %vm364, %v1212, %v1200
        %1214 = vrot.lane.b32.xlu0 %v1213, 96
        %v1215 = vpop.permute.xlu0 %1214
        %vm1217 = vcmask 254976
        %1218 = vst.msk [vmem:[#allocation2] sm:$0x3] %vm1217, %v1215
        %s1219 = sand.u32 %s90, 1
        %s1220 = sand.u32 %s90, 1
        %s1221 = smul.addr %s1220, 16
        %s1222 = scalar_lea.vmem [#allocation5], %s1221
        // Predicated region
        $region75: #{inception_gru_forward.10} parent=65 // pred_check
          %p1223 = pneg %p100
        $region76: #{inception_gru_forward.10} parent=65 // pred_check_branch
          %1225 = sbr.rel (%p1223) target = $region78
        $region77: #{inception_gru_forward.10} parent=65 // pred_region
          %s1226 = smul.addr %s14, 8
          %s1227 = scalar_lea.vmem %s3, %s1226
          // Predicated region
          $region79: #{inception_gru_forward.10} parent=77 // pred_check
            _
          $region80: #{inception_gru_forward.10} parent=77 // pred_check_branch
            %1229 = sbr.rel (0) target = $region82
          $region81: #{inception_gru_forward.10} parent=77 // pred_region
            // Predicated region
            $region83: #{inception_gru_forward.10} parent=81 // pred_check
              _
            $region84: #{inception_gru_forward.10} parent=81 // pred_check_branch
              %1231 = sbr.rel (0) target = $region86
            $region85: #{inception_gru_forward.10} parent=81 // pred_region
              // Predicated region
              $region98: #{inception_gru_forward.10} parent=85 // pred_check
                _
              $region99: #{inception_gru_forward.10} parent=85 // pred_check_branch
                %1248 = sbr.rel (0) target = $region101
              $region100: #{inception_gru_forward.10} parent=85 // pred_region
                loop: start=0, step=1, limit=1
                $region102: #{inception_gru_forward.10} parent=100 // loop_pre_header
                  _
                $region103: #{inception_gru_forward.10} parent=100 // loop_header
                  %s1250 = sphi 0, %s1254
                  %p1251 = scmp.ge.s32.totalorder %s1250, 1
                  %s1255 = sphi %s1222, %s1222
                  %s1256 = sphi %s1227, %s1227
                $region104: #{inception_gru_forward.10} parent=100 // loop_header_branch
                  %1253 = sbr.rel (%p1251) target = $region108
                $region105: #{inception_gru_forward.10} parent=100 // loop_body
                  %v1257 = vld [vmem:[%s1255] sm:$0xff]
                  %1258 = vst [vmem:[%s1256] sm:$0xff] %v1257
                  %v1259 = vld [vmem:[%s1255 + $0x8] sm:$0xff]
                  %1260 = vst [vmem:[%s1256 + $0x10] sm:$0xff] %v1259
                $region106: #{inception_gru_forward.10} parent=100 // loop_footer
                  %s1254 = sadd.s32 1, %s1250
                $region107: #{inception_gru_forward.10} parent=100 // loop_footer_branch
                  %1249 = sbr.rel target = $region103
                $region108: #{inception_gru_forward.10} parent=100 // loop_exit
                  _
              $region101: #{inception_gru_forward.10} parent=85 // pred_fallthru
                _
              // Predicated region
              $region109: #{inception_gru_forward.10} parent=85 // pred_check
                _
              $region110: #{inception_gru_forward.10} parent=85 // pred_check_branch
                %1262 = sbr.rel target = $region112
              $region111: #{inception_gru_forward.10} parent=85 // pred_region
                _
              $region112: #{inception_gru_forward.10} parent=85 // pred_fallthru
                _
            $region86: #{inception_gru_forward.10} parent=81 // pred_fallthru
              _
            // Predicated region
            $region87: #{inception_gru_forward.10} parent=81 // pred_check
              _
            $region88: #{inception_gru_forward.10} parent=81 // pred_check_branch
              %1233 = sbr.rel target = $region90
            $region89: #{inception_gru_forward.10} parent=81 // pred_region
              loop: start=0, step=1, limit=1
              $region91: #{inception_gru_forward.10} parent=89 // loop_pre_header
                _
              $region92: #{inception_gru_forward.10} parent=89 // loop_header
                %s1236 = sphi 0, %s1240
                %p1237 = scmp.ge.s32.totalorder %s1236, 1
                %s1241 = sphi %s1222, %s1222
                %s1242 = sphi %s1227, %s1227
              $region93: #{inception_gru_forward.10} parent=89 // loop_header_branch
                %1239 = sbr.rel (%p1237) target = $region97
              $region94: #{inception_gru_forward.10} parent=89 // loop_body
                %v1243 = vld [vmem:[%s1241] sm:$0xff]
                %1244 = vst [vmem:[%s1242] sm:$0xff] %v1243
                %v1245 = vld [vmem:[%s1241 + $0x8] sm:$0xff]
                %1246 = vst [vmem:[%s1242 + $0x10] sm:$0xff] %v1245
              $region95: #{inception_gru_forward.10} parent=89 // loop_footer
                %s1240 = sadd.s32 1, %s1236
              $region96: #{inception_gru_forward.10} parent=89 // loop_footer_branch
                %1235 = sbr.rel target = $region92
              $region97: #{inception_gru_forward.10} parent=89 // loop_exit
                _
            $region90: #{inception_gru_forward.10} parent=81 // pred_fallthru
              _
          $region82: #{inception_gru_forward.10} parent=77 // pred_fallthru
            _
          %1263 = vnop
        $region78: #{inception_gru_forward.10} parent=65 // pred_fallthru
          _
      $region66: #{inception_gru_forward.10} parent=5 // pred_fallthru
        _
      %p1264 = scmp.le.s32.totalorder 2, %s9
      // Predicated region
      $region113: #{inception_gru_forward.10} parent=5 // pred_check
        %p1265 = pneg %p1264
      $region114: #{inception_gru_forward.10} parent=5 // pred_check_branch
        %1267 = sbr.rel (%p1265) target = $region116
      $region115: #{inception_gru_forward.10} parent=5 // pred_region
        %s1268 = ssub.s32 %s9, 2
        // Predicated region
        $region117: #{inception_gru_forward.10} parent=115 // pred_check
          %p1269 = pneg %p106
        $region118: #{inception_gru_forward.10} parent=115 // pred_check_branch
          %1271 = sbr.rel (%p1269) target = $region120
        $region119: #{inception_gru_forward.10} parent=115 // pred_region
          %s1272 = sand.u32 %s91, 1
          %s1273 = sand.u32 %s91, 1
          %s1274 = smul.addr %s1273, 16
          %s1275 = scalar_lea.vmem [#allocation5], %s1274
        $region120: #{inception_gru_forward.10} parent=115 // pred_fallthru
          _
      $region116: #{inception_gru_forward.10} parent=5 // pred_fallthru
        _
    $region6: #{inception_gru_forward.10} parent=1 // loop_footer
      %s13 = sadd.s32 1, %s9
    $region7: #{inception_gru_forward.10} parent=1 // loop_footer_branch
      %8 = sbr.rel target = $region3
    $region8: #{inception_gru_forward.10} parent=1 // loop_exit
      _

// kernel: inception_gru_forward.13
$region0: #{inception_gru_forward.13}
  #allocation0 [shape = 'u32[]', space=smem, size = 0x4, offset = 0x4, fixed_abs, tag = 'smem constant byte address 0x4 - core index']
  #allocation1 [shape = 'u32[144,128]{1,0:T(1,128)}', space=vmem, size = 0x12000, scoped, tag = 'internal scratch']
  %s0 = inlined_call_operand.vmem [shape: f32[2,16,32], index: 0, kind: input, shape index: {}]
  %s1 = inlined_call_operand.vmem [shape: f32[2,16,32], index: 1, kind: input, shape index: {}]
  %s2 = inlined_call_operand.vmem [shape: bf16[4,32,3], index: 2, kind: input, shape index: {}]
  %s3 = inlined_call_operand.vmem [shape: f32[1,3], index: 3, kind: input, shape index: {}]
  %s4 = inlined_call_operand.hbm [shape: f32[2,1,3], index: 4, kind: output, shape index: {}]
  %s5 = sld [smem:[#allocation0]]
  $region49: #{inception_gru_forward.13} parent=0
    _
  %s7 = ssub.s32 1, %s5
  %s8 = scalar_select 0, %s7, %s5
  $region1: #{inception_gru_forward.13} parent=0
    #allocation2 [shape = 'u8[1024]{0}', space=vmem, size = 0x400, scoped, tag = 'output window, operand 0']
    #allocation3 [shape = 's32[2]{0}', space=sflag, size = 0x8, scoped, tag = 'scoped memory for inception_gru_forward.13']
    %9 = vsyncpa [#allocation3], 0
    %s10 = scalar_lea.sflag [#allocation3], 1
    %11 = vsyncpa %s10, 0
    loop: start=0, step=1, limit=4
    $region2: #{inception_gru_forward.13} parent=1 // loop_pre_header
      _
    $region3: #{inception_gru_forward.13} parent=1 // loop_header
      %s13 = sphi 0, %s17
      %p14 = scmp.ge.s32.totalorder %s13, 4
      %s23 = sphi 0, %s25
      %s26 = sphi 0, %s23
      %s27 = sphi 0, %s26
      %s43 = sphi 0, %s27
      %s49 = sphi 0, %s51
      %s52 = sphi 0, %s49
      %s53 = sphi 0, %s52
      %s69 = sphi 0, %s53
      %s73 = sphi 0, %s73
      %s75 = sphi 0, %s73
      %s76 = sphi 0, %s75
      %s90 = sphi 0, %s76
      %s94 = sphi 0, %s94
      %s96 = sphi 0, %s94
      %s97 = sphi 0, %s96
      %s111 = sphi 0, %s97
      %s117 = sphi 0, %s119
      %s120 = sphi 0, %s117
      %s121 = sphi 0, %s120
      %s137 = sphi 0, %s121
    $region4: #{inception_gru_forward.13} parent=1 // loop_header_branch
      %16 = sbr.rel (%p14) target = $region8
    $region5: #{inception_gru_forward.13} parent=1 // loop_body
      %s18 = ssub.s32 %s13, 1
      %s19 = ssub.s32 %s13, 2
      %s20 = sadd.s32 %s13, 1
      %s21 = ssub.s32 %s13, %s20
      %p22 = scmp.eq.s32.totalorder %s21, 0
      %s24 = sadd.s32 %s23, 1
      %s25 = scalar_select %p22, %s23, %s24
      %p28 = pneg %p22
      %p29 = scmp.eq.s32.totalorder %s13, 1
      %p30 = por %p28, %p29
      %p31 = scmp.ne.s32.totalorder %s23, %s26
      %p32 = scmp.eq.s32.totalorder %s13, 0
      %p33 = por %p31, %p32
      %p34 = scmp.ne.s32.totalorder %s23, %s26
      %p35 = scmp.eq.s32.totalorder %s18, 1
      %p36 = por %p34, %p35
      %p37 = scmp.ne.s32.totalorder %s26, %s27
      %p38 = scmp.eq.s32.totalorder %s18, 0
      %p39 = por %p37, %p38
      %p40 = scmp.ne.s32.totalorder %s26, %s27
      %p41 = scmp.eq.s32.totalorder %s19, 1
      %p42 = por %p40, %p41
      %p44 = scmp.ne.s32.totalorder %s27, %s43
      %p45 = scmp.eq.s32.totalorder %s19, 0
      %p46 = por %p44, %p45
      %s47 = ssub.s32 %s13, %s20
      %p48 = scmp.eq.s32.totalorder %s47, 0
      %s50 = sadd.s32 %s49, 1
      %s51 = scalar_select %p48, %s49, %s50
      %p54 = pneg %p48
      %p55 = scmp.eq.s32.totalorder %s13, 1
      %p56 = por %p54, %p55
      %p57 = scmp.ne.s32.totalorder %s49, %s52
      %p58 = scmp.eq.s32.totalorder %s13, 0
      %p59 = por %p57, %p58
      %p60 = scmp.ne.s32.totalorder %s49, %s52
      %p61 = scmp.eq.s32.totalorder %s18, 1
      %p62 = por %p60, %p61
      %p63 = scmp.ne.s32.totalorder %s52, %s53
      %p64 = scmp.eq.s32.totalorder %s18, 0
      %p65 = por %p63, %p64
      %p66 = scmp.ne.s32.totalorder %s52, %s53
      %p67 = scmp.eq.s32.totalorder %s19, 1
      %p68 = por %p66, %p67
      %p70 = scmp.ne.s32.totalorder %s53, %s69
      %p71 = scmp.eq.s32.totalorder %s19, 0
      %p72 = por %p70, %p71
      %s74 = sadd.s32 %s73, 1
      %p77 = scmp.eq.s32.totalorder %s13, 1
      %p78 = scmp.ne.s32.totalorder %s73, %s75
      %p79 = scmp.eq.s32.totalorder %s13, 0
      %p80 = por %p78, %p79
      %p81 = scmp.ne.s32.totalorder %s73, %s75
      %p82 = scmp.eq.s32.totalorder %s18, 1
      %p83 = por %p81, %p82
      %p84 = scmp.ne.s32.totalorder %s75, %s76
      %p85 = scmp.eq.s32.totalorder %s18, 0
      %p86 = por %p84, %p85
      %p87 = scmp.ne.s32.totalorder %s75, %s76
      %p88 = scmp.eq.s32.totalorder %s19, 1
      %p89 = por %p87, %p88
      %p91 = scmp.ne.s32.totalorder %s76, %s90
      %p92 = scmp.eq.s32.totalorder %s19, 0
      %p93 = por %p91, %p92
      %s95 = sadd.s32 %s94, 1
      %p98 = scmp.eq.s32.totalorder %s13, 1
      %p99 = scmp.ne.s32.totalorder %s94, %s96
      %p100 = scmp.eq.s32.totalorder %s13, 0
      %p101 = por %p99, %p100
      %p102 = scmp.ne.s32.totalorder %s94, %s96
      %p103 = scmp.eq.s32.totalorder %s18, 1
      %p104 = por %p102, %p103
      %p105 = scmp.ne.s32.totalorder %s96, %s97
      %p106 = scmp.eq.s32.totalorder %s18, 0
      %p107 = por %p105, %p106
      %p108 = scmp.ne.s32.totalorder %s96, %s97
      %p109 = scmp.eq.s32.totalorder %s19, 1
      %p110 = por %p108, %p109
      %p112 = scmp.ne.s32.totalorder %s97, %s111
      %p113 = scmp.eq.s32.totalorder %s19, 0
      %p114 = por %p112, %p113
      %s115 = ssub.s32 %s13, %s20
      %p116 = scmp.eq.s32.totalorder %s115, 0
      %s118 = sadd.s32 %s117, 1
      %s119 = scalar_select %p116, %s117, %s118
      %p122 = pneg %p116
      %p123 = scmp.eq.s32.totalorder %s13, 1
      %p124 = por %p122, %p123
      %p125 = scmp.ne.s32.totalorder %s117, %s120
      %p126 = scmp.eq.s32.totalorder %s13, 0
      %p127 = por %p125, %p126
      %p128 = scmp.ne.s32.totalorder %s117, %s120
      %p129 = scmp.eq.s32.totalorder %s18, 1
      %p130 = por %p128, %p129
      %p131 = scmp.ne.s32.totalorder %s120, %s121
      %p132 = scmp.eq.s32.totalorder %s18, 0
      %p133 = por %p131, %p132
      %p134 = scmp.ne.s32.totalorder %s120, %s121
      %p135 = scmp.eq.s32.totalorder %s19, 1
      %p136 = por %p134, %p135
      %p138 = scmp.ne.s32.totalorder %s121, %s137
      %p139 = scmp.eq.s32.totalorder %s19, 0
      %p140 = por %p138, %p139
      %p141 = scmp.le.s32.totalorder 1, %s13
      %p142 = scmp.lt.s32.totalorder %s13, 3
      %p143 = pnand %p141, %p142
      %p144 = pneg %p143
      // Predicated region
      $region9: #{inception_gru_forward.13} parent=5 // pred_check
        _
      $region10: #{inception_gru_forward.13} parent=5 // pred_check_branch
        %146 = sbr.rel (%p143) target = $region12
      $region11: #{inception_gru_forward.13} parent=5 // pred_region
        %s147 = ssub.s32 %s13, 1
        // Predicated region
        $region13: #{inception_gru_forward.13} parent=11 // pred_check
          %p148 = pneg %p86
        $region14: #{inception_gru_forward.13} parent=11 // pred_check_branch
          %150 = sbr.rel (%p148) target = $region16
        $region15: #{inception_gru_forward.13} parent=11 // pred_region
          _
        $region16: #{inception_gru_forward.13} parent=11 // pred_fallthru
          _
        // Predicated region
        $region17: #{inception_gru_forward.13} parent=11 // pred_check
          %p151 = pneg %p107
        $region18: #{inception_gru_forward.13} parent=11 // pred_check_branch
          %153 = sbr.rel (%p151) target = $region20
        $region19: #{inception_gru_forward.13} parent=11 // pred_region
          _
        $region20: #{inception_gru_forward.13} parent=11 // pred_fallthru
          _
      $region12: #{inception_gru_forward.13} parent=5 // pred_fallthru
        _
      %p154 = scmp.lt.s32.totalorder %s13, 2
      // Predicated region
      $region21: #{inception_gru_forward.13} parent=5 // pred_check
        %p155 = pneg %p154
      $region22: #{inception_gru_forward.13} parent=5 // pred_check_branch
        %157 = sbr.rel (%p155) target = $region24
      $region23: #{inception_gru_forward.13} parent=5 // pred_region
        // Predicated region
        $region25: #{inception_gru_forward.13} parent=23 // pred_check
          %p158 = pneg %p33
        $region26: #{inception_gru_forward.13} parent=23 // pred_check_branch
          %160 = sbr.rel (%p158) target = $region28
        $region27: #{inception_gru_forward.13} parent=23 // pred_region
          %p161 = scmp.lt.s32.totalorder %s13, 1
          %s162 = scalar_select %p161, %s13, 1
          %s163 = smul.addr %s162, 2
          %s164 = smul.addr %s163, 8
          %s165 = scalar_lea.vmem %s0, %s164
        $region28: #{inception_gru_forward.13} parent=23 // pred_fallthru
          _
        // Predicated region
        $region29: #{inception_gru_forward.13} parent=23 // pred_check
          %p166 = pneg %p59
        $region30: #{inception_gru_forward.13} parent=23 // pred_check_branch
          %168 = sbr.rel (%p166) target = $region32
        $region31: #{inception_gru_forward.13} parent=23 // pred_region
          %p169 = scmp.lt.s32.totalorder %s13, 1
          %s170 = scalar_select %p169, %s13, 1
          %s171 = smul.addr %s170, 2
          %s172 = smul.addr %s171, 8
          %s173 = scalar_lea.vmem %s1, %s172
        $region32: #{inception_gru_forward.13} parent=23 // pred_fallthru
          _
      $region24: #{inception_gru_forward.13} parent=5 // pred_fallthru
        _
      %p174 = scmp.le.s32.totalorder 1, %s13
      %p175 = scmp.lt.s32.totalorder %s13, 3
      %p176 = pnand %p174, %p175
      %p177 = pneg %p176
      // Predicated region
      $region33: #{inception_gru_forward.13} parent=5 // pred_check
        _
      $region34: #{inception_gru_forward.13} parent=5 // pred_check_branch
        %179 = sbr.rel (%p176) target = $region36
      $region35: #{inception_gru_forward.13} parent=5 // pred_region
        %s180 = ssub.s32 %s13, 1
        %p181 = scmp.lt.s32.totalorder %s18, 1
        %s182 = scalar_select %p181, %s18, 1
        %s183 = smul.addr %s182, 2
        %s184 = smul.addr %s183, 8
        %s185 = scalar_lea.vmem %s0, %s184
        %p186 = pneg %p39
        %p187 = pneg %p36
        %p188 = scmp.lt.s32.totalorder %s18, 1
        %s189 = scalar_select %p188, %s18, 1
        %s190 = smul.addr %s189, 2
        %s191 = smul.addr %s190, 8
        %s192 = scalar_lea.vmem %s1, %s191
        %p193 = pneg %p65
        %p194 = pneg %p62
        %p195 = pneg %p86
        %p196 = pneg %p83
        %p197 = pneg %p107
        %p198 = pneg %p104
        %p199 = pneg %p133
        %p200 = pneg %p130
        %s201 = sand.u32 %s120, 1
        %s202 = scalar_lea.sflag [#allocation3], %s201
        %s203 = sand.u32 %s120, 1
        %s204 = scalar_lea.vmem [#allocation2], %s203
        %p205 = scmp.lt.s32.totalorder %s18, 1
        %s206 = scalar_select %p205, %s18, 1
        %s207 = smul.addr %s206, 2
        %s208 = smul.addr %s207, 8
        %s209 = scalar_lea.vmem %s0, %s208
        %p210 = scmp.lt.s32.totalorder %s18, 1
        %s211 = scalar_select %p210, %s18, 1
        %s212 = smul.addr %s211, 2
        %s213 = smul.addr %s212, 8
        %s214 = scalar_lea.vmem %s1, %s213
        %v216 = vld [vmem:[%s209] sm:$0xff]
        %v217 = vld [vmem:[%s209 + $0x8] sm:$0xff]
        %v218 = vld [vmem:[%s214] sm:$0xff]
        %v219 = vld [vmem:[%s214 + $0x8] sm:$0xff]
        %vm220 = vcmask 261120
        %v221 = vsel %vm220, %v216, 0.0
        %v222 = vsel %vm220, %v217, 0.0
        %v223 = vadd.f32 %v221, %v222
        %v224 = vrot.slane %v223, 4
        %v225 = vadd.f32 %v223, %v224
        %v226 = vrot.slane %v225, 2
        %v227 = vadd.f32 %v225, %v226
        %v228 = vrot.slane %v227, 1
        %v229 = vadd.f32 %v227, %v228
        %v230 = vrcp.pop 16.0
        %v231 = vmul.f32 %v229, %v230
        %v232 = vsel %vm220, %v216, -inf
        %v233 = vsel %vm220, %v217, -inf
        %v234 = vmax.f32 %v232, %v233
        %v235 = vrot.slane %v234, 4
        %v236 = vmax.f32 %v234, %v235
        %v237 = vrot.slane %v236, 2
        %v238 = vmax.f32 %v236, %v237
        %v239 = vrot.slane %v238, 1
        %v240 = vmax.f32 %v238, %v239
        %v241 = vsel %vm220, %v218, 0.0
        %v242 = vsel %vm220, %v219, 0.0
        %v243 = vadd.f32 %v241, %v242
        %v244 = vrot.slane %v243, 4
        %v245 = vadd.f32 %v243, %v244
        %v246 = vrot.slane %v245, 2
        %v247 = vadd.f32 %v245, %v246
        %v248 = vrot.slane %v247, 1
        %v249 = vadd.f32 %v247, %v248
        %v250 = vmul.f32 %v249, %v230
        %v251 = vsel %vm220, %v218, -inf
        %v252 = vsel %vm220, %v219, -inf
        %v253 = vmax.f32 %v251, %v252
        %v254 = vrot.slane %v253, 4
        %v255 = vmax.f32 %v253, %v254
        %v256 = vrot.slane %v255, 2
        %v257 = vmax.f32 %v255, %v256
        %v258 = vrot.slane %v257, 1
        %v259 = vmax.f32 %v257, %v258
        %v260 = vpack.c.bf16 %v231, %v231
        %v261 = vld [vmem:[%s2] sm:$0xf]
        %v262 = vld [vmem:[%s2 + $0x4] sm:$0xf]
        %v263 = vld [vmem:[%s2 + $0x8] sm:$0xf]
        %v264 = vld [vmem:[%s2 + $0xc] sm:$0xf]
        %v265 = vpack.c.bf16 %v240, %v240
        %s266 = scalar_lea.vmem %s2, 16
        %v267 = vld [vmem:[%s266] sm:$0xf]
        %v268 = vld [vmem:[%s266 + $0x4] sm:$0xf]
        %v269 = vld [vmem:[%s266 + $0x8] sm:$0xf]
        %v270 = vld [vmem:[%s266 + $0xc] sm:$0xf]
        %v275 = vunpack.c.l.b16 %v267
        %v276 = vunpack.c.l.b16 %v268
        %v277 = vunpack.c.l.b16 %v269
        %v278 = vunpack.c.l.b16 %v270
        %v279 = vpack.c.b16 %v276, %v275
        %v280 = vpack.c.b16 %v278, %v277
        %v284 = vsel %vm220, %v265, 0
        %286 = vmatprep.subr.bf16.mxu0 0
        %287 = vmatpush1.bf16.msra.mxu0 %v279
        %288 = vmatprep.subr.bf16.mxu0 0
        %289 = vmatpush1.bf16.msra.mxu0 %v280
        %290 = vmatprep.subr.bf16.mxu0 0
        %291 = vmatpush1.bf16.msra.mxu0 0
        %292 = vmatprep.subr.bf16.mxu0 0
        %293 = vmatpush1.bf16.msra.mxu0 0
        %294 = vmatprep.subr.bf16.mxu0 0
        %295 = vmatpush1.bf16.msra.mxu0 0
        %296 = vmatprep.subr.bf16.mxu0 0
        %297 = vmatpush1.bf16.msra.mxu0 0
        %298 = vmatprep.subr.bf16.mxu0 0
        %299 = vmatpush1.bf16.msra.mxu0 0
        %300 = vmatprep.subr.bf16.mxu0 0
        %301 = vmatpush1.bf16.msra.mxu0 0
        %302 = vmatprep.subr.bf16.mxu0 0
        %303 = vmatpush1.bf16.msra.mxu0 0
        %304 = vmatprep.subr.bf16.mxu0 0
        %305 = vmatpush1.bf16.msra.mxu0 0
        %306 = vmatprep.subr.bf16.mxu0 0
        %307 = vmatpush1.bf16.msra.mxu0 0
        %308 = vmatprep.subr.bf16.mxu0 0
        %309 = vmatpush1.bf16.msra.mxu0 0
        %310 = vmatprep.subr.bf16.mxu0 0
        %311 = vmatpush1.bf16.msra.mxu0 0
        %312 = vmatprep.subr.bf16.mxu0 0
        %313 = vmatpush1.bf16.msra.mxu0 0
        %314 = vmatprep.subr.bf16.mxu0 0
        %315 = vmatpush1.bf16.msra.mxu0 0
        %316 = vmatprep.subr.bf16.mxu0 0
        %317 = vmatpush1.bf16.msra.mxu0 0
        %318 = vmatprep.mubr.bf16.mxu0 0
        %319 = vmatmul.mubr.bf16.gmra.mrb[0].mxu0 %v284
        %v320 = vpop.f32.mrb[0].mxu0
        %v321 = vadd.f32 0.0, %v320
        %v322 = vpop.f32.mrb[0].mxu0
        %v323 = vpop.f32.mrb[0].mxu0
        %v324 = vpop.f32.mrb[0].mxu0
        %325 = vdwg.mxu0
        %v330 = vunpack.c.l.b16 %v261
        %v331 = vunpack.c.l.b16 %v262
        %v332 = vunpack.c.l.b16 %v263
        %v333 = vunpack.c.l.b16 %v264
        %v334 = vpack.c.b16 %v331, %v330
        %v335 = vpack.c.b16 %v333, %v332
        %v339 = vsel %vm220, %v260, 0
        %341 = vmatprep.subr.bf16.mxu0 0
        %342 = vmatpush1.bf16.msra.mxu0 %v334
        %343 = vmatprep.subr.bf16.mxu0 0
        %344 = vmatpush1.bf16.msra.mxu0 %v335
        %345 = vmatprep.subr.bf16.mxu0 0
        %346 = vmatpush1.bf16.msra.mxu0 0
        %347 = vmatprep.subr.bf16.mxu0 0
        %348 = vmatpush1.bf16.msra.mxu0 0
        %349 = vmatprep.subr.bf16.mxu0 0
        %350 = vmatpush1.bf16.msra.mxu0 0
        %351 = vmatprep.subr.bf16.mxu0 0
        %352 = vmatpush1.bf16.msra.mxu0 0
        %353 = vmatprep.subr.bf16.mxu0 0
        %354 = vmatpush1.bf16.msra.mxu0 0
        %355 = vmatprep.subr.bf16.mxu0 0
        %356 = vmatpush1.bf16.msra.mxu0 0
        %357 = vmatprep.subr.bf16.mxu0 0
        %358 = vmatpush1.bf16.msra.mxu0 0
        %359 = vmatprep.subr.bf16.mxu0 0
        %360 = vmatpush1.bf16.msra.mxu0 0
        %361 = vmatprep.subr.bf16.mxu0 0
        %362 = vmatpush1.bf16.msra.mxu0 0
        %363 = vmatprep.subr.bf16.mxu0 0
        %364 = vmatpush1.bf16.msra.mxu0 0
        %365 = vmatprep.subr.bf16.mxu0 0
        %366 = vmatpush1.bf16.msra.mxu0 0
        %367 = vmatprep.subr.bf16.mxu0 0
        %368 = vmatpush1.bf16.msra.mxu0 0
        %369 = vmatprep.subr.bf16.mxu0 0
        %370 = vmatpush1.bf16.msra.mxu0 0
        %371 = vmatprep.subr.bf16.mxu0 0
        %372 = vmatpush1.bf16.msra.mxu0 0
        %373 = vmatprep.mubr.bf16.mxu0 0
        %374 = vmatmul.mubr.bf16.gmra.mrb[0].mxu0 %v339
        %v375 = vpop.f32.mrb[0].mxu0
        %v376 = vadd.f32 %v321, %v375
        %v377 = vpop.f32.mrb[0].mxu0
        %v378 = vpop.f32.mrb[0].mxu0
        %v379 = vpop.f32.mrb[0].mxu0
        %380 = vdwg.mxu0
        %v381 = vpack.c.bf16 %v250, %v250
        %s382 = scalar_lea.vmem %s2, 32
        %v383 = vld [vmem:[%s382] sm:$0xf]
        %v384 = vld [vmem:[%s382 + $0x4] sm:$0xf]
        %v385 = vld [vmem:[%s382 + $0x8] sm:$0xf]
        %v386 = vld [vmem:[%s382 + $0xc] sm:$0xf]
        %v391 = vunpack.c.l.b16 %v383
        %v392 = vunpack.c.l.b16 %v384
        %v393 = vunpack.c.l.b16 %v385
        %v394 = vunpack.c.l.b16 %v386
        %v395 = vpack.c.b16 %v392, %v391
        %v396 = vpack.c.b16 %v394, %v393
        %v400 = vsel %vm220, %v381, 0
        %402 = vmatprep.subr.bf16.mxu0 0
        %403 = vmatpush1.bf16.msra.mxu0 %v395
        %404 = vmatprep.subr.bf16.mxu0 0
        %405 = vmatpush1.bf16.msra.mxu0 %v396
        %406 = vmatprep.subr.bf16.mxu0 0
        %407 = vmatpush1.bf16.msra.mxu0 0
        %408 = vmatprep.subr.bf16.mxu0 0
        %409 = vmatpush1.bf16.msra.mxu0 0
        %410 = vmatprep.subr.bf16.mxu0 0
        %411 = vmatpush1.bf16.msra.mxu0 0
        %412 = vmatprep.subr.bf16.mxu0 0
        %413 = vmatpush1.bf16.msra.mxu0 0
        %414 = vmatprep.subr.bf16.mxu0 0
        %415 = vmatpush1.bf16.msra.mxu0 0
        %416 = vmatprep.subr.bf16.mxu0 0
        %417 = vmatpush1.bf16.msra.mxu0 0
        %418 = vmatprep.subr.bf16.mxu0 0
        %419 = vmatpush1.bf16.msra.mxu0 0
        %420 = vmatprep.subr.bf16.mxu0 0
        %421 = vmatpush1.bf16.msra.mxu0 0
        %422 = vmatprep.subr.bf16.mxu0 0
        %423 = vmatpush1.bf16.msra.mxu0 0
        %424 = vmatprep.subr.bf16.mxu0 0
        %425 = vmatpush1.bf16.msra.mxu0 0
        %426 = vmatprep.subr.bf16.mxu0 0
        %427 = vmatpush1.bf16.msra.mxu0 0
        %428 = vmatprep.subr.bf16.mxu0 0
        %429 = vmatpush1.bf16.msra.mxu0 0
        %430 = vmatprep.subr.bf16.mxu0 0
        %431 = vmatpush1.bf16.msra.mxu0 0
        %432 = vmatprep.subr.bf16.mxu0 0
        %433 = vmatpush1.bf16.msra.mxu0 0
        %434 = vmatprep.mubr.bf16.mxu0 0
        %435 = vmatmul.mubr.bf16.gmra.mrb[0].mxu0 %v400
        %v436 = vpop.f32.mrb[0].mxu0
        %v437 = vadd.f32 0.0, %v436
        %v438 = vpop.f32.mrb[0].mxu0
        %v439 = vpop.f32.mrb[0].mxu0
        %v440 = vpop.f32.mrb[0].mxu0
        %441 = vdwg.mxu0
        %v442 = vadd.f32 %v376, %v437
        %v443 = vpack.c.bf16 %v259, %v259
        %s444 = scalar_lea.vmem %s2, 48
        %v445 = vld [vmem:[%s444] sm:$0xf]
        %v446 = vld [vmem:[%s444 + $0x4] sm:$0xf]
        %v447 = vld [vmem:[%s444 + $0x8] sm:$0xf]
        %v448 = vld [vmem:[%s444 + $0xc] sm:$0xf]
        %v453 = vunpack.c.l.b16 %v445
        %v454 = vunpack.c.l.b16 %v446
        %v455 = vunpack.c.l.b16 %v447
        %v456 = vunpack.c.l.b16 %v448
        %v457 = vpack.c.b16 %v454, %v453
        %v458 = vpack.c.b16 %v456, %v455
        %v462 = vsel %vm220, %v443, 0
        %464 = vmatprep.subr.bf16.mxu0 0
        %465 = vmatpush1.bf16.msra.mxu0 %v457
        %466 = vmatprep.subr.bf16.mxu0 0
        %467 = vmatpush1.bf16.msra.mxu0 %v458
        %468 = vmatprep.subr.bf16.mxu0 0
        %469 = vmatpush1.bf16.msra.mxu0 0
        %470 = vmatprep.subr.bf16.mxu0 0
        %471 = vmatpush1.bf16.msra.mxu0 0
        %472 = vmatprep.subr.bf16.mxu0 0
        %473 = vmatpush1.bf16.msra.mxu0 0
        %474 = vmatprep.subr.bf16.mxu0 0
        %475 = vmatpush1.bf16.msra.mxu0 0
        %476 = vmatprep.subr.bf16.mxu0 0
        %477 = vmatpush1.bf16.msra.mxu0 0
        %478 = vmatprep.subr.bf16.mxu0 0
        %479 = vmatpush1.bf16.msra.mxu0 0
        %480 = vmatprep.subr.bf16.mxu0 0
        %481 = vmatpush1.bf16.msra.mxu0 0
        %482 = vmatprep.subr.bf16.mxu0 0
        %483 = vmatpush1.bf16.msra.mxu0 0
        %484 = vmatprep.subr.bf16.mxu0 0
        %485 = vmatpush1.bf16.msra.mxu0 0
        %486 = vmatprep.subr.bf16.mxu0 0
        %487 = vmatpush1.bf16.msra.mxu0 0
        %488 = vmatprep.subr.bf16.mxu0 0
        %489 = vmatpush1.bf16.msra.mxu0 0
        %490 = vmatprep.subr.bf16.mxu0 0
        %491 = vmatpush1.bf16.msra.mxu0 0
        %492 = vmatprep.subr.bf16.mxu0 0
        %493 = vmatpush1.bf16.msra.mxu0 0
        %494 = vmatprep.subr.bf16.mxu0 0
        %495 = vmatpush1.bf16.msra.mxu0 0
        %496 = vmatprep.mubr.bf16.mxu0 0
        %497 = vmatmul.mubr.bf16.gmra.mrb[0].mxu0 %v462
        %v498 = vpop.f32.mrb[0].mxu0
        %v499 = vadd.f32 0.0, %v498
        %v500 = vpop.f32.mrb[0].mxu0
        %v501 = vpop.f32.mrb[0].mxu0
        %v502 = vpop.f32.mrb[0].mxu0
        %503 = vdwg.mxu0
        %v504 = vadd.f32 %v442, %v499
        %v505 = vld [vmem:[%s3] sm:$0x1]
        %v506 = vadd.f32 %v504, %v505
        %vm507 = vcmask 16384
        %508 = vst.msk [vmem:[%s204] sm:$0x1] %vm507, %v506
        %s509 = sand.u32 %s120, 1
        %s510 = scalar_lea.sflag [#allocation3], %s509
        %s511 = sand.u32 %s120, 1
        %s512 = scalar_lea.vmem [#allocation2], %s511
        // Predicated region
        $region37: #{inception_gru_forward.13} parent=35 // pred_check
          %p513 = pneg %p130
        $region38: #{inception_gru_forward.13} parent=35 // pred_check_branch
          %515 = sbr.rel (%p513) target = $region40
        $region39: #{inception_gru_forward.13} parent=35 // pred_region
          %s517 = ssub.s32 16, 16
          %518 = vsyncadd %s510, %s517
          %s519 = smul.addr %s18, 16
          %s520 = scalar_lea.hbm %s4, %s519
          %s522 = sshll.u32 %s512, 4
          %s523 = int_to_ptr.vmem [resolvable:$true] %s522
          %525 = dma.vmem_to_hbm [thread:$0]  %s523, 16, %s520, %s510
        $region40: #{inception_gru_forward.13} parent=35 // pred_fallthru
          _
      $region36: #{inception_gru_forward.13} parent=5 // pred_fallthru
        _
      %p526 = scmp.le.s32.totalorder 2, %s13
      // Predicated region
      $region41: #{inception_gru_forward.13} parent=5 // pred_check
        %p527 = pneg %p526
      $region42: #{inception_gru_forward.13} parent=5 // pred_check_branch
        %529 = sbr.rel (%p527) target = $region44
      $region43: #{inception_gru_forward.13} parent=5 // pred_region
        %s530 = ssub.s32 %s13, 2
        // Predicated region
        $region45: #{inception_gru_forward.13} parent=43 // pred_check
          %p531 = pneg %p136
        $region46: #{inception_gru_forward.13} parent=43 // pred_check_branch
          %533 = sbr.rel (%p531) target = $region48
        $region47: #{inception_gru_forward.13} parent=43 // pred_region
          %s534 = sand.u32 %s121, 1
          %s535 = scalar_lea.sflag [#allocation3], %s534
          %s536 = sand.u32 %s121, 1
          %s537 = scalar_lea.vmem [#allocation2], %s536
          %538 = dma.done %s535, 16
        $region48: #{inception_gru_forward.13} parent=43 // pred_fallthru
          _
      $region44: #{inception_gru_forward.13} parent=5 // pred_fallthru
        _
    $region6: #{inception_gru_forward.13} parent=1 // loop_footer
      %s17 = sadd.s32 1, %s13
    $region7: #{inception_gru_forward.13} parent=1 // loop_footer_branch
      %12 = sbr.rel target = $region3
    $region8: #{inception_gru_forward.13} parent=1 // loop_exit
      _
    %539 = vsyncpa [#allocation3], 1
    %s540 = scalar_lea.sflag [#allocation3], 1
    %541 = vsyncpa %s540, 1

// kernel: inception_gru_forward.8
$region0: #{inception_gru_forward.8}
  #allocation0 [shape = 'u32[]', space=smem, size = 0x4, offset = 0x4, fixed_abs, tag = 'smem constant byte address 0x4 - core index']
  #allocation1 [shape = 'u32[144,128]{1,0:T(1,128)}', space=vmem, size = 0x12000, scoped, tag = 'internal scratch']
  #allocation2 [shape = 'f32[1,32,32]{2,1,0:T(8,128)}', space=vmem, size = 0x4000, scoped, tag = 'scratch operand']
  %s0 = inlined_call_operand.vmem [shape: f32[2,18,132], index: 0, kind: input, shape index: {}]
  %s1 = inlined_call_operand.vmem [shape: bf16[132,32], index: 1, kind: input, shape index: {}]
  %s2 = inlined_call_operand.vmem [shape: f32[1,32], index: 2, kind: input, shape index: {}]
  %s3 = inlined_call_operand.vmem [shape: bf16[7,32,32], index: 3, kind: input, shape index: {}]
  %s4 = inlined_call_operand.vmem [shape: bf16[132,32], index: 4, kind: input, shape index: {}]
  %s5 = inlined_call_operand.vmem [shape: f32[1,32], index: 5, kind: input, shape index: {}]
  %s6 = inlined_call_operand.vmem [shape: f32[2,16,32], index: 6, kind: output, shape index: {}]
  %s7 = sld [smem:[#allocation0]]
  $region57: #{inception_gru_forward.8} parent=0
    _
  %s9 = ssub.s32 1, %s7
  %s10 = scalar_select 0, %s9, %s7
  loop: start=0, step=1, limit=4
  $region2: #{inception_gru_forward.8} parent=0 // loop_pre_header
    _
  $region3: #{inception_gru_forward.8} parent=0 // loop_header
    %s12 = sphi 0, %s16
    %p13 = scmp.ge.s32.totalorder %s12, 4
    %s22 = sphi 0, %s24
    %s25 = sphi 0, %s22
    %s26 = sphi 0, %s25
    %s42 = sphi 0, %s26
    %s46 = sphi 0, %s46
    %s48 = sphi 0, %s46
    %s49 = sphi 0, %s48
    %s63 = sphi 0, %s49
    %s67 = sphi 0, %s67
    %s69 = sphi 0, %s67
    %s70 = sphi 0, %s69
    %s84 = sphi 0, %s70
    %s88 = sphi 0, %s88
    %s90 = sphi 0, %s88
    %s91 = sphi 0, %s90
    %s105 = sphi 0, %s91
    %s109 = sphi 0, %s109
    %s111 = sphi 0, %s109
    %s112 = sphi 0, %s111
    %s126 = sphi 0, %s112
    %s130 = sphi 0, %s130
    %s132 = sphi 0, %s130
    %s133 = sphi 0, %s132
    %s147 = sphi 0, %s133
    %s153 = sphi 0, %s155
    %s156 = sphi 0, %s153
    %s157 = sphi 0, %s156
    %s173 = sphi 0, %s157
  $region4: #{inception_gru_forward.8} parent=0 // loop_header_branch
    %15 = sbr.rel (%p13) target = $region8
  $region5: #{inception_gru_forward.8} parent=0 // loop_body
    %s17 = ssub.s32 %s12, 1
    %s18 = ssub.s32 %s12, 2
    %s19 = sadd.s32 %s12, 1
    %s20 = ssub.s32 %s12, %s19
    %p21 = scmp.eq.s32.totalorder %s20, 0
    %s23 = sadd.s32 %s22, 1
    %s24 = scalar_select %p21, %s22, %s23
    %p27 = pneg %p21
    %p28 = scmp.eq.s32.totalorder %s12, 1
    %p29 = por %p27, %p28
    %p30 = scmp.ne.s32.totalorder %s22, %s25
    %p31 = scmp.eq.s32.totalorder %s12, 0
    %p32 = por %p30, %p31
    %p33 = scmp.ne.s32.totalorder %s22, %s25
    %p34 = scmp.eq.s32.totalorder %s17, 1
    %p35 = por %p33, %p34
    %p36 = scmp.ne.s32.totalorder %s25, %s26
    %p37 = scmp.eq.s32.totalorder %s17, 0
    %p38 = por %p36, %p37
    %p39 = scmp.ne.s32.totalorder %s25, %s26
    %p40 = scmp.eq.s32.totalorder %s18, 1
    %p41 = por %p39, %p40
    %p43 = scmp.ne.s32.totalorder %s26, %s42
    %p44 = scmp.eq.s32.totalorder %s18, 0
    %p45 = por %p43, %p44
    %s47 = sadd.s32 %s46, 1
    %p50 = scmp.eq.s32.totalorder %s12, 1
    %p51 = scmp.ne.s32.totalorder %s46, %s48
    %p52 = scmp.eq.s32.totalorder %s12, 0
    %p53 = por %p51, %p52
    %p54 = scmp.ne.s32.totalorder %s46, %s48
    %p55 = scmp.eq.s32.totalorder %s17, 1
    %p56 = por %p54, %p55
    %p57 = scmp.ne.s32.totalorder %s48, %s49
    %p58 = scmp.eq.s32.totalorder %s17, 0
    %p59 = por %p57, %p58
    %p60 = scmp.ne.s32.totalorder %s48, %s49
    %p61 = scmp.eq.s32.totalorder %s18, 1
    %p62 = por %p60, %p61
    %p64 = scmp.ne.s32.totalorder %s49, %s63
    %p65 = scmp.eq.s32.totalorder %s18, 0
    %p66 = por %p64, %p65
    %s68 = sadd.s32 %s67, 1
    %p71 = scmp.eq.s32.totalorder %s12, 1
    %p72 = scmp.ne.s32.totalorder %s67, %s69
    %p73 = scmp.eq.s32.totalorder %s12, 0
    %p74 = por %p72, %p73
    %p75 = scmp.ne.s32.totalorder %s67, %s69
    %p76 = scmp.eq.s32.totalorder %s17, 1
    %p77 = por %p75, %p76
    %p78 = scmp.ne.s32.totalorder %s69, %s70
    %p79 = scmp.eq.s32.totalorder %s17, 0
    %p80 = por %p78, %p79
    %p81 = scmp.ne.s32.totalorder %s69, %s70
    %p82 = scmp.eq.s32.totalorder %s18, 1
    %p83 = por %p81, %p82
    %p85 = scmp.ne.s32.totalorder %s70, %s84
    %p86 = scmp.eq.s32.totalorder %s18, 0
    %p87 = por %p85, %p86
    %s89 = sadd.s32 %s88, 1
    %p92 = scmp.eq.s32.totalorder %s12, 1
    %p93 = scmp.ne.s32.totalorder %s88, %s90
    %p94 = scmp.eq.s32.totalorder %s12, 0
    %p95 = por %p93, %p94
    %p96 = scmp.ne.s32.totalorder %s88, %s90
    %p97 = scmp.eq.s32.totalorder %s17, 1
    %p98 = por %p96, %p97
    %p99 = scmp.ne.s32.totalorder %s90, %s91
    %p100 = scmp.eq.s32.totalorder %s17, 0
    %p101 = por %p99, %p100
    %p102 = scmp.ne.s32.totalorder %s90, %s91
    %p103 = scmp.eq.s32.totalorder %s18, 1
    %p104 = por %p102, %p103
    %p106 = scmp.ne.s32.totalorder %s91, %s105
    %p107 = scmp.eq.s32.totalorder %s18, 0
    %p108 = por %p106, %p107
    %s110 = sadd.s32 %s109, 1
    %p113 = scmp.eq.s32.totalorder %s12, 1
    %p114 = scmp.ne.s32.totalorder %s109, %s111
    %p115 = scmp.eq.s32.totalorder %s12, 0
    %p116 = por %p114, %p115
    %p117 = scmp.ne.s32.totalorder %s109, %s111
    %p118 = scmp.eq.s32.totalorder %s17, 1
    %p119 = por %p117, %p118
    %p120 = scmp.ne.s32.totalorder %s111, %s112
    %p121 = scmp.eq.s32.totalorder %s17, 0
    %p122 = por %p120, %p121
    %p123 = scmp.ne.s32.totalorder %s111, %s112
    %p124 = scmp.eq.s32.totalorder %s18, 1
    %p125 = por %p123, %p124
    %p127 = scmp.ne.s32.totalorder %s112, %s126
    %p128 = scmp.eq.s32.totalorder %s18, 0
    %p129 = por %p127, %p128
    %s131 = sadd.s32 %s130, 1
    %p134 = scmp.eq.s32.totalorder %s12, 1
    %p135 = scmp.ne.s32.totalorder %s130, %s132
    %p136 = scmp.eq.s32.totalorder %s12, 0
    %p137 = por %p135, %p136
    %p138 = scmp.ne.s32.totalorder %s130, %s132
    %p139 = scmp.eq.s32.totalorder %s17, 1
    %p140 = por %p138, %p139
    %p141 = scmp.ne.s32.totalorder %s132, %s133
    %p142 = scmp.eq.s32.totalorder %s17, 0
    %p143 = por %p141, %p142
    %p144 = scmp.ne.s32.totalorder %s132, %s133
    %p145 = scmp.eq.s32.totalorder %s18, 1
    %p146 = por %p144, %p145
    %p148 = scmp.ne.s32.totalorder %s133, %s147
    %p149 = scmp.eq.s32.totalorder %s18, 0
    %p150 = por %p148, %p149
    %s151 = ssub.s32 %s12, %s19
    %p152 = scmp.eq.s32.totalorder %s151, 0
    %s154 = sadd.s32 %s153, 1
    %s155 = scalar_select %p152, %s153, %s154
    %p158 = pneg %p152
    %p159 = scmp.eq.s32.totalorder %s12, 1
    %p160 = por %p158, %p159
    %p161 = scmp.ne.s32.totalorder %s153, %s156
    %p162 = scmp.eq.s32.totalorder %s12, 0
    %p163 = por %p161, %p162
    %p164 = scmp.ne.s32.totalorder %s153, %s156
    %p165 = scmp.eq.s32.totalorder %s17, 1
    %p166 = por %p164, %p165
    %p167 = scmp.ne.s32.totalorder %s156, %s157
    %p168 = scmp.eq.s32.totalorder %s17, 0
    %p169 = por %p167, %p168
    %p170 = scmp.ne.s32.totalorder %s156, %s157
    %p171 = scmp.eq.s32.totalorder %s18, 1
    %p172 = por %p170, %p171
    %p174 = scmp.ne.s32.totalorder %s157, %s173
    %p175 = scmp.eq.s32.totalorder %s18, 0
    %p176 = por %p174, %p175
    %p177 = scmp.le.s32.totalorder 1, %s12
    %p178 = scmp.lt.s32.totalorder %s12, 3
    %p179 = pnand %p177, %p178
    %p180 = pneg %p179
    // Predicated region
    $region9: #{inception_gru_forward.8} parent=5 // pred_check
      _
    $region10: #{inception_gru_forward.8} parent=5 // pred_check_branch
      %182 = sbr.rel (%p179) target = $region12
    $region11: #{inception_gru_forward.8} parent=5 // pred_region
      %s183 = ssub.s32 %s12, 1
      // Predicated region
      $region13: #{inception_gru_forward.8} parent=11 // pred_check
        %p184 = pneg %p59
      $region14: #{inception_gru_forward.8} parent=11 // pred_check_branch
        %186 = sbr.rel (%p184) target = $region16
      $region15: #{inception_gru_forward.8} parent=11 // pred_region
        _
      $region16: #{inception_gru_forward.8} parent=11 // pred_fallthru
        _
      // Predicated region
      $region17: #{inception_gru_forward.8} parent=11 // pred_check
        %p187 = pneg %p80
      $region18: #{inception_gru_forward.8} parent=11 // pred_check_branch
        %189 = sbr.rel (%p187) target = $region20
      $region19: #{inception_gru_forward.8} parent=11 // pred_region
        _
      $region20: #{inception_gru_forward.8} parent=11 // pred_fallthru
        _
      // Predicated region
      $region21: #{inception_gru_forward.8} parent=11 // pred_check
        %p190 = pneg %p101
      $region22: #{inception_gru_forward.8} parent=11 // pred_check_branch
        %192 = sbr.rel (%p190) target = $region24
      $region23: #{inception_gru_forward.8} parent=11 // pred_region
        _
      $region24: #{inception_gru_forward.8} parent=11 // pred_fallthru
        _
      // Predicated region
      $region25: #{inception_gru_forward.8} parent=11 // pred_check
        %p193 = pneg %p122
      $region26: #{inception_gru_forward.8} parent=11 // pred_check_branch
        %195 = sbr.rel (%p193) target = $region28
      $region27: #{inception_gru_forward.8} parent=11 // pred_region
        _
      $region28: #{inception_gru_forward.8} parent=11 // pred_fallthru
        _
      // Predicated region
      $region29: #{inception_gru_forward.8} parent=11 // pred_check
        %p196 = pneg %p143
      $region30: #{inception_gru_forward.8} parent=11 // pred_check_branch
        %198 = sbr.rel (%p196) target = $region32
      $region31: #{inception_gru_forward.8} parent=11 // pred_region
        _
      $region32: #{inception_gru_forward.8} parent=11 // pred_fallthru
        _
    $region12: #{inception_gru_forward.8} parent=5 // pred_fallthru
      _
    %p199 = scmp.lt.s32.totalorder %s12, 2
    // Predicated region
    $region33: #{inception_gru_forward.8} parent=5 // pred_check
      %p200 = pneg %p199
    $region34: #{inception_gru_forward.8} parent=5 // pred_check_branch
      %202 = sbr.rel (%p200) target = $region36
    $region35: #{inception_gru_forward.8} parent=5 // pred_region
      // Predicated region
      $region37: #{inception_gru_forward.8} parent=35 // pred_check
        %p203 = pneg %p32
      $region38: #{inception_gru_forward.8} parent=35 // pred_check_branch
        %205 = sbr.rel (%p203) target = $region40
      $region39: #{inception_gru_forward.8} parent=35 // pred_region
        %p206 = scmp.lt.s32.totalorder %s12, 1
        %s207 = scalar_select %p206, %s12, 1
        %s208 = smul.addr %s207, 6
        %s209 = smul.addr %s208, 8
        %s210 = scalar_lea.vmem %s0, %s209
      $region40: #{inception_gru_forward.8} parent=35 // pred_fallthru
        _
    $region36: #{inception_gru_forward.8} parent=5 // pred_fallthru
      _
    %p211 = scmp.le.s32.totalorder 1, %s12
    %p212 = scmp.lt.s32.totalorder %s12, 3
    %p213 = pnand %p211, %p212
    %p214 = pneg %p213
    // Predicated region
    $region41: #{inception_gru_forward.8} parent=5 // pred_check
      _
    $region42: #{inception_gru_forward.8} parent=5 // pred_check_branch
      %216 = sbr.rel (%p213) target = $region44
    $region43: #{inception_gru_forward.8} parent=5 // pred_region
      %s217 = ssub.s32 %s12, 1
      %p218 = scmp.lt.s32.totalorder %s17, 1
      %s219 = scalar_select %p218, %s17, 1
      %s220 = smul.addr %s219, 6
      %s221 = smul.addr %s220, 8
      %s222 = scalar_lea.vmem %s0, %s221
      %p223 = pneg %p38
      %p224 = pneg %p35
      %p225 = pneg %p59
      %p226 = pneg %p56
      %p227 = pneg %p80
      %p228 = pneg %p77
      %p229 = pneg %p101
      %p230 = pneg %p98
      %p231 = pneg %p122
      %p232 = pneg %p119
      %p233 = pneg %p143
      %p234 = pneg %p140
      %p235 = pneg %p169
      %p236 = pneg %p166
      %p237 = scmp.lt.s32.totalorder %s17, 1
      %s238 = scalar_select %p237, %s17, 1
      %s239 = smul.addr %s238, 2
      %s240 = smul.addr %s239, 8
      %s241 = scalar_lea.vmem %s6, %s240
      %p242 = scmp.lt.s32.totalorder %s17, 1
      %s243 = scalar_select %p242, %s17, 1
      %s244 = smul.addr %s243, 6
      %s245 = smul.addr %s244, 8
      %s246 = scalar_lea.vmem %s0, %s245
      %p247 = scmp.lt.s32.totalorder %s17, 1
      %s248 = scalar_select %p247, %s17, 1
      %s249 = smul.addr %s248, 2
      %s250 = smul.addr %s249, 8
      %s251 = scalar_lea.vmem %s6, %s250
      %v253 = vld [vmem:[%s246] sm:$0xfe]
      %v254 = vld [vmem:[%s246 + $0x8] sm:$0xfe]
      %v255 = vld [vmem:[%s246 + $0x10] sm:$0xff]
      %v256 = vld [vmem:[%s246 + $0x18] sm:$0xff]
      %v257 = vld [vmem:[%s246 + $0x20] sm:$0x1]
      %v258 = vld [vmem:[%s246 + $0x28] sm:$0x1]
      %v259 = vpack.c.bf16 %v255, %v253
      %v260 = vpack.c.bf16 %v256, %v254
      %v261 = vpack.c.bf16 %v257, %v257
      %v262 = vpack.c.bf16 %v258, %v258
      %v263 = vld [vmem:[%s1] sm:$0xf]
      %v264 = vld [vmem:[%s1 + $0x4] sm:$0xf]
      %v265 = vld [vmem:[%s1 + $0x8] sm:$0xf]
      %v266 = vld [vmem:[%s1 + $0xc] sm:$0xf]
      %v267 = vld [vmem:[%s1 + $0x10] sm:$0xf]
      %v268 = vld [vmem:[%s1 + $0x14] sm:$0xf]
      %v269 = vld [vmem:[%s1 + $0x18] sm:$0xf]
      %v270 = vld [vmem:[%s1 + $0x1c] sm:$0xf]
      %v271 = vld [vmem:[%s1 + $0x20] sm:$0xf]
      %v272 = vld [vmem:[%s1 + $0x24] sm:$0xf]
      %v273 = vld [vmem:[%s1 + $0x28] sm:$0xf]
      %v274 = vld [vmem:[%s1 + $0x2c] sm:$0xf]
      %v275 = vld [vmem:[%s1 + $0x30] sm:$0xf]
      %v276 = vld [vmem:[%s1 + $0x34] sm:$0xf]
      %v277 = vld [vmem:[%s1 + $0x38] sm:$0xf]
      %v278 = vld [vmem:[%s1 + $0x3c] sm:$0xf]
      %v279 = vld [vmem:[%s1 + $0x40] sm:$0x3]
      %v280 = vld [vmem:[%s2] sm:$0x1]
      %v282 = vlaneseq
      %v283 = vshrl.u32 %v282, 7
      %v284 = vsub.s32 0, %v283
      %v285 = vrot.slane %v280, %v284
      %vm287 = vsmask.f32 7424
      %v289 = vshrl.u32 %v259, 16
      %v291 = vshll.u32 %v259, 16
      %v293 = vrot.slane %v291, 1
      %v294 = vor.u32 %v289, %v293
      %v296 = vshll.u32 %v261, 16
      %v298 = vrot.slane %v296, 1
      %v299 = vsel %vm287, %v294, %v298
      %v301 = vshrl.u32 %v260, 16
      %v303 = vshll.u32 %v260, 16
      %v305 = vrot.slane %v303, 1
      %v306 = vor.u32 %v301, %v305
      %v308 = vshll.u32 %v262, 16
      %v310 = vrot.slane %v308, 1
      %v311 = vsel %vm287, %v306, %v310
      %v330 = vunpack.c.l.b16 %v263
      %v331 = vunpack.c.l.b16 %v264
      %v332 = vunpack.c.l.b16 %v265
      %v333 = vunpack.c.l.b16 %v266
      %v334 = vunpack.c.l.b16 %v267
      %v335 = vunpack.c.l.b16 %v268
      %v336 = vunpack.c.l.b16 %v269
      %v337 = vunpack.c.l.b16 %v270
      %v338 = vunpack.c.l.b16 %v271
      %v339 = vunpack.c.l.b16 %v272
      %v340 = vunpack.c.l.b16 %v273
      %v341 = vunpack.c.l.b16 %v274
      %v342 = vunpack.c.l.b16 %v275
      %v343 = vunpack.c.l.b16 %v276
      %v344 = vunpack.c.l.b16 %v277
      %v345 = vunpack.c.l.b16 %v278
      %v346 = vunpack.c.l.b16 %v279
      %v347 = vpack.c.b16 %v331, %v330
      %v348 = vpack.c.b16 %v333, %v332
      %v349 = vpack.c.b16 %v335, %v334
      %v350 = vpack.c.b16 %v337, %v336
      %v351 = vpack.c.b16 %v339, %v338
      %v352 = vpack.c.b16 %v341, %v340
      %v353 = vpack.c.b16 %v343, %v342
      %v354 = vpack.c.b16 %v345, %v344
      %v355 = vpack.c.b16 %v346, %v346
      %vm364 = vcmask 31744
      %v366 = vsel %vm364, %v311, 0
      %vm368 = vcmask 1041408
      %v370 = vsel %vm368, %v355, 0
      %372 = vmatprep.subr.bf16.mxu0 0
      %373 = vmatpush1.bf16.msra.mxu0 %v347
      %374 = vmatprep.subr.bf16.mxu0 0
      %375 = vmatpush1.bf16.msra.mxu0 %v348
      %376 = vmatprep.subr.bf16.mxu0 0
      %377 = vmatpush1.bf16.msra.mxu0 %v349
      %378 = vmatprep.subr.bf16.mxu0 0
      %379 = vmatpush1.bf16.msra.mxu0 %v350
      %380 = vmatprep.subr.bf16.mxu0 0
      %381 = vmatpush1.bf16.msra.mxu0 %v351
      %382 = vmatprep.subr.bf16.mxu0 0
      %383 = vmatpush1.bf16.msra.mxu0 %v352
      %384 = vmatprep.subr.bf16.mxu0 0
      %385 = vmatpush1.bf16.msra.mxu0 %v353
      %386 = vmatprep.subr.bf16.mxu0 0
      %387 = vmatpush1.bf16.msra.mxu0 %v354
      %388 = vmatprep.subr.bf16.mxu0 0
      %389 = vmatpush1.bf16.msra.mxu0 %v370
      %390 = vmatprep.subr.bf16.mxu0 0
      %391 = vmatpush1.bf16.msra.mxu0 0
      %392 = vmatprep.subr.bf16.mxu0 0
      %393 = vmatpush1.bf16.msra.mxu0 0
      %394 = vmatprep.subr.bf16.mxu0 0
      %395 = vmatpush1.bf16.msra.mxu0 0
      %396 = vmatprep.subr.bf16.mxu0 0
      %397 = vmatpush1.bf16.msra.mxu0 0
      %398 = vmatprep.subr.bf16.mxu0 0
      %399 = vmatpush1.bf16.msra.mxu0 0
      %400 = vmatprep.subr.bf16.mxu0 0
      %401 = vmatpush1.bf16.msra.mxu0 0
      %402 = vmatprep.subr.bf16.mxu0 0
      %403 = vmatpush1.bf16.msra.mxu0 0
      %404 = vmatprep.mubr.bf16.mxu0 %v366
      %405 = vmatmul.mubr.bf16.gmra.mrb[0].mxu0 %v299
      %v406 = vpop.f32.mrb[0].mxu0
      %v407 = vadd.f32 %v285, %v406
      %v408 = vpop.f32.mrb[0].mxu0
      %v409 = vpop.f32.mrb[0].mxu0
      %v410 = vadd.f32 %v285, %v409
      %v411 = vpop.f32.mrb[0].mxu0
      %412 = vdwg.mxu0
      %vm413 = vcmask 261120
      %414 = vst.msk [vmem:[#allocation2] sm:$0xff] %vm413, 0.0
      %415 = vst.msk [vmem:[#allocation2 + $0x8] sm:$0xff] %vm413, 0.0
      %416 = vst.msk [vmem:[#allocation2 + $0x10] sm:$0xff] %vm413, 0.0
      %417 = vst.msk [vmem:[#allocation2 + $0x18] sm:$0xff] %vm413, 0.0
      %418 = vst.msk [vmem:[#allocation2 + $0x8] sm:$0xff] %vm413, %v407
      %419 = vst.msk [vmem:[#allocation2 + $0x10] sm:$0xff] %vm413, %v410
      %v420 = vld [vmem:[#allocation2 + $0x5] sm:$0xff]
      %v421 = vld [vmem:[#allocation2 + $0xd] sm:$0xff]
      %v422 = vpack.c.bf16 %v421, %v420
      %v423 = vld [vmem:[%s3] sm:$0xf]
      %v424 = vld [vmem:[%s3 + $0x4] sm:$0xf]
      %v425 = vld [vmem:[%s3 + $0x8] sm:$0xf]
      %v426 = vld [vmem:[%s3 + $0xc] sm:$0xf]
      %v427 = vld [vmem:[#allocation2 + $0x6] sm:$0xff]
      %v428 = vld [vmem:[#allocation2 + $0xe] sm:$0xff]
      %v429 = vpack.c.bf16 %v428, %v427
      %s430 = scalar_lea.vmem %s3, 16
      %v431 = vld [vmem:[%s430] sm:$0xf]
      %v432 = vld [vmem:[%s430 + $0x4] sm:$0xf]
      %v433 = vld [vmem:[%s430 + $0x8] sm:$0xf]
      %v434 = vld [vmem:[%s430 + $0xc] sm:$0xf]
      %v439 = vunpack.c.l.b16 %v431
      %v440 = vunpack.c.l.b16 %v432
      %v441 = vunpack.c.l.b16 %v433
      %v442 = vunpack.c.l.b16 %v434
      %v443 = vpack.c.b16 %v440, %v439
      %v444 = vpack.c.b16 %v442, %v441
      %v448 = vsel %vm413, %v429, 0
      %450 = vmatprep.subr.bf16.mxu0 0
      %451 = vmatpush1.bf16.msra.mxu0 %v443
      %452 = vmatprep.subr.bf16.mxu0 0
      %453 = vmatpush1.bf16.msra.mxu0 %v444
      %454 = vmatprep.subr.bf16.mxu0 0
      %455 = vmatpush1.bf16.msra.mxu0 0
      %456 = vmatprep.subr.bf16.mxu0 0
      %457 = vmatpush1.bf16.msra.mxu0 0
      %458 = vmatprep.subr.bf16.mxu0 0
      %459 = vmatpush1.bf16.msra.mxu0 0
      %460 = vmatprep.subr.bf16.mxu0 0
      %461 = vmatpush1.bf16.msra.mxu0 0
      %462 = vmatprep.subr.bf16.mxu0 0
      %463 = vmatpush1.bf16.msra.mxu0 0
      %464 = vmatprep.subr.bf16.mxu0 0
      %465 = vmatpush1.bf16.msra.mxu0 0
      %466 = vmatprep.subr.bf16.mxu0 0
      %467 = vmatpush1.bf16.msra.mxu0 0
      %468 = vmatprep.subr.bf16.mxu0 0
      %469 = vmatpush1.bf16.msra.mxu0 0
      %470 = vmatprep.subr.bf16.mxu0 0
      %471 = vmatpush1.bf16.msra.mxu0 0
      %472 = vmatprep.subr.bf16.mxu0 0
      %473 = vmatpush1.bf16.msra.mxu0 0
      %474 = vmatprep.subr.bf16.mxu0 0
      %475 = vmatpush1.bf16.msra.mxu0 0
      %476 = vmatprep.subr.bf16.mxu0 0
      %477 = vmatpush1.bf16.msra.mxu0 0
      %478 = vmatprep.subr.bf16.mxu0 0
      %479 = vmatpush1.bf16.msra.mxu0 0
      %480 = vmatprep.subr.bf16.mxu0 0
      %481 = vmatpush1.bf16.msra.mxu0 0
      %482 = vmatprep.mubr.bf16.mxu0 0
      %483 = vmatmul.mubr.bf16.gmra.mrb[0].mxu0 %v448
      %v484 = vpop.f32.mrb[0].mxu0
      %v485 = vadd.f32 0.0, %v484
      %v486 = vpop.f32.mrb[0].mxu0
      %v487 = vpop.f32.mrb[0].mxu0
      %v488 = vadd.f32 0.0, %v487
      %v489 = vpop.f32.mrb[0].mxu0
      %490 = vdwg.mxu0
      %v495 = vunpack.c.l.b16 %v423
      %v496 = vunpack.c.l.b16 %v424
      %v497 = vunpack.c.l.b16 %v425
      %v498 = vunpack.c.l.b16 %v426
      %v499 = vpack.c.b16 %v496, %v495
      %v500 = vpack.c.b16 %v498, %v497
      %v504 = vsel %vm413, %v422, 0
      %506 = vmatprep.subr.bf16.mxu0 0
      %507 = vmatpush1.bf16.msra.mxu0 %v499
      %508 = vmatprep.subr.bf16.mxu0 0
      %509 = vmatpush1.bf16.msra.mxu0 %v500
      %510 = vmatprep.subr.bf16.mxu0 0
      %511 = vmatpush1.bf16.msra.mxu0 0
      %512 = vmatprep.subr.bf16.mxu0 0
      %513 = vmatpush1.bf16.msra.mxu0 0
      %514 = vmatprep.subr.bf16.mxu0 0
      %515 = vmatpush1.bf16.msra.mxu0 0
      %516 = vmatprep.subr.bf16.mxu0 0
      %517 = vmatpush1.bf16.msra.mxu0 0
      %518 = vmatprep.subr.bf16.mxu0 0
      %519 = vmatpush1.bf16.msra.mxu0 0
      %520 = vmatprep.subr.bf16.mxu0 0
      %521 = vmatpush1.bf16.msra.mxu0 0
      %522 = vmatprep.subr.bf16.mxu0 0
      %523 = vmatpush1.bf16.msra.mxu0 0
      %524 = vmatprep.subr.bf16.mxu0 0
      %525 = vmatpush1.bf16.msra.mxu0 0
      %526 = vmatprep.subr.bf16.mxu0 0
      %527 = vmatpush1.bf16.msra.mxu0 0
      %528 = vmatprep.subr.bf16.mxu0 0
      %529 = vmatpush1.bf16.msra.mxu0 0
      %530 = vmatprep.subr.bf16.mxu0 0
      %531 = vmatpush1.bf16.msra.mxu0 0
      %532 = vmatprep.subr.bf16.mxu0 0
      %533 = vmatpush1.bf16.msra.mxu0 0
      %534 = vmatprep.subr.bf16.mxu0 0
      %535 = vmatpush1.bf16.msra.mxu0 0
      %536 = vmatprep.subr.bf16.mxu0 0
      %537 = vmatpush1.bf16.msra.mxu0 0
      %538 = vmatprep.mubr.bf16.mxu0 0
      %539 = vmatmul.mubr.bf16.gmra.mrb[0].mxu0 %v504
      %v540 = vpop.f32.mrb[0].mxu0
      %v541 = vadd.f32 %v485, %v540
      %v542 = vpop.f32.mrb[0].mxu0
      %v543 = vpop.f32.mrb[0].mxu0
      %v544 = vadd.f32 %v488, %v543
      %v545 = vpop.f32.mrb[0].mxu0
      %546 = vdwg.mxu0
      %v547 = vld [vmem:[#allocation2 + $0x7] sm:$0xff]
      %v548 = vld [vmem:[#allocation2 + $0xf] sm:$0xff]
      %v549 = vpack.c.bf16 %v548, %v547
      %s550 = scalar_lea.vmem %s3, 32
      %v551 = vld [vmem:[%s550] sm:$0xf]
      %v552 = vld [vmem:[%s550 + $0x4] sm:$0xf]
      %v553 = vld [vmem:[%s550 + $0x8] sm:$0xf]
      %v554 = vld [vmem:[%s550 + $0xc] sm:$0xf]
      %v559 = vunpack.c.l.b16 %v551
      %v560 = vunpack.c.l.b16 %v552
      %v561 = vunpack.c.l.b16 %v553
      %v562 = vunpack.c.l.b16 %v554
      %v563 = vpack.c.b16 %v560, %v559
      %v564 = vpack.c.b16 %v562, %v561
      %v568 = vsel %vm413, %v549, 0
      %570 = vmatprep.subr.bf16.mxu0 0
      %571 = vmatpush1.bf16.msra.mxu0 %v563
      %572 = vmatprep.subr.bf16.mxu0 0
      %573 = vmatpush1.bf16.msra.mxu0 %v564
      %574 = vmatprep.subr.bf16.mxu0 0
      %575 = vmatpush1.bf16.msra.mxu0 0
      %576 = vmatprep.subr.bf16.mxu0 0
      %577 = vmatpush1.bf16.msra.mxu0 0
      %578 = vmatprep.subr.bf16.mxu0 0
      %579 = vmatpush1.bf16.msra.mxu0 0
      %580 = vmatprep.subr.bf16.mxu0 0
      %581 = vmatpush1.bf16.msra.mxu0 0
      %582 = vmatprep.subr.bf16.mxu0 0
      %583 = vmatpush1.bf16.msra.mxu0 0
      %584 = vmatprep.subr.bf16.mxu0 0
      %585 = vmatpush1.bf16.msra.mxu0 0
      %586 = vmatprep.subr.bf16.mxu0 0
      %587 = vmatpush1.bf16.msra.mxu0 0
      %588 = vmatprep.subr.bf16.mxu0 0
      %589 = vmatpush1.bf16.msra.mxu0 0
      %590 = vmatprep.subr.bf16.mxu0 0
      %591 = vmatpush1.bf16.msra.mxu0 0
      %592 = vmatprep.subr.bf16.mxu0 0
      %593 = vmatpush1.bf16.msra.mxu0 0
      %594 = vmatprep.subr.bf16.mxu0 0
      %595 = vmatpush1.bf16.msra.mxu0 0
      %596 = vmatprep.subr.bf16.mxu0 0
      %597 = vmatpush1.bf16.msra.mxu0 0
      %598 = vmatprep.subr.bf16.mxu0 0
      %599 = vmatpush1.bf16.msra.mxu0 0
      %600 = vmatprep.subr.bf16.mxu0 0
      %601 = vmatpush1.bf16.msra.mxu0 0
      %602 = vmatprep.mubr.bf16.mxu0 0
      %603 = vmatmul.mubr.bf16.gmra.mrb[0].mxu0 %v568
      %v604 = vpop.f32.mrb[0].mxu0
      %v605 = vadd.f32 0.0, %v604
      %v606 = vpop.f32.mrb[0].mxu0
      %v607 = vpop.f32.mrb[0].mxu0
      %v608 = vadd.f32 0.0, %v607
      %v609 = vpop.f32.mrb[0].mxu0
      %610 = vdwg.mxu0
      %v611 = vadd.f32 %v541, %v605
      %v612 = vadd.f32 %v544, %v608
      %v613 = vld [vmem:[#allocation2 + $0x8] sm:$0xff]
      %v614 = vld [vmem:[#allocation2 + $0x10] sm:$0xff]
      %v615 = vpack.c.bf16 %v614, %v613
      %s616 = scalar_lea.vmem %s3, 48
      %v617 = vld [vmem:[%s616] sm:$0xf]
      %v618 = vld [vmem:[%s616 + $0x4] sm:$0xf]
      %v619 = vld [vmem:[%s616 + $0x8] sm:$0xf]
      %v620 = vld [vmem:[%s616 + $0xc] sm:$0xf]
      %v625 = vunpack.c.l.b16 %v617
      %v626 = vunpack.c.l.b16 %v618
      %v627 = vunpack.c.l.b16 %v619
      %v628 = vunpack.c.l.b16 %v620
      %v629 = vpack.c.b16 %v626, %v625
      %v630 = vpack.c.b16 %v628, %v627
      %v634 = vsel %vm413, %v615, 0
      %636 = vmatprep.subr.bf16.mxu0 0
      %637 = vmatpush1.bf16.msra.mxu0 %v629
      %638 = vmatprep.subr.bf16.mxu0 0
      %639 = vmatpush1.bf16.msra.mxu0 %v630
      %640 = vmatprep.subr.bf16.mxu0 0
      %641 = vmatpush1.bf16.msra.mxu0 0
      %642 = vmatprep.subr.bf16.mxu0 0
      %643 = vmatpush1.bf16.msra.mxu0 0
      %644 = vmatprep.subr.bf16.mxu0 0
      %645 = vmatpush1.bf16.msra.mxu0 0
      %646 = vmatprep.subr.bf16.mxu0 0
      %647 = vmatpush1.bf16.msra.mxu0 0
      %648 = vmatprep.subr.bf16.mxu0 0
      %649 = vmatpush1.bf16.msra.mxu0 0
      %650 = vmatprep.subr.bf16.mxu0 0
      %651 = vmatpush1.bf16.msra.mxu0 0
      %652 = vmatprep.subr.bf16.mxu0 0
      %653 = vmatpush1.bf16.msra.mxu0 0
      %654 = vmatprep.subr.bf16.mxu0 0
      %655 = vmatpush1.bf16.msra.mxu0 0
      %656 = vmatprep.subr.bf16.mxu0 0
      %657 = vmatpush1.bf16.msra.mxu0 0
      %658 = vmatprep.subr.bf16.mxu0 0
      %659 = vmatpush1.bf16.msra.mxu0 0
      %660 = vmatprep.subr.bf16.mxu0 0
      %661 = vmatpush1.bf16.msra.mxu0 0
      %662 = vmatprep.subr.bf16.mxu0 0
      %663 = vmatpush1.bf16.msra.mxu0 0
      %664 = vmatprep.subr.bf16.mxu0 0
      %665 = vmatpush1.bf16.msra.mxu0 0
      %666 = vmatprep.subr.bf16.mxu0 0
      %667 = vmatpush1.bf16.msra.mxu0 0
      %668 = vmatprep.mubr.bf16.mxu0 0
      %669 = vmatmul.mubr.bf16.gmra.mrb[0].mxu0 %v634
      %v670 = vpop.f32.mrb[0].mxu0
      %v671 = vadd.f32 0.0, %v670
      %v672 = vpop.f32.mrb[0].mxu0
      %v673 = vpop.f32.mrb[0].mxu0
      %v674 = vadd.f32 0.0, %v673
      %v675 = vpop.f32.mrb[0].mxu0
      %676 = vdwg.mxu0
      %v677 = vadd.f32 %v611, %v671
      %v678 = vadd.f32 %v612, %v674
      %v679 = vld [vmem:[#allocation2 + $0x9] sm:$0xff]
      %v680 = vld [vmem:[#allocation2 + $0x11] sm:$0xff]
      %v681 = vpack.c.bf16 %v680, %v679
      %s682 = scalar_lea.vmem %s3, 64
      %v683 = vld [vmem:[%s682] sm:$0xf]
      %v684 = vld [vmem:[%s682 + $0x4] sm:$0xf]
      %v685 = vld [vmem:[%s682 + $0x8] sm:$0xf]
      %v686 = vld [vmem:[%s682 + $0xc] sm:$0xf]
      %v691 = vunpack.c.l.b16 %v683
      %v692 = vunpack.c.l.b16 %v684
      %v693 = vunpack.c.l.b16 %v685
      %v694 = vunpack.c.l.b16 %v686
      %v695 = vpack.c.b16 %v692, %v691
      %v696 = vpack.c.b16 %v694, %v693
      %v700 = vsel %vm413, %v681, 0
      %702 = vmatprep.subr.bf16.mxu0 0
      %703 = vmatpush1.bf16.msra.mxu0 %v695
      %704 = vmatprep.subr.bf16.mxu0 0
      %705 = vmatpush1.bf16.msra.mxu0 %v696
      %706 = vmatprep.subr.bf16.mxu0 0
      %707 = vmatpush1.bf16.msra.mxu0 0
      %708 = vmatprep.subr.bf16.mxu0 0
      %709 = vmatpush1.bf16.msra.mxu0 0
      %710 = vmatprep.subr.bf16.mxu0 0
      %711 = vmatpush1.bf16.msra.mxu0 0
      %712 = vmatprep.subr.bf16.mxu0 0
      %713 = vmatpush1.bf16.msra.mxu0 0
      %714 = vmatprep.subr.bf16.mxu0 0
      %715 = vmatpush1.bf16.msra.mxu0 0
      %716 = vmatprep.subr.bf16.mxu0 0
      %717 = vmatpush1.bf16.msra.mxu0 0
      %718 = vmatprep.subr.bf16.mxu0 0
      %719 = vmatpush1.bf16.msra.mxu0 0
      %720 = vmatprep.subr.bf16.mxu0 0
      %721 = vmatpush1.bf16.msra.mxu0 0
      %722 = vmatprep.subr.bf16.mxu0 0
      %723 = vmatpush1.bf16.msra.mxu0 0
      %724 = vmatprep.subr.bf16.mxu0 0
      %725 = vmatpush1.bf16.msra.mxu0 0
      %726 = vmatprep.subr.bf16.mxu0 0
      %727 = vmatpush1.bf16.msra.mxu0 0
      %728 = vmatprep.subr.bf16.mxu0 0
      %729 = vmatpush1.bf16.msra.mxu0 0
      %730 = vmatprep.subr.bf16.mxu0 0
      %731 = vmatpush1.bf16.msra.mxu0 0
      %732 = vmatprep.subr.bf16.mxu0 0
      %733 = vmatpush1.bf16.msra.mxu0 0
      %734 = vmatprep.mubr.bf16.mxu0 0
      %735 = vmatmul.mubr.bf16.gmra.mrb[0].mxu0 %v700
      %v736 = vpop.f32.mrb[0].mxu0
      %v737 = vadd.f32 0.0, %v736
      %v738 = vpop.f32.mrb[0].mxu0
      %v739 = vpop.f32.mrb[0].mxu0
      %v740 = vadd.f32 0.0, %v739
      %v741 = vpop.f32.mrb[0].mxu0
      %742 = vdwg.mxu0
      %v743 = vadd.f32 %v677, %v737
      %v744 = vadd.f32 %v678, %v740
      %v745 = vld [vmem:[#allocation2 + $0xa] sm:$0xff]
      %v746 = vld [vmem:[#allocation2 + $0x12] sm:$0xff]
      %v747 = vpack.c.bf16 %v746, %v745
      %s748 = scalar_lea.vmem %s3, 80
      %v749 = vld [vmem:[%s748] sm:$0xf]
      %v750 = vld [vmem:[%s748 + $0x4] sm:$0xf]
      %v751 = vld [vmem:[%s748 + $0x8] sm:$0xf]
      %v752 = vld [vmem:[%s748 + $0xc] sm:$0xf]
      %v757 = vunpack.c.l.b16 %v749
      %v758 = vunpack.c.l.b16 %v750
      %v759 = vunpack.c.l.b16 %v751
      %v760 = vunpack.c.l.b16 %v752
      %v761 = vpack.c.b16 %v758, %v757
      %v762 = vpack.c.b16 %v760, %v759
      %v766 = vsel %vm413, %v747, 0
      %768 = vmatprep.subr.bf16.mxu0 0
      %769 = vmatpush1.bf16.msra.mxu0 %v761
      %770 = vmatprep.subr.bf16.mxu0 0
      %771 = vmatpush1.bf16.msra.mxu0 %v762
      %772 = vmatprep.subr.bf16.mxu0 0
      %773 = vmatpush1.bf16.msra.mxu0 0
      %774 = vmatprep.subr.bf16.mxu0 0
      %775 = vmatpush1.bf16.msra.mxu0 0
      %776 = vmatprep.subr.bf16.mxu0 0
      %777 = vmatpush1.bf16.msra.mxu0 0
      %778 = vmatprep.subr.bf16.mxu0 0
      %779 = vmatpush1.bf16.msra.mxu0 0
      %780 = vmatprep.subr.bf16.mxu0 0
      %781 = vmatpush1.bf16.msra.mxu0 0
      %782 = vmatprep.subr.bf16.mxu0 0
      %783 = vmatpush1.bf16.msra.mxu0 0
      %784 = vmatprep.subr.bf16.mxu0 0
      %785 = vmatpush1.bf16.msra.mxu0 0
      %786 = vmatprep.subr.bf16.mxu0 0
      %787 = vmatpush1.bf16.msra.mxu0 0
      %788 = vmatprep.subr.bf16.mxu0 0
      %789 = vmatpush1.bf16.msra.mxu0 0
      %790 = vmatprep.subr.bf16.mxu0 0
      %791 = vmatpush1.bf16.msra.mxu0 0
      %792 = vmatprep.subr.bf16.mxu0 0
      %793 = vmatpush1.bf16.msra.mxu0 0
      %794 = vmatprep.subr.bf16.mxu0 0
      %795 = vmatpush1.bf16.msra.mxu0 0
      %796 = vmatprep.subr.bf16.mxu0 0
      %797 = vmatpush1.bf16.msra.mxu0 0
      %798 = vmatprep.subr.bf16.mxu0 0
      %799 = vmatpush1.bf16.msra.mxu0 0
      %800 = vmatprep.mubr.bf16.mxu0 0
      %801 = vmatmul.mubr.bf16.gmra.mrb[0].mxu0 %v766
      %v802 = vpop.f32.mrb[0].mxu0
      %v803 = vadd.f32 0.0, %v802
      %v804 = vpop.f32.mrb[0].mxu0
      %v805 = vpop.f32.mrb[0].mxu0
      %v806 = vadd.f32 0.0, %v805
      %v807 = vpop.f32.mrb[0].mxu0
      %808 = vdwg.mxu0
      %v809 = vadd.f32 %v743, %v803
      %v810 = vadd.f32 %v744, %v806
      %v811 = vld [vmem:[#allocation2 + $0xb] sm:$0xff]
      %v812 = vld [vmem:[#allocation2 + $0x13] sm:$0xff]
      %v813 = vpack.c.bf16 %v812, %v811
      %s814 = scalar_lea.vmem %s3, 96
      %v815 = vld [vmem:[%s814] sm:$0xf]
      %v816 = vld [vmem:[%s814 + $0x4] sm:$0xf]
      %v817 = vld [vmem:[%s814 + $0x8] sm:$0xf]
      %v818 = vld [vmem:[%s814 + $0xc] sm:$0xf]
      %v823 = vunpack.c.l.b16 %v815
      %v824 = vunpack.c.l.b16 %v816
      %v825 = vunpack.c.l.b16 %v817
      %v826 = vunpack.c.l.b16 %v818
      %v827 = vpack.c.b16 %v824, %v823
      %v828 = vpack.c.b16 %v826, %v825
      %v832 = vsel %vm413, %v813, 0
      %834 = vmatprep.subr.bf16.mxu0 0
      %835 = vmatpush1.bf16.msra.mxu0 %v827
      %836 = vmatprep.subr.bf16.mxu0 0
      %837 = vmatpush1.bf16.msra.mxu0 %v828
      %838 = vmatprep.subr.bf16.mxu0 0
      %839 = vmatpush1.bf16.msra.mxu0 0
      %840 = vmatprep.subr.bf16.mxu0 0
      %841 = vmatpush1.bf16.msra.mxu0 0
      %842 = vmatprep.subr.bf16.mxu0 0
      %843 = vmatpush1.bf16.msra.mxu0 0
      %844 = vmatprep.subr.bf16.mxu0 0
      %845 = vmatpush1.bf16.msra.mxu0 0
      %846 = vmatprep.subr.bf16.mxu0 0
      %847 = vmatpush1.bf16.msra.mxu0 0
      %848 = vmatprep.subr.bf16.mxu0 0
      %849 = vmatpush1.bf16.msra.mxu0 0
      %850 = vmatprep.subr.bf16.mxu0 0
      %851 = vmatpush1.bf16.msra.mxu0 0
      %852 = vmatprep.subr.bf16.mxu0 0
      %853 = vmatpush1.bf16.msra.mxu0 0
      %854 = vmatprep.subr.bf16.mxu0 0
      %855 = vmatpush1.bf16.msra.mxu0 0
      %856 = vmatprep.subr.bf16.mxu0 0
      %857 = vmatpush1.bf16.msra.mxu0 0
      %858 = vmatprep.subr.bf16.mxu0 0
      %859 = vmatpush1.bf16.msra.mxu0 0
      %860 = vmatprep.subr.bf16.mxu0 0
      %861 = vmatpush1.bf16.msra.mxu0 0
      %862 = vmatprep.subr.bf16.mxu0 0
      %863 = vmatpush1.bf16.msra.mxu0 0
      %864 = vmatprep.subr.bf16.mxu0 0
      %865 = vmatpush1.bf16.msra.mxu0 0
      %866 = vmatprep.mubr.bf16.mxu0 0
      %867 = vmatmul.mubr.bf16.gmra.mrb[0].mxu0 %v832
      %v868 = vpop.f32.mrb[0].mxu0
      %v869 = vadd.f32 0.0, %v868
      %v870 = vpop.f32.mrb[0].mxu0
      %v871 = vpop.f32.mrb[0].mxu0
      %v872 = vadd.f32 0.0, %v871
      %v873 = vpop.f32.mrb[0].mxu0
      %874 = vdwg.mxu0
      %v875 = vadd.f32 %v809, %v869
      %v876 = vadd.f32 %v810, %v872
      %v877 = vld [vmem:[%s246] sm:$0xff]
      %v878 = vld [vmem:[%s246 + $0x8] sm:$0xff]
      %v879 = vld [vmem:[%s246 + $0x10] sm:$0xff]
      %v880 = vld [vmem:[%s246 + $0x18] sm:$0xff]
      %v881 = vld [vmem:[%s246] sm:$0xfe]
      %v882 = vld [vmem:[%s246 + $0x8] sm:$0xfe]
      %v883 = vld [vmem:[%s246 + $0x20] sm:$0x1]
      %v884 = vld [vmem:[%s246 + $0x28] sm:$0x1]
      %vm891 = vcmask 1046528
      %v892 = vrot.slane %v881, 1
      %v893 = vrot.slane %v879, 1
      %v894 = vsel %vm891, %v892, %v893
      %v895 = vrot.slane %v882, 1
      %v896 = vrot.slane %v880, 1
      %v897 = vsel %vm891, %v895, %v896
      %v898 = vrot.slane %v883, 1
      %v899 = vsel %vm891, %v893, %v898
      %v900 = vrot.slane %v884, 1
      %v901 = vsel %vm891, %v896, %v900
      %v906 = vmax.f32 %v877, %v894
      %v907 = vmax.f32 %v878, %v897
      %v908 = vmax.f32 %v879, %v899
      %v909 = vmax.f32 %v880, %v901
      %v910 = vld [vmem:[%s246] sm:$0xfc]
      %v911 = vld [vmem:[%s246 + $0x8] sm:$0xfc]
      %v912 = vld [vmem:[%s246 + $0x20] sm:$0x3]
      %v913 = vld [vmem:[%s246 + $0x28] sm:$0x3]
      %vm918 = vcmask 1045504
      %v919 = vrot.slane %v910, 2
      %v920 = vrot.slane %v879, 2
      %v921 = vsel %vm918, %v919, %v920
      %v922 = vrot.slane %v911, 2
      %v923 = vrot.slane %v880, 2
      %v924 = vsel %vm918, %v922, %v923
      %v925 = vrot.slane %v912, 2
      %v926 = vsel %vm918, %v920, %v925
      %v927 = vrot.slane %v913, 2
      %v928 = vsel %vm918, %v923, %v927
      %v933 = vmax.f32 %v906, %v921
      %v934 = vmax.f32 %v907, %v924
      %v935 = vmax.f32 %v908, %v926
      %v936 = vmax.f32 %v909, %v928
      %v937 = vpack.c.bf16 %v935, %v933
      %v938 = vpack.c.bf16 %v936, %v934
      %v939 = vld [vmem:[%s4] sm:$0xf]
      %v940 = vld [vmem:[%s4 + $0x4] sm:$0xf]
      %v941 = vld [vmem:[%s4 + $0x8] sm:$0xf]
      %v942 = vld [vmem:[%s4 + $0xc] sm:$0xf]
      %v943 = vld [vmem:[%s4 + $0x10] sm:$0xf]
      %v944 = vld [vmem:[%s4 + $0x14] sm:$0xf]
      %v945 = vld [vmem:[%s4 + $0x18] sm:$0xf]
      %v946 = vld [vmem:[%s4 + $0x1c] sm:$0xf]
      %v947 = vld [vmem:[%s4 + $0x20] sm:$0xf]
      %v948 = vld [vmem:[%s4 + $0x24] sm:$0xf]
      %v949 = vld [vmem:[%s4 + $0x28] sm:$0xf]
      %v950 = vld [vmem:[%s4 + $0x2c] sm:$0xf]
      %v951 = vld [vmem:[%s4 + $0x30] sm:$0xf]
      %v952 = vld [vmem:[%s4 + $0x34] sm:$0xf]
      %v953 = vld [vmem:[%s4 + $0x38] sm:$0xf]
      %v954 = vld [vmem:[%s4 + $0x3c] sm:$0xf]
      %v955 = vld [vmem:[%s4 + $0x40] sm:$0x3]
      %v973 = vunpack.c.l.b16 %v939
      %v974 = vunpack.c.l.b16 %v940
      %v975 = vunpack.c.l.b16 %v941
      %v976 = vunpack.c.l.b16 %v942
      %v977 = vunpack.c.l.b16 %v943
      %v978 = vunpack.c.l.b16 %v944
      %v979 = vunpack.c.l.b16 %v945
      %v980 = vunpack.c.l.b16 %v946
      %v981 = vunpack.c.l.b16 %v947
      %v982 = vunpack.c.l.b16 %v948
      %v983 = vunpack.c.l.b16 %v949
      %v984 = vunpack.c.l.b16 %v950
      %v985 = vunpack.c.l.b16 %v951
      %v986 = vunpack.c.l.b16 %v952
      %v987 = vunpack.c.l.b16 %v953
      %v988 = vunpack.c.l.b16 %v954
      %v989 = vunpack.c.l.b16 %v955
      %v990 = vpack.c.b16 %v974, %v973
      %v991 = vpack.c.b16 %v976, %v975
      %v992 = vpack.c.b16 %v978, %v977
      %v993 = vpack.c.b16 %v980, %v979
      %v994 = vpack.c.b16 %v982, %v981
      %v995 = vpack.c.b16 %v984, %v983
      %v996 = vpack.c.b16 %v986, %v985
      %v997 = vpack.c.b16 %v988, %v987
      %v998 = vpack.c.b16 %v989, %v989
      %v1008 = vsel %vm364, %v938, 0
      %v1011 = vsel %vm368, %v998, 0
      %1013 = vmatprep.subr.bf16.mxu0 0
      %1014 = vmatpush1.bf16.msra.mxu0 %v990
      %1015 = vmatprep.subr.bf16.mxu0 0
      %1016 = vmatpush1.bf16.msra.mxu0 %v991
      %1017 = vmatprep.subr.bf16.mxu0 0
      %1018 = vmatpush1.bf16.msra.mxu0 %v992
      %1019 = vmatprep.subr.bf16.mxu0 0
      %1020 = vmatpush1.bf16.msra.mxu0 %v993
      %1021 = vmatprep.subr.bf16.mxu0 0
      %1022 = vmatpush1.bf16.msra.mxu0 %v994
      %1023 = vmatprep.subr.bf16.mxu0 0
      %1024 = vmatpush1.bf16.msra.mxu0 %v995
      %1025 = vmatprep.subr.bf16.mxu0 0
      %1026 = vmatpush1.bf16.msra.mxu0 %v996
      %1027 = vmatprep.subr.bf16.mxu0 0
      %1028 = vmatpush1.bf16.msra.mxu0 %v997
      %1029 = vmatprep.subr.bf16.mxu0 0
      %1030 = vmatpush1.bf16.msra.mxu0 %v1011
      %1031 = vmatprep.subr.bf16.mxu0 0
      %1032 = vmatpush1.bf16.msra.mxu0 0
      %1033 = vmatprep.subr.bf16.mxu0 0
      %1034 = vmatpush1.bf16.msra.mxu0 0
      %1035 = vmatprep.subr.bf16.mxu0 0
      %1036 = vmatpush1.bf16.msra.mxu0 0
      %1037 = vmatprep.subr.bf16.mxu0 0
      %1038 = vmatpush1.bf16.msra.mxu0 0
      %1039 = vmatprep.subr.bf16.mxu0 0
      %1040 = vmatpush1.bf16.msra.mxu0 0
      %1041 = vmatprep.subr.bf16.mxu0 0
      %1042 = vmatpush1.bf16.msra.mxu0 0
      %1043 = vmatprep.subr.bf16.mxu0 0
      %1044 = vmatpush1.bf16.msra.mxu0 0
      %1045 = vmatprep.mubr.bf16.mxu0 %v1008
      %1046 = vmatmul.mubr.bf16.gmra.mrb[0].mxu0 %v937
      %v1047 = vpop.f32.mrb[0].mxu0
      %v1048 = vadd.f32 0.0, %v1047
      %v1049 = vpop.f32.mrb[0].mxu0
      %v1050 = vpop.f32.mrb[0].mxu0
      %v1051 = vadd.f32 0.0, %v1050
      %v1052 = vpop.f32.mrb[0].mxu0
      %1053 = vdwg.mxu0
      %v1054 = vadd.f32 %v875, %v1048
      %v1055 = vadd.f32 %v876, %v1051
      %v1056 = vld [vmem:[%s5] sm:$0x1]
      %v1058 = vlaneseq
      %v1059 = vshrl.u32 %v1058, 7
      %v1060 = vsub.s32 0, %v1059
      %v1061 = vrot.slane %v1056, %v1060
      %v1063 = vadd.f32 %v1054, %v1061
      %v1064 = vadd.f32 %v1055, %v1061
      %v1065 = vtanh.pop %v1063
      %v1066 = vtanh.pop %v1064
      %1067 = vst.msk [vmem:[%s251] sm:$0xff] %vm413, %v1065
      %1068 = vst.msk [vmem:[%s251 + $0x8] sm:$0xff] %vm413, %v1066
      %p1069 = scmp.lt.s32.totalorder %s17, 1
      %s1070 = scalar_select %p1069, %s17, 1
      %s1071 = smul.addr %s1070, 2
      %s1072 = smul.addr %s1071, 8
      %s1073 = scalar_lea.vmem %s6, %s1072
      // Predicated region
      $region45: #{inception_gru_forward.8} parent=43 // pred_check
        %p1074 = pneg %p166
      $region46: #{inception_gru_forward.8} parent=43 // pred_check_branch
        %1076 = sbr.rel (%p1074) target = $region48
      $region47: #{inception_gru_forward.8} parent=43 // pred_region
        _
      $region48: #{inception_gru_forward.8} parent=43 // pred_fallthru
        _
    $region44: #{inception_gru_forward.8} parent=5 // pred_fallthru
      _
    %p1077 = scmp.le.s32.totalorder 2, %s12
    // Predicated region
    $region49: #{inception_gru_forward.8} parent=5 // pred_check
      %p1078 = pneg %p1077
    $region50: #{inception_gru_forward.8} parent=5 // pred_check_branch
      %1080 = sbr.rel (%p1078) target = $region52
    $region51: #{inception_gru_forward.8} parent=5 // pred_region
      %s1081 = ssub.s32 %s12, 2
      // Predicated region
      $region53: #{inception_gru_forward.8} parent=51 // pred_check
        %p1082 = pneg %p172
      $region54: #{inception_gru_forward.8} parent=51 // pred_check_branch
        %1084 = sbr.rel (%p1082) target = $region56
      $region55: #{inception_gru_forward.8} parent=51 // pred_region
        %p1085 = scmp.lt.s32.totalorder %s18, 1
        %s1086 = scalar_select %p1085, %s18, 1
        %s1087 = smul.addr %s1086, 2
        %s1088 = smul.addr %s1087, 8
        %s1089 = scalar_lea.vmem %s6, %s1088
      $region56: #{inception_gru_forward.8} parent=51 // pred_fallthru
        _
    $region52: #{inception_gru_forward.8} parent=5 // pred_fallthru
      _
  $region6: #{inception_gru_forward.8} parent=0 // loop_footer
    %s16 = sadd.s32 1, %s12
  $region7: #{inception_gru_forward.8} parent=0 // loop_footer_branch
    %11 = sbr.rel target = $region3
  $region8: #{inception_gru_forward.8} parent=0 // loop_exit
    _

</llo_original>
